<compile_context>
chip_gen: v6e
topology: v6e:2x2x1
jax: 0.10.0
libtpu: 0.0.40
codegen_flags: <defaults>
</compile_context>

<pallas_src>
import functools

import jax
import jax.numpy as jnp
from jax.experimental import pallas as pl
from jax.experimental.pallas import tpu as pltpu


def _round_up(a, b):
    return (a + b - 1) // b * b


def _vmem_capacity_bytes():
    """Physical VMEM of the local TPU generation (fallback: v7x's 64 MiB)."""
    try:
        cap = getattr(pltpu.get_tpu_info(), "vmem_capacity_bytes", None)
        if cap:
            return int(cap)
    except Exception:
        pass
    return 64 << 20


def _pick_tiling(n_points, max_dim, vmem_cap_bytes, tile_n):
    """Rows per in-kernel tile, padded point count, number of tiles.

    128-MiB chips (v5e/v6e): whole-cloud tiles (one long MXU stream, no
    running-max bookkeeping, no wrapper-side point padding).  64-MiB chips
    (v7x): cap the (tile, max_dim) f32 layer-3 intermediate at ~4 MiB
    (~1024 rows at max_dim=1024).
    """
    if tile_n is None:
        budget = (24 << 20) if vmem_cap_bytes >= (100 << 20) else (4 << 20)
        tile_n = max(256, budget // (max_dim * 4))
    if tile_n >= n_points:
        return n_points, n_points, 1          # whole cloud: one tile, no padding
    tn = max(8, (int(tile_n) // 8) * 8)       # keep dynamic-slice starts 8-aligned
    n_pad = _round_up(n_points, tn)
    return tn, n_pad, n_pad // tn


def _vmem_limit_bytes(weights, n_pad, c_pad, tn, max_dim, vmem_cap):
    """Generous scoped-VMEM limit: ~2x the estimated resident footprint,
    floored at 32 MiB and capped at 90% of physical VMEM."""
    w_bytes = sum(int(w.size) * w.dtype.itemsize for w in weights)
    x_bytes = n_pad * c_pad * 4
    pf_bytes = n_pad * 64 * 4
    tile_bytes = tn * (64 + 128 + max_dim) * 4      # per-tile f32 intermediates
    est = 2 * w_bytes + 2 * x_bytes + pf_bytes + 3 * tile_bytes + 2 * max_dim * 4
    return int(min(max(2 * est, 32 << 20), (vmem_cap * 9) // 10))


# ---------------------------------------------------------------------------
# Fused kernel: 3 x PointNetEncoder.  One grid step == one point cloud.
# ---------------------------------------------------------------------------
def fused_encoder_kernel(x_ref, *args, tn, n_tiles, max_dim):
    (w1_1, b1_1, w2_1, b2_1, w3_1, b3_1,
     w1g_2, w1p_2, b1_2, w2_2, b2_2, w3_2, b3_2,
     w1g_3, w1p_3, b1_3, w2_3, b2_3, w3_3, b3_3,
     g3_ref, pf_ref) = args

    def mm(h, w_ref):
        # bf16 (default) or f32 operands, always f32 MXU accumulation; every
        # element-wise op (bias / relu / max) stays f32.
        return jnp.dot(h.astype(w_ref.dtype), w_ref[...],
                       preferred_element_type=jnp.float32)

    def encoder(first_layer, w2_ref, b2_ref, w3_ref, b3_ref, store_pf):
        # conv1x1 C->64 relu, 64->128 relu, 128->max_dim, max over points.
        # The layer-3 bias is per-channel: it commutes with the row-max and is
        # added ONCE after the loop (exact; saves a (tn, max_dim) VPU add/tile).
        def tile_body(t, g):
            if n_tiles == 1:
                rows = slice(None)                       # whole cloud, one pass
            else:
                rows = pl.ds(pl.multiple_of(t * tn, 8), tn)
            h1 = first_layer(rows)                                # (tn, 64)
            if store_pf:
                pf_ref[rows, :] = h1                              # VMEM-resident
            h2 = jnp.maximum(mm(h1, w2_ref) + b2_ref[...], 0.0)   # (tn, 128)
            h3 = mm(h2, w3_ref)                                   # (tn, max_dim)
            return jnp.maximum(g, jnp.max(h3, axis=0, keepdims=True))

        g0 = jnp.full((1, max_dim), -jnp.inf, jnp.float32)
        if n_tiles == 1:
            g = tile_body(0, g0)                       # straight-line body
        else:
            g = jax.lax.fori_loop(0, n_tiles, tile_body, g0)   # bounded live ranges
        return g + b3_ref[...]

    # -- encoder 1 (dataset normalization pre-folded into w1_1 / b1_1) -------
    def fl1(rows):
        return jnp.maximum(mm(x_ref[rows, :], w1_1) + b1_1[...], 0.0)
    g1 = encoder(fl1, w2_1, b2_1, w3_1, b3_1, store_pf=True)

    # -- encoder 2: concat([global1, pointfeat1]) folded into a bias term ----
    gb2 = mm(g1, w1g_2) + b1_2[...]          # (1, 64), computed ONCE per cloud
    def fl2(rows):
        return jnp.maximum(mm(pf_ref[rows, :], w1p_2) + gb2, 0.0)
    g2 = encoder(fl2, w2_2, b2_2, w3_2, b3_2, store_pf=True)

    # -- encoder 3 (global_feat=True): only its global feature is needed -----
    gb3 = mm(g2, w1g_3) + b1_3[...]
    def fl3(rows):
        return jnp.maximum(mm(pf_ref[rows, :], w1p_3) + gb3, 0.0)
    g3 = encoder(fl3, w2_3, b2_3, w3_3, b3_3, store_pf=False)

    g3_ref[...] = g3                          # lane-dense (1, max_dim) output


# ---------------------------------------------------------------------------
# Wrapper
# ---------------------------------------------------------------------------
def pointnet_quaternion_forward(batch, params, max_dim, *, tile_n=None,
                                matmul_dtype=jnp.bfloat16):
    f32 = jnp.float32
    pc = batch["rotated_pointcloud"]
    nB, nO, N, C = pc.shape
    assert nO == 1, "matches torch .squeeze(1)"
    # TODO(synk): torch runtime asserts (NaN check on the normalized cloud,
    # duplicate-batch check) are data-validity checks with no compute
    # equivalent; omitted.

    # Fold (pc - mean) / (sqrt(var) + 1e-6) into encoder-1's first layer.
    mean = batch["dataset_mean"].reshape(1, C).astype(f32)
    var = batch["dataset_var"].reshape(1, C).astype(f32)
    inv = 1.0 / (jnp.sqrt(var) + 1e-6)                            # (1, C)
    w1_1, b1_1, w2_1, b2_1, w3_1, b3_1 = params["enc1"]
    w1_1f = w1_1.astype(f32) * inv.reshape(C, 1)                  # (C, 64)
    b1_1f = b1_1.astype(f32) - (mean * inv) @ w1_1.astype(f32)    # (1, 64)

    vmem_cap = _vmem_capacity_bytes()
    tn, n_pad, n_tiles = _pick_tiling(N, max_dim, vmem_cap, tile_n)

    # Cin zero-pad 3 -> 8 (zero weight rows: exact, MXU-friendly K).  Points
    # are only padded when the cloud is tiled (whole-cloud path copies nothing
    # extra through HBM); repeating the last point leaves the max-pool intact.
    c_pad = max(8, C)
    w1_1f = jnp.pad(w1_1f, ((0, c_pad - C), (0, 0)))
    x = pc.reshape(nB, N, C).astype(f32)
    if n_pad > N:
        x = jnp.pad(x, ((0, 0), (0, n_pad - N), (0, 0)), mode="edge")
    if c_pad > C:
        x = jnp.pad(x, ((0, 0), (0, 0), (0, c_pad - C)))

    cast = lambda w: w.astype(matmul_dtype)       # bf16 by default (MXU-native)
    w1_2, b1_2, w2_2, b2_2, w3_2, b3_2 = params["enc2"]
    w1_3, b1_3, w2_3, b2_3, w3_3, b3_3 = params["enc3"]

    weights = (
        # encoder 1 (normalization + channel pad folded in)
        cast(w1_1f), b1_1f, cast(w2_1), b2_1, cast(w3_1), b3_1,
        # encoder 2: first layer split into global-feature / pointfeat halves
        cast(w1_2[:max_dim]), cast(w1_2[max_dim:]), b1_2,
        cast(w2_2), b2_2, cast(w3_2), b3_2,
        # encoder 3
        cast(w1_3[:max_dim]), cast(w1_3[max_dim:]), b1_3,
        cast(w2_3), b2_3, cast(w3_3), b3_3,
    )

    kernel = functools.partial(fused_encoder_kernel, tn=tn, n_tiles=n_tiles,
                               max_dim=max_dim)
    vmem_limit = _vmem_limit_bytes(weights, n_pad, c_pad, tn, max_dim, vmem_cap)

    def build(single_buffer_weights):
        if single_buffer_weights:
            # Constant index_map across the grid => double buffering buys
            # nothing; single-buffering halves the resident weight footprint.
            wspec = lambda w: pl.BlockSpec(w.shape, lambda b: (0, 0),
                                           pipeline_mode=pl.Buffered(1))
        else:
            wspec = lambda w: pl.BlockSpec(w.shape, lambda b: (0, 0))
        return pl.pallas_call(
            kernel,
            out_shape=jax.ShapeDtypeStruct((nB, 1, max_dim), f32),
            grid=(nB,),
            in_specs=[pl.BlockSpec((None, n_pad, c_pad), lambda b: (b, 0, 0))]
            + [wspec(w) for w in weights],
            out_specs=pl.BlockSpec((None, 1, max_dim), lambda b: (b, 0, 0)),
            scratch_shapes=[pltpu.VMEM((n_pad, 64), f32)],  # pointfeat in VMEM
            compiler_params=pltpu.CompilerParams(
                # Batch elements are independent -> megacore / dual-TC sharding
                # on v7x (feed nB >= 2 so both TensorCores have work).
                dimension_semantics=("parallel",),
                vmem_limit_bytes=vmem_limit),
        )

    try:
        g3 = jax.block_until_ready(build(True)(x, *weights))
    except Exception:   # pipeline_mode / Buffered(1) unsupported on this build
        g3 = build(False)(x, *weights)
    g3 = g3.reshape(nB, max_dim)

    # FC head + quaternion normalization, hoisted out of the kernel: one
    # batched (M = nB) XLA matmul chain instead of M=1 matmuls per grid step,
    # and no head weights resident in kernel VMEM.
    wf1, bf1, wf2, bf2, wf3, bf3 = params["head"]

    def hdot(a, w):
        return jnp.dot(a.astype(matmul_dtype), w.astype(matmul_dtype),
                       preferred_element_type=f32)

    h = jnp.maximum(hdot(g3, wf1) + bf1.astype(f32), 0.0)    # (B, 512)
    h = jnp.maximum(hdot(h, wf2) + bf2.astype(f32), 0.0)     # (B, 256)
    q = hdot(h, wf3) + bf3.astype(f32)                       # (B, 4)
    # torch does q / ||q||; rsqrt(+eps) is identical away from q == 0.
    return q * jax.lax.rsqrt(jnp.sum(q * q, axis=-1, keepdims=True) + 1e-12)


# ---------------------------------------------------------------------------
# Plain-JAX reference (explicit concat, no folding) for correctness checking.
# ---------------------------------------------------------------------------
def _reference_forward(batch, params, max_dim):
    hi = jax.lax.Precision.HIGHEST

    def dot(a, b):
        return jax.lax.dot_general(a, b, (((a.ndim - 1,), (0,)), ((), ())),
                                   precision=hi)

    pc = batch["rotated_pointcloud"].astype(jnp.float32)
    nB, nO, N, C = pc.shape
    pc = (pc - batch["dataset_mean"]) / (jnp.sqrt(batch["dataset_var"]) + 1e-6)
    x = pc.reshape(nB, N, C)          # channel-last == torch (B, 3, N) permuted

    def encoder(x, p):
        w1, b1, w2, b2, w3, b3 = p
        h1 = jax.nn.relu(dot(x, w1) + b1)          # (B, N, 64)  pointfeat
        h2 = jax.nn.relu(dot(h1, w2) + b2)         # (B, N, 128)
        h3 = dot(h2, w3) + b3                      # (B, N, max_dim)
        g = jnp.max(h3, axis=1)                    # (B, max_dim)
        concat = jnp.concatenate(
            [jnp.broadcast_to(g[:, None, :], (nB, x.shape[1], max_dim)), h1],
            axis=-1)
        return g, concat

    _, c1 = encoder(x, params["enc1"])
    _, c2 = encoder(c1, params["enc2"])
    g3, _ = encoder(c2, params["enc3"])
    w1, b1, w2, b2, w3, b3 = params["head"]
    h = jax.nn.relu(dot(g3, w1) + b1)
    h = jax.nn.relu(dot(h, w2) + b2)
    q = dot(h, w3) + b3
    return q / jnp.linalg.norm(q, axis=-1, keepdims=True)


# ---------------------------------------------------------------------------
# Deterministic parameter init (PyTorch-style uniform(+-1/sqrt(fan_in)))
# ---------------------------------------------------------------------------
def init_linear(key, fan_in, fan_out):
    kw, kb = jax.random.split(key)
    bound = 1.0 / (fan_in ** 0.5)
    w = jax.random.uniform(kw, (fan_in, fan_out), jnp.float32, -bound, bound)
    b = jax.random.uniform(kb, (1, fan_out), jnp.float32, -bound, bound)
    return w, b


def init_encoder(key, c_in, max_dim):
    k1, k2, k3 = jax.random.split(key, 3)
    w1, b1 = init_linear(k1, c_in, 64)
    w2, b2 = init_linear(k2, 64, 128)
    w3, b3 = init_linear(k3, 128, max_dim)
    return (w1, b1, w2, b2, w3, b3)


def init_params(key, channel, max_dim, output_dim=4):
    k1, k2, k3, k4, k5, k6 = jax.random.split(key, 6)
    fc1 = init_linear(k4, max_dim, 512)
    fc2 = init_linear(k5, 512, 256)
    fc3 = init_linear(k6, 256, output_dim)
    return {
        "enc1": init_encoder(k1, channel, max_dim),
        "enc2": init_encoder(k2, max_dim + 64, max_dim),
        "enc3": init_encoder(k3, max_dim + 64, max_dim),
        "head": fc1 + fc2 + fc3,
    }


# ---------------------------------------------------------------------------
if __name__ == "__main__":
    key = jax.random.PRNGKey(0)
    k_pc1, k_pc2, k_params = jax.random.split(key, 3)

    C = 3
    max_dim = 128   # module default is 1024; kept small for the test
    params = init_params(k_params, C, max_dim)

    def make_batch(k, nB, N):
        return {
            "rotated_pointcloud": jax.random.normal(k, (nB, 1, N, C), jnp.float32),
            "dataset_mean": jnp.full((1, 1, 1, C), 0.1, jnp.float32),
            "dataset_var": jnp.full((1, 1, 1, C), 0.5, jnp.float32),
        }

    # --- whole-cloud path (n_tiles == 1), f32 matmuls: tight check ----------
    batch = make_batch(k_pc1, 2, 16)
    ref = _reference_forward(batch, params, max_dim)
    q32 = jax.block_until_ready(
        pointnet_quaternion_forward(batch, params, max_dim,
                                    matmul_dtype=jnp.float32))
    assert q32.shape == (2, 4)
    assert bool(jnp.all(jnp.isfinite(q32)))
    assert bool(jnp.allclose(jnp.linalg.norm(q32, axis=-1), 1.0, atol=1e-5))
    assert bool(jnp.allclose(q32, ref, atol=2e-3, rtol=2e-3))

    # --- default bf16 matmul path (MXU-native): loose numerical check -------
    qbf = jax.block_until_ready(
        pointnet_quaternion_forward(batch, params, max_dim))
    assert bool(jnp.all(jnp.isfinite(qbf)))
    assert bool(jnp.allclose(jnp.linalg.norm(qbf, axis=-1), 1.0, atol=1e-5))
    assert bool(jnp.allclose(qbf, ref, atol=1e-1))

    # --- tiled path (fori_loop + edge-padded ragged tail), f32: tight check --
    batch2 = make_batch(k_pc2, 2, 20)          # 20 points, tiles of 8 -> pad to 24
    ref2 = _reference_forward(batch2, params, max_dim)
    q2 = jax.block_until_ready(
        pointnet_quaternion_forward(batch2, params, max_dim, tile_n=8,
                                    matmul_dtype=jnp.float32))
    assert bool(jnp.all(jnp.isfinite(q2)))
    assert bool(jnp.allclose(q2, ref2, atol=2e-3, rtol=2e-3))

    print("KERNEL_OK")
</pallas_src>

<mosaic_0001>
module attributes {stable_mosaic.version = 11 : i64} {
  func.func @fused_encoder_kernel(%arg0: i32, %arg1: memref<1x16x8xf32, #tpu.memory_space<vmem>>, %arg2: memref<8x64xf32, #tpu.memory_space<vmem>>, %arg3: memref<1x64xf32, #tpu.memory_space<vmem>>, %arg4: memref<64x128xf32, #tpu.memory_space<vmem>>, %arg5: memref<1x128xf32, #tpu.memory_space<vmem>>, %arg6: memref<128x128xf32, #tpu.memory_space<vmem>>, %arg7: memref<1x128xf32, #tpu.memory_space<vmem>>, %arg8: memref<128x64xf32, #tpu.memory_space<vmem>>, %arg9: memref<64x64xf32, #tpu.memory_space<vmem>>, %arg10: memref<1x64xf32, #tpu.memory_space<vmem>>, %arg11: memref<64x128xf32, #tpu.memory_space<vmem>>, %arg12: memref<1x128xf32, #tpu.memory_space<vmem>>, %arg13: memref<128x128xf32, #tpu.memory_space<vmem>>, %arg14: memref<1x128xf32, #tpu.memory_space<vmem>>, %arg15: memref<128x64xf32, #tpu.memory_space<vmem>>, %arg16: memref<64x64xf32, #tpu.memory_space<vmem>>, %arg17: memref<1x64xf32, #tpu.memory_space<vmem>>, %arg18: memref<64x128xf32, #tpu.memory_space<vmem>>, %arg19: memref<1x128xf32, #tpu.memory_space<vmem>>, %arg20: memref<128x128xf32, #tpu.memory_space<vmem>>, %arg21: memref<1x128xf32, #tpu.memory_space<vmem>>, %arg22: memref<1x1x128xf32, #tpu.memory_space<vmem>>, %arg23: memref<16x64xf32, #tpu.memory_space<vmem>>) attributes {dimension_semantics = [#tpu.dimension_semantics<parallel>], iteration_bounds = array<i64: 2>, scalar_prefetch = 0 : i64, scratch_operands = 1 : i64, tpu.core_type = #tpu.core_type<tc>, window_params = [{transform_indices = @transform_0, window_bounds = array<i64: 1, 16, 8>}, {pipeline_mode = #tpu.pipeline_mode<synchronous>, transform_indices = @transform_1, window_bounds = array<i64: 8, 64>}, {pipeline_mode = #tpu.pipeline_mode<synchronous>, transform_indices = @transform_2, window_bounds = array<i64: 1, 64>}, {pipeline_mode = #tpu.pipeline_mode<synchronous>, transform_indices = @transform_3, window_bounds = array<i64: 64, 128>}, {pipeline_mode = #tpu.pipeline_mode<synchronous>, transform_indices = @transform_4, window_bounds = array<i64: 1, 128>}, {pipeline_mode = #tpu.pipeline_mode<synchronous>, transform_indices = @transform_5, window_bounds = array<i64: 128, 128>}, {pipeline_mode = #tpu.pipeline_mode<synchronous>, transform_indices = @transform_6, window_bounds = array<i64: 1, 128>}, {pipeline_mode = #tpu.pipeline_mode<synchronous>, transform_indices = @transform_7, window_bounds = array<i64: 128, 64>}, {pipeline_mode = #tpu.pipeline_mode<synchronous>, transform_indices = @transform_8, window_bounds = array<i64: 64, 64>}, {pipeline_mode = #tpu.pipeline_mode<synchronous>, transform_indices = @transform_9, window_bounds = array<i64: 1, 64>}, {pipeline_mode = #tpu.pipeline_mode<synchronous>, transform_indices = @transform_10, window_bounds = array<i64: 64, 128>}, {pipeline_mode = #tpu.pipeline_mode<synchronous>, transform_indices = @transform_11, window_bounds = array<i64: 1, 128>}, {pipeline_mode = #tpu.pipeline_mode<synchronous>, transform_indices = @transform_12, window_bounds = array<i64: 128, 128>}, {pipeline_mode = #tpu.pipeline_mode<synchronous>, transform_indices = @transform_13, window_bounds = array<i64: 1, 128>}, {pipeline_mode = #tpu.pipeline_mode<synchronous>, transform_indices = @transform_14, window_bounds = array<i64: 128, 64>}, {pipeline_mode = #tpu.pipeline_mode<synchronous>, transform_indices = @transform_15, window_bounds = array<i64: 64, 64>}, {pipeline_mode = #tpu.pipeline_mode<synchronous>, transform_indices = @transform_16, window_bounds = array<i64: 1, 64>}, {pipeline_mode = #tpu.pipeline_mode<synchronous>, transform_indices = @transform_17, window_bounds = array<i64: 64, 128>}, {pipeline_mode = #tpu.pipeline_mode<synchronous>, transform_indices = @transform_18, window_bounds = array<i64: 1, 128>}, {pipeline_mode = #tpu.pipeline_mode<synchronous>, transform_indices = @transform_19, window_bounds = array<i64: 128, 128>}, {pipeline_mode = #tpu.pipeline_mode<synchronous>, transform_indices = @transform_20, window_bounds = array<i64: 1, 128>}, {transform_indices = @transform_21, window_bounds = array<i64: 1, 1, 128>}]} {
    %cst = arith.constant 0xFF800000 : f32
    %0 = vector.broadcast %cst : f32 to vector<1x128xf32>
    %c0 = arith.constant 0 : index
    %c0_0 = arith.constant 0 : index
    %c0_1 = arith.constant 0 : index
    %1 = vector.load %arg1[%c0, %c0_0, %c0_1] : memref<1x16x8xf32, #tpu.memory_space<vmem>>, vector<1x16x8xf32>
    %2 = vector.shape_cast %1 : vector<1x16x8xf32> to vector<16x8xf32>
    %c0_2 = arith.constant 0 : index
    %c0_3 = arith.constant 0 : index
    %3 = vector.load %arg2[%c0_2, %c0_3] : memref<8x64xf32, #tpu.memory_space<vmem>>, vector<8x64xf32>
    %cst_4 = arith.constant dense<0.000000e+00> : vector<16x64xf32>
    %4 = tpu.matmul %2, %3, %cst_4 {dimension_numbers = #tpu.dot_dimension_numbers<[1], [0], [0], [1], [0, 0, 1, 1], [], []>} : vector<16x8xf32>, vector<8x64xf32>, vector<16x64xf32> -> vector<16x64xf32>
    %c0_5 = arith.constant 0 : index
    %c0_6 = arith.constant 0 : index
    %5 = vector.load %arg3[%c0_5, %c0_6] : memref<1x64xf32, #tpu.memory_space<vmem>>, vector<1x64xf32>
    %6 = vector.broadcast %5 : vector<1x64xf32> to vector<16x64xf32>
    %7 = arith.addf %4, %6 : vector<16x64xf32>
    %cst_7 = arith.constant 0.000000e+00 : f32
    %8 = vector.broadcast %cst_7 : f32 to vector<16x64xf32>
    %9 = arith.maximumf %7, %8 : vector<16x64xf32>
    %c0_8 = arith.constant 0 : index
    %c0_9 = arith.constant 0 : index
    %10 = vector.load %arg23[%c0_8, %c0_9] : memref<16x64xf32, #tpu.memory_space<vmem>>, vector<16x64xf32>
    tpu.vector_store %arg23[%c0_8, %c0_9], %9 {strides = array<i32>} : memref<16x64xf32, #tpu.memory_space<vmem>>, vector<16x64xf32>,
    %c0_10 = arith.constant 0 : index
    %c0_11 = arith.constant 0 : index
    %11 = vector.load %arg4[%c0_10, %c0_11] : memref<64x128xf32, #tpu.memory_space<vmem>>, vector<64x128xf32>
    %cst_12 = arith.constant dense<0.000000e+00> : vector<16x128xf32>
    %12 = tpu.matmul %9, %11, %cst_12 {dimension_numbers = #tpu.dot_dimension_numbers<[1], [0], [0], [1], [0, 0, 1, 1], [], []>} : vector<16x64xf32>, vector<64x128xf32>, vector<16x128xf32> -> vector<16x128xf32>
    %c0_13 = arith.constant 0 : index
    %c0_14 = arith.constant 0 : index
    %13 = vector.load %arg5[%c0_13, %c0_14] : memref<1x128xf32, #tpu.memory_space<vmem>>, vector<1x128xf32>
    %14 = vector.broadcast %13 : vector<1x128xf32> to vector<16x128xf32>
    %15 = arith.addf %12, %14 : vector<16x128xf32>
    %cst_15 = arith.constant 0.000000e+00 : f32
    %16 = vector.broadcast %cst_15 : f32 to vector<16x128xf32>
    %17 = arith.maximumf %15, %16 : vector<16x128xf32>
    %c0_16 = arith.constant 0 : index
    %c0_17 = arith.constant 0 : index
    %18 = vector.load %arg6[%c0_16, %c0_17] : memref<128x128xf32, #tpu.memory_space<vmem>>, vector<128x128xf32>
    %cst_18 = arith.constant dense<0.000000e+00> : vector<16x128xf32>
    %19 = tpu.matmul %17, %18, %cst_18 {dimension_numbers = #tpu.dot_dimension_numbers<[1], [0], [0], [1], [0, 0, 1, 1], [], []>} : vector<16x128xf32>, vector<128x128xf32>, vector<16x128xf32> -> vector<16x128xf32>
    %cst_19 = arith.constant dense<0xFF800000> : vector<128xf32>
    %20 = vector.multi_reduction <maximumf>, %19, %cst_19 [0] : vector<16x128xf32> to vector<128xf32>
    %21 = vector.shape_cast %20 : vector<128xf32> to vector<1x128xf32>
    %22 = arith.maximumf %0, %21 : vector<1x128xf32>
    %c0_20 = arith.constant 0 : index
    %c0_21 = arith.constant 0 : index
    %23 = vector.load %arg7[%c0_20, %c0_21] : memref<1x128xf32, #tpu.memory_space<vmem>>, vector<1x128xf32>
    %24 = arith.addf %22, %23 : vector<1x128xf32>
    %c0_22 = arith.constant 0 : index
    %c0_23 = arith.constant 0 : index
    %25 = vector.load %arg8[%c0_22, %c0_23] : memref<128x64xf32, #tpu.memory_space<vmem>>, vector<128x64xf32>
    %cst_24 = arith.constant dense<0.000000e+00> : vector<1x64xf32>
    %26 = tpu.matmul %24, %25, %cst_24 {dimension_numbers = #tpu.dot_dimension_numbers<[1], [0], [0], [1], [0, 0, 1, 1], [], []>} : vector<1x128xf32>, vector<128x64xf32>, vector<1x64xf32> -> vector<1x64xf32>
    %c0_25 = arith.constant 0 : index
    %c0_26 = arith.constant 0 : index
    %27 = vector.load %arg10[%c0_25, %c0_26] : memref<1x64xf32, #tpu.memory_space<vmem>>, vector<1x64xf32>
    %28 = arith.addf %26, %27 : vector<1x64xf32>
    %cst_27 = arith.constant 0xFF800000 : f32
    %29 = vector.broadcast %cst_27 : f32 to vector<1x128xf32>
    %c0_28 = arith.constant 0 : index
    %c0_29 = arith.constant 0 : index
    %30 = vector.load %arg23[%c0_28, %c0_29] : memref<16x64xf32, #tpu.memory_space<vmem>>, vector<16x64xf32>
    %c0_30 = arith.constant 0 : index
    %c0_31 = arith.constant 0 : index
    %31 = vector.load %arg9[%c0_30, %c0_31] : memref<64x64xf32, #tpu.memory_space<vmem>>, vector<64x64xf32>
    %cst_32 = arith.constant dense<0.000000e+00> : vector<16x64xf32>
    %32 = tpu.matmul %30, %31, %cst_32 {dimension_numbers = #tpu.dot_dimension_numbers<[1], [0], [0], [1], [0, 0, 1, 1], [], []>} : vector<16x64xf32>, vector<64x64xf32>, vector<16x64xf32> -> vector<16x64xf32>
    %33 = vector.broadcast %28 : vector<1x64xf32> to vector<16x64xf32>
    %34 = arith.addf %32, %33 : vector<16x64xf32>
    %cst_33 = arith.constant 0.000000e+00 : f32
    %35 = vector.broadcast %cst_33 : f32 to vector<16x64xf32>
    %36 = arith.maximumf %34, %35 : vector<16x64xf32>
    %c0_34 = arith.constant 0 : index
    %c0_35 = arith.constant 0 : index
    %37 = vector.load %arg23[%c0_34, %c0_35] : memref<16x64xf32, #tpu.memory_space<vmem>>, vector<16x64xf32>
    tpu.vector_store %arg23[%c0_34, %c0_35], %36 {strides = array<i32>} : memref<16x64xf32, #tpu.memory_space<vmem>>, vector<16x64xf32>,
    %c0_36 = arith.constant 0 : index
    %c0_37 = arith.constant 0 : index
    %38 = vector.load %arg11[%c0_36, %c0_37] : memref<64x128xf32, #tpu.memory_space<vmem>>, vector<64x128xf32>
    %cst_38 = arith.constant dense<0.000000e+00> : vector<16x128xf32>
    %39 = tpu.matmul %36, %38, %cst_38 {dimension_numbers = #tpu.dot_dimension_numbers<[1], [0], [0], [1], [0, 0, 1, 1], [], []>} : vector<16x64xf32>, vector<64x128xf32>, vector<16x128xf32> -> vector<16x128xf32>
    %c0_39 = arith.constant 0 : index
    %c0_40 = arith.constant 0 : index
    %40 = vector.load %arg12[%c0_39, %c0_40] : memref<1x128xf32, #tpu.memory_space<vmem>>, vector<1x128xf32>
    %41 = vector.broadcast %40 : vector<1x128xf32> to vector<16x128xf32>
    %42 = arith.addf %39, %41 : vector<16x128xf32>
    %cst_41 = arith.constant 0.000000e+00 : f32
    %43 = vector.broadcast %cst_41 : f32 to vector<16x128xf32>
    %44 = arith.maximumf %42, %43 : vector<16x128xf32>
    %c0_42 = arith.constant 0 : index
    %c0_43 = arith.constant 0 : index
    %45 = vector.load %arg13[%c0_42, %c0_43] : memref<128x128xf32, #tpu.memory_space<vmem>>, vector<128x128xf32>
    %cst_44 = arith.constant dense<0.000000e+00> : vector<16x128xf32>
    %46 = tpu.matmul %44, %45, %cst_44 {dimension_numbers = #tpu.dot_dimension_numbers<[1], [0], [0], [1], [0, 0, 1, 1], [], []>} : vector<16x128xf32>, vector<128x128xf32>, vector<16x128xf32> -> vector<16x128xf32>
    %cst_45 = arith.constant dense<0xFF800000> : vector<128xf32>
    %47 = vector.multi_reduction <maximumf>, %46, %cst_45 [0] : vector<16x128xf32> to vector<128xf32>
    %48 = vector.shape_cast %47 : vector<128xf32> to vector<1x128xf32>
    %49 = arith.maximumf %29, %48 : vector<1x128xf32>
    %c0_46 = arith.constant 0 : index
    %c0_47 = arith.constant 0 : index
    %50 = vector.load %arg14[%c0_46, %c0_47] : memref<1x128xf32, #tpu.memory_space<vmem>>, vector<1x128xf32>
    %51 = arith.addf %49, %50 : vector<1x128xf32>
    %c0_48 = arith.constant 0 : index
    %c0_49 = arith.constant 0 : index
    %52 = vector.load %arg15[%c0_48, %c0_49] : memref<128x64xf32, #tpu.memory_space<vmem>>, vector<128x64xf32>
    %cst_50 = arith.constant dense<0.000000e+00> : vector<1x64xf32>
    %53 = tpu.matmul %51, %52, %cst_50 {dimension_numbers = #tpu.dot_dimension_numbers<[1], [0], [0], [1], [0, 0, 1, 1], [], []>} : vector<1x128xf32>, vector<128x64xf32>, vector<1x64xf32> -> vector<1x64xf32>
    %c0_51 = arith.constant 0 : index
    %c0_52 = arith.constant 0 : index
    %54 = vector.load %arg17[%c0_51, %c0_52] : memref<1x64xf32, #tpu.memory_space<vmem>>, vector<1x64xf32>
    %55 = arith.addf %53, %54 : vector<1x64xf32>
    %cst_53 = arith.constant 0xFF800000 : f32
    %56 = vector.broadcast %cst_53 : f32 to vector<1x128xf32>
    %c0_54 = arith.constant 0 : index
    %c0_55 = arith.constant 0 : index
    %57 = vector.load %arg23[%c0_54, %c0_55] : memref<16x64xf32, #tpu.memory_space<vmem>>, vector<16x64xf32>
    %c0_56 = arith.constant 0 : index
    %c0_57 = arith.constant 0 : index
    %58 = vector.load %arg16[%c0_56, %c0_57] : memref<64x64xf32, #tpu.memory_space<vmem>>, vector<64x64xf32>
    %cst_58 = arith.constant dense<0.000000e+00> : vector<16x64xf32>
    %59 = tpu.matmul %57, %58, %cst_58 {dimension_numbers = #tpu.dot_dimension_numbers<[1], [0], [0], [1], [0, 0, 1, 1], [], []>} : vector<16x64xf32>, vector<64x64xf32>, vector<16x64xf32> -> vector<16x64xf32>
    %60 = vector.broadcast %55 : vector<1x64xf32> to vector<16x64xf32>
    %61 = arith.addf %59, %60 : vector<16x64xf32>
    %cst_59 = arith.constant 0.000000e+00 : f32
    %62 = vector.broadcast %cst_59 : f32 to vector<16x64xf32>
    %63 = arith.maximumf %61, %62 : vector<16x64xf32>
    %c0_60 = arith.constant 0 : index
    %c0_61 = arith.constant 0 : index
    %64 = vector.load %arg18[%c0_60, %c0_61] : memref<64x128xf32, #tpu.memory_space<vmem>>, vector<64x128xf32>
    %cst_62 = arith.constant dense<0.000000e+00> : vector<16x128xf32>
    %65 = tpu.matmul %63, %64, %cst_62 {dimension_numbers = #tpu.dot_dimension_numbers<[1], [0], [0], [1], [0, 0, 1, 1], [], []>} : vector<16x64xf32>, vector<64x128xf32>, vector<16x128xf32> -> vector<16x128xf32>
    %c0_63 = arith.constant 0 : index
    %c0_64 = arith.constant 0 : index
    %66 = vector.load %arg19[%c0_63, %c0_64] : memref<1x128xf32, #tpu.memory_space<vmem>>, vector<1x128xf32>
    %67 = vector.broadcast %66 : vector<1x128xf32> to vector<16x128xf32>
    %68 = arith.addf %65, %67 : vector<16x128xf32>
    %cst_65 = arith.constant 0.000000e+00 : f32
    %69 = vector.broadcast %cst_65 : f32 to vector<16x128xf32>
    %70 = arith.maximumf %68, %69 : vector<16x128xf32>
    %c0_66 = arith.constant 0 : index
    %c0_67 = arith.constant 0 : index
    %71 = vector.load %arg20[%c0_66, %c0_67] : memref<128x128xf32, #tpu.memory_space<vmem>>, vector<128x128xf32>
    %cst_68 = arith.constant dense<0.000000e+00> : vector<16x128xf32>
    %72 = tpu.matmul %70, %71, %cst_68 {dimension_numbers = #tpu.dot_dimension_numbers<[1], [0], [0], [1], [0, 0, 1, 1], [], []>} : vector<16x128xf32>, vector<128x128xf32>, vector<16x128xf32> -> vector<16x128xf32>
    %cst_69 = arith.constant dense<0xFF800000> : vector<128xf32>
    %73 = vector.multi_reduction <maximumf>, %72, %cst_69 [0] : vector<16x128xf32> to vector<128xf32>
    %74 = vector.shape_cast %73 : vector<128xf32> to vector<1x128xf32>
    %75 = arith.maximumf %56, %74 : vector<1x128xf32>
    %c0_70 = arith.constant 0 : index
    %c0_71 = arith.constant 0 : index
    %76 = vector.load %arg21[%c0_70, %c0_71] : memref<1x128xf32, #tpu.memory_space<vmem>>, vector<1x128xf32>
    %77 = arith.addf %75, %76 : vector<1x128xf32>
    %c0_72 = arith.constant 0 : index
    %c0_73 = arith.constant 0 : index
    %c0_74 = arith.constant 0 : index
    %78 = vector.load %arg22[%c0_72, %c0_73, %c0_74] : memref<1x1x128xf32, #tpu.memory_space<vmem>>, vector<1x1x128xf32>
    %79 = vector.shape_cast %78 : vector<1x1x128xf32> to vector<1x128xf32>
    %80 = vector.shape_cast %77 : vector<1x128xf32> to vector<1x1x128xf32>
    tpu.vector_store %arg22[%c0_72, %c0_73, %c0_74], %80 {strides = array<i32>} : memref<1x1x128xf32, #tpu.memory_space<vmem>>, vector<1x1x128xf32>,
    return
  }
  func.func @transform_0(%arg0: i32) -> (i32, i32, i32) {
    %c0_i32 = arith.constant 0 : i32
    %c0_i32_0 = arith.constant 0 : i32
    %c0_i32_1 = arith.constant 0 : i32
    return %arg0, %c0_i32, %c0_i32_0 : i32, i32, i32
  }
  func.func @transform_1(%arg0: i32) -> (i32, i32) {
    %c0_i32 = arith.constant 0 : i32
    %c0_i32_0 = arith.constant 0 : i32
    %c0_i32_1 = arith.constant 0 : i32
    return %c0_i32, %c0_i32_0 : i32, i32
  }
  func.func @transform_2(%arg0: i32) -> (i32, i32) {
    %c0_i32 = arith.constant 0 : i32
    %c0_i32_0 = arith.constant 0 : i32
    %c0_i32_1 = arith.constant 0 : i32
    return %c0_i32, %c0_i32_0 : i32, i32
  }
  func.func @transform_3(%arg0: i32) -> (i32, i32) {
    %c0_i32 = arith.constant 0 : i32
    %c0_i32_0 = arith.constant 0 : i32
    %c0_i32_1 = arith.constant 0 : i32
    return %c0_i32, %c0_i32_0 : i32, i32
  }
  func.func @transform_4(%arg0: i32) -> (i32, i32) {
    %c0_i32 = arith.constant 0 : i32
    %c0_i32_0 = arith.constant 0 : i32
    %c0_i32_1 = arith.constant 0 : i32
    return %c0_i32, %c0_i32_0 : i32, i32
  }
  func.func @transform_5(%arg0: i32) -> (i32, i32) {
    %c0_i32 = arith.constant 0 : i32
    %c0_i32_0 = arith.constant 0 : i32
    %c0_i32_1 = arith.constant 0 : i32
    return %c0_i32, %c0_i32_0 : i32, i32
  }
  func.func @transform_6(%arg0: i32) -> (i32, i32) {
    %c0_i32 = arith.constant 0 : i32
    %c0_i32_0 = arith.constant 0 : i32
    %c0_i32_1 = arith.constant 0 : i32
    return %c0_i32, %c0_i32_0 : i32, i32
  }
  func.func @transform_7(%arg0: i32) -> (i32, i32) {
    %c0_i32 = arith.constant 0 : i32
    %c0_i32_0 = arith.constant 0 : i32
    %c0_i32_1 = arith.constant 0 : i32
    return %c0_i32, %c0_i32_0 : i32, i32
  }
  func.func @transform_8(%arg0: i32) -> (i32, i32) {
    %c0_i32 = arith.constant 0 : i32
    %c0_i32_0 = arith.constant 0 : i32
    %c0_i32_1 = arith.constant 0 : i32
    return %c0_i32, %c0_i32_0 : i32, i32
  }
  func.func @transform_9(%arg0: i32) -> (i32, i32) {
    %c0_i32 = arith.constant 0 : i32
    %c0_i32_0 = arith.constant 0 : i32
    %c0_i32_1 = arith.constant 0 : i32
    return %c0_i32, %c0_i32_0 : i32, i32
  }
  func.func @transform_10(%arg0: i32) -> (i32, i32) {
    %c0_i32 = arith.constant 0 : i32
    %c0_i32_0 = arith.constant 0 : i32
    %c0_i32_1 = arith.constant 0 : i32
    return %c0_i32, %c0_i32_0 : i32, i32
  }
  func.func @transform_11(%arg0: i32) -> (i32, i32) {
    %c0_i32 = arith.constant 0 : i32
    %c0_i32_0 = arith.constant 0 : i32
    %c0_i32_1 = arith.constant 0 : i32
    return %c0_i32, %c0_i32_0 : i32, i32
  }
  func.func @transform_12(%arg0: i32) -> (i32, i32) {
    %c0_i32 = arith.constant 0 : i32
    %c0_i32_0 = arith.constant 0 : i32
    %c0_i32_1 = arith.constant 0 : i32
    return %c0_i32, %c0_i32_0 : i32, i32
  }
  func.func @transform_13(%arg0: i32) -> (i32, i32) {
    %c0_i32 = arith.constant 0 : i32
    %c0_i32_0 = arith.constant 0 : i32
    %c0_i32_1 = arith.constant 0 : i32
    return %c0_i32, %c0_i32_0 : i32, i32
  }
  func.func @transform_14(%arg0: i32) -> (i32, i32) {
    %c0_i32 = arith.constant 0 : i32
    %c0_i32_0 = arith.constant 0 : i32
    %c0_i32_1 = arith.constant 0 : i32
    return %c0_i32, %c0_i32_0 : i32, i32
  }
  func.func @transform_15(%arg0: i32) -> (i32, i32) {
    %c0_i32 = arith.constant 0 : i32
    %c0_i32_0 = arith.constant 0 : i32
    %c0_i32_1 = arith.constant 0 : i32
    return %c0_i32, %c0_i32_0 : i32, i32
  }
  func.func @transform_16(%arg0: i32) -> (i32, i32) {
    %c0_i32 = arith.constant 0 : i32
    %c0_i32_0 = arith.constant 0 : i32
    %c0_i32_1 = arith.constant 0 : i32
    return %c0_i32, %c0_i32_0 : i32, i32
  }
  func.func @transform_17(%arg0: i32) -> (i32, i32) {
    %c0_i32 = arith.constant 0 : i32
    %c0_i32_0 = arith.constant 0 : i32
    %c0_i32_1 = arith.constant 0 : i32
    return %c0_i32, %c0_i32_0 : i32, i32
  }
  func.func @transform_18(%arg0: i32) -> (i32, i32) {
    %c0_i32 = arith.constant 0 : i32
    %c0_i32_0 = arith.constant 0 : i32
    %c0_i32_1 = arith.constant 0 : i32
    return %c0_i32, %c0_i32_0 : i32, i32
  }
  func.func @transform_19(%arg0: i32) -> (i32, i32) {
    %c0_i32 = arith.constant 0 : i32
    %c0_i32_0 = arith.constant 0 : i32
    %c0_i32_1 = arith.constant 0 : i32
    return %c0_i32, %c0_i32_0 : i32, i32
  }
  func.func @transform_20(%arg0: i32) -> (i32, i32) {
    %c0_i32 = arith.constant 0 : i32
    %c0_i32_0 = arith.constant 0 : i32
    %c0_i32_1 = arith.constant 0 : i32
    return %c0_i32, %c0_i32_0 : i32, i32
  }
  func.func @transform_21(%arg0: i32) -> (i32, i32, i32) {
    %c0_i32 = arith.constant 0 : i32
    %c0_i32_0 = arith.constant 0 : i32
    %c0_i32_1 = arith.constant 0 : i32
    return %arg0, %c0_i32, %c0_i32_0 : i32, i32, i32
  }
}

module attributes {stable_mosaic.version = 11 : i64} {
  func.func @fused_encoder_kernel(%arg0: i32, %arg1: memref<1x16x8xf32, #tpu.memory_space<vmem>>, %arg2: memref<8x64xf32, #tpu.memory_space<vmem>>, %arg3: memref<1x64xf32, #tpu.memory_space<vmem>>, %arg4: memref<64x128xf32, #tpu.memory_space<vmem>>, %arg5: memref<1x128xf32, #tpu.memory_space<vmem>>, %arg6: memref<128x128xf32, #tpu.memory_space<vmem>>, %arg7: memref<1x128xf32, #tpu.memory_space<vmem>>, %arg8: memref<128x64xf32, #tpu.memory_space<vmem>>, %arg9: memref<64x64xf32, #tpu.memory_space<vmem>>, %arg10: memref<1x64xf32, #tpu.memory_space<vmem>>, %arg11: memref<64x128xf32, #tpu.memory_space<vmem>>, %arg12: memref<1x128xf32, #tpu.memory_space<vmem>>, %arg13: memref<128x128xf32, #tpu.memory_space<vmem>>, %arg14: memref<1x128xf32, #tpu.memory_space<vmem>>, %arg15: memref<128x64xf32, #tpu.memory_space<vmem>>, %arg16: memref<64x64xf32, #tpu.memory_space<vmem>>, %arg17: memref<1x64xf32, #tpu.memory_space<vmem>>, %arg18: memref<64x128xf32, #tpu.memory_space<vmem>>, %arg19: memref<1x128xf32, #tpu.memory_space<vmem>>, %arg20: memref<128x128xf32, #tpu.memory_space<vmem>>, %arg21: memref<1x128xf32, #tpu.memory_space<vmem>>, %arg22: memref<1x1x128xf32, #tpu.memory_space<vmem>>, %arg23: memref<16x64xf32, #tpu.memory_space<vmem>>) attributes {dimension_semantics = [#tpu.dimension_semantics<parallel>], iteration_bounds = array<i64: 2>, scalar_prefetch = 0 : i64, scratch_operands = 1 : i64, tpu.core_type = #tpu.core_type<tc>, window_params = [{transform_indices = @transform_0, window_bounds = array<i64: 1, 16, 8>}, {pipeline_mode = #tpu.pipeline_mode<synchronous>, transform_indices = @transform_1, window_bounds = array<i64: 8, 64>}, {pipeline_mode = #tpu.pipeline_mode<synchronous>, transform_indices = @transform_2, window_bounds = array<i64: 1, 64>}, {pipeline_mode = #tpu.pipeline_mode<synchronous>, transform_indices = @transform_3, window_bounds = array<i64: 64, 128>}, {pipeline_mode = #tpu.pipeline_mode<synchronous>, transform_indices = @transform_4, window_bounds = array<i64: 1, 128>}, {pipeline_mode = #tpu.pipeline_mode<synchronous>, transform_indices = @transform_5, window_bounds = array<i64: 128, 128>}, {pipeline_mode = #tpu.pipeline_mode<synchronous>, transform_indices = @transform_6, window_bounds = array<i64: 1, 128>}, {pipeline_mode = #tpu.pipeline_mode<synchronous>, transform_indices = @transform_7, window_bounds = array<i64: 128, 64>}, {pipeline_mode = #tpu.pipeline_mode<synchronous>, transform_indices = @transform_8, window_bounds = array<i64: 64, 64>}, {pipeline_mode = #tpu.pipeline_mode<synchronous>, transform_indices = @transform_9, window_bounds = array<i64: 1, 64>}, {pipeline_mode = #tpu.pipeline_mode<synchronous>, transform_indices = @transform_10, window_bounds = array<i64: 64, 128>}, {pipeline_mode = #tpu.pipeline_mode<synchronous>, transform_indices = @transform_11, window_bounds = array<i64: 1, 128>}, {pipeline_mode = #tpu.pipeline_mode<synchronous>, transform_indices = @transform_12, window_bounds = array<i64: 128, 128>}, {pipeline_mode = #tpu.pipeline_mode<synchronous>, transform_indices = @transform_13, window_bounds = array<i64: 1, 128>}, {pipeline_mode = #tpu.pipeline_mode<synchronous>, transform_indices = @transform_14, window_bounds = array<i64: 128, 64>}, {pipeline_mode = #tpu.pipeline_mode<synchronous>, transform_indices = @transform_15, window_bounds = array<i64: 64, 64>}, {pipeline_mode = #tpu.pipeline_mode<synchronous>, transform_indices = @transform_16, window_bounds = array<i64: 1, 64>}, {pipeline_mode = #tpu.pipeline_mode<synchronous>, transform_indices = @transform_17, window_bounds = array<i64: 64, 128>}, {pipeline_mode = #tpu.pipeline_mode<synchronous>, transform_indices = @transform_18, window_bounds = array<i64: 1, 128>}, {pipeline_mode = #tpu.pipeline_mode<synchronous>, transform_indices = @transform_19, window_bounds = array<i64: 128, 128>}, {pipeline_mode = #tpu.pipeline_mode<synchronous>, transform_indices = @transform_20, window_bounds = array<i64: 1, 128>}, {transform_indices = @transform_21, window_bounds = array<i64: 1, 1, 128>}]} {
    %cst = arith.constant 0xFF800000 : f32
    %0 = vector.broadcast %cst : f32 to vector<1x128xf32>
    %c0 = arith.constant 0 : index
    %c0_0 = arith.constant 0 : index
    %c0_1 = arith.constant 0 : index
    %1 = vector.load %arg1[%c0, %c0_0, %c0_1] : memref<1x16x8xf32, #tpu.memory_space<vmem>>, vector<1x16x8xf32>
    %2 = vector.shape_cast %1 : vector<1x16x8xf32> to vector<16x8xf32>
    %c0_2 = arith.constant 0 : index
    %c0_3 = arith.constant 0 : index
    %3 = vector.load %arg2[%c0_2, %c0_3] : memref<8x64xf32, #tpu.memory_space<vmem>>, vector<8x64xf32>
    %cst_4 = arith.constant dense<0.000000e+00> : vector<16x64xf32>
    %4 = tpu.matmul %2, %3, %cst_4 {dimension_numbers = #tpu.dot_dimension_numbers<[1], [0], [0], [1], [0, 0, 1, 1], [], []>} : vector<16x8xf32>, vector<8x64xf32>, vector<16x64xf32> -> vector<16x64xf32>
    %c0_5 = arith.constant 0 : index
    %c0_6 = arith.constant 0 : index
    %5 = vector.load %arg3[%c0_5, %c0_6] : memref<1x64xf32, #tpu.memory_space<vmem>>, vector<1x64xf32>
    %6 = vector.broadcast %5 : vector<1x64xf32> to vector<16x64xf32>
    %7 = arith.addf %4, %6 : vector<16x64xf32>
    %cst_7 = arith.constant 0.000000e+00 : f32
    %8 = vector.broadcast %cst_7 : f32 to vector<16x64xf32>
    %9 = arith.maximumf %7, %8 : vector<16x64xf32>
    %c0_8 = arith.constant 0 : index
    %c0_9 = arith.constant 0 : index
    %10 = vector.load %arg23[%c0_8, %c0_9] : memref<16x64xf32, #tpu.memory_space<vmem>>, vector<16x64xf32>
    tpu.vector_store %arg23[%c0_8, %c0_9], %9 {strides = array<i32>} : memref<16x64xf32, #tpu.memory_space<vmem>>, vector<16x64xf32>,
    %c0_10 = arith.constant 0 : index
    %c0_11 = arith.constant 0 : index
    %11 = vector.load %arg4[%c0_10, %c0_11] : memref<64x128xf32, #tpu.memory_space<vmem>>, vector<64x128xf32>
    %cst_12 = arith.constant dense<0.000000e+00> : vector<16x128xf32>
    %12 = tpu.matmul %9, %11, %cst_12 {dimension_numbers = #tpu.dot_dimension_numbers<[1], [0], [0], [1], [0, 0, 1, 1], [], []>} : vector<16x64xf32>, vector<64x128xf32>, vector<16x128xf32> -> vector<16x128xf32>
    %c0_13 = arith.constant 0 : index
    %c0_14 = arith.constant 0 : index
    %13 = vector.load %arg5[%c0_13, %c0_14] : memref<1x128xf32, #tpu.memory_space<vmem>>, vector<1x128xf32>
    %14 = vector.broadcast %13 : vector<1x128xf32> to vector<16x128xf32>
    %15 = arith.addf %12, %14 : vector<16x128xf32>
    %cst_15 = arith.constant 0.000000e+00 : f32
    %16 = vector.broadcast %cst_15 : f32 to vector<16x128xf32>
    %17 = arith.maximumf %15, %16 : vector<16x128xf32>
    %c0_16 = arith.constant 0 : index
    %c0_17 = arith.constant 0 : index
    %18 = vector.load %arg6[%c0_16, %c0_17] : memref<128x128xf32, #tpu.memory_space<vmem>>, vector<128x128xf32>
    %cst_18 = arith.constant dense<0.000000e+00> : vector<16x128xf32>
    %19 = tpu.matmul %17, %18, %cst_18 {dimension_numbers = #tpu.dot_dimension_numbers<[1], [0], [0], [1], [0, 0, 1, 1], [], []>} : vector<16x128xf32>, vector<128x128xf32>, vector<16x128xf32> -> vector<16x128xf32>
    %cst_19 = arith.constant dense<0xFF800000> : vector<128xf32>
    %20 = vector.multi_reduction <maximumf>, %19, %cst_19 [0] : vector<16x128xf32> to vector<128xf32>
    %21 = vector.shape_cast %20 : vector<128xf32> to vector<1x128xf32>
    %22 = arith.maximumf %0, %21 : vector<1x128xf32>
    %c0_20 = arith.constant 0 : index
    %c0_21 = arith.constant 0 : index
    %23 = vector.load %arg7[%c0_20, %c0_21] : memref<1x128xf32, #tpu.memory_space<vmem>>, vector<1x128xf32>
    %24 = arith.addf %22, %23 : vector<1x128xf32>
    %c0_22 = arith.constant 0 : index
    %c0_23 = arith.constant 0 : index
    %25 = vector.load %arg8[%c0_22, %c0_23] : memref<128x64xf32, #tpu.memory_space<vmem>>, vector<128x64xf32>
    %cst_24 = arith.constant dense<0.000000e+00> : vector<1x64xf32>
    %26 = tpu.matmul %24, %25, %cst_24 {dimension_numbers = #tpu.dot_dimension_numbers<[1], [0], [0], [1], [0, 0, 1, 1], [], []>} : vector<1x128xf32>, vector<128x64xf32>, vector<1x64xf32> -> vector<1x64xf32>
    %c0_25 = arith.constant 0 : index
    %c0_26 = arith.constant 0 : index
    %27 = vector.load %arg10[%c0_25, %c0_26] : memref<1x64xf32, #tpu.memory_space<vmem>>, vector<1x64xf32>
    %28 = arith.addf %26, %27 : vector<1x64xf32>
    %cst_27 = arith.constant 0xFF800000 : f32
    %29 = vector.broadcast %cst_27 : f32 to vector<1x128xf32>
    %c0_28 = arith.constant 0 : index
    %c0_29 = arith.constant 0 : index
    %30 = vector.load %arg23[%c0_28, %c0_29] : memref<16x64xf32, #tpu.memory_space<vmem>>, vector<16x64xf32>
    %c0_30 = arith.constant 0 : index
    %c0_31 = arith.constant 0 : index
    %31 = vector.load %arg9[%c0_30, %c0_31] : memref<64x64xf32, #tpu.memory_space<vmem>>, vector<64x64xf32>
    %cst_32 = arith.constant dense<0.000000e+00> : vector<16x64xf32>
    %32 = tpu.matmul %30, %31, %cst_32 {dimension_numbers = #tpu.dot_dimension_numbers<[1], [0], [0], [1], [0, 0, 1, 1], [], []>} : vector<16x64xf32>, vector<64x64xf32>, vector<16x64xf32> -> vector<16x64xf32>
    %33 = vector.broadcast %28 : vector<1x64xf32> to vector<16x64xf32>
    %34 = arith.addf %32, %33 : vector<16x64xf32>
    %cst_33 = arith.constant 0.000000e+00 : f32
    %35 = vector.broadcast %cst_33 : f32 to vector<16x64xf32>
    %36 = arith.maximumf %34, %35 : vector<16x64xf32>
    %c0_34 = arith.constant 0 : index
    %c0_35 = arith.constant 0 : index
    %37 = vector.load %arg23[%c0_34, %c0_35] : memref<16x64xf32, #tpu.memory_space<vmem>>, vector<16x64xf32>
    tpu.vector_store %arg23[%c0_34, %c0_35], %36 {strides = array<i32>} : memref<16x64xf32, #tpu.memory_space<vmem>>, vector<16x64xf32>,
    %c0_36 = arith.constant 0 : index
    %c0_37 = arith.constant 0 : index
    %38 = vector.load %arg11[%c0_36, %c0_37] : memref<64x128xf32, #tpu.memory_space<vmem>>, vector<64x128xf32>
    %cst_38 = arith.constant dense<0.000000e+00> : vector<16x128xf32>
    %39 = tpu.matmul %36, %38, %cst_38 {dimension_numbers = #tpu.dot_dimension_numbers<[1], [0], [0], [1], [0, 0, 1, 1], [], []>} : vector<16x64xf32>, vector<64x128xf32>, vector<16x128xf32> -> vector<16x128xf32>
    %c0_39 = arith.constant 0 : index
    %c0_40 = arith.constant 0 : index
    %40 = vector.load %arg12[%c0_39, %c0_40] : memref<1x128xf32, #tpu.memory_space<vmem>>, vector<1x128xf32>
    %41 = vector.broadcast %40 : vector<1x128xf32> to vector<16x128xf32>
    %42 = arith.addf %39, %41 : vector<16x128xf32>
    %cst_41 = arith.constant 0.000000e+00 : f32
    %43 = vector.broadcast %cst_41 : f32 to vector<16x128xf32>
    %44 = arith.maximumf %42, %43 : vector<16x128xf32>
    %c0_42 = arith.constant 0 : index
    %c0_43 = arith.constant 0 : index
    %45 = vector.load %arg13[%c0_42, %c0_43] : memref<128x128xf32, #tpu.memory_space<vmem>>, vector<128x128xf32>
    %cst_44 = arith.constant dense<0.000000e+00> : vector<16x128xf32>
    %46 = tpu.matmul %44, %45, %cst_44 {dimension_numbers = #tpu.dot_dimension_numbers<[1], [0], [0], [1], [0, 0, 1, 1], [], []>} : vector<16x128xf32>, vector<128x128xf32>, vector<16x128xf32> -> vector<16x128xf32>
    %cst_45 = arith.constant dense<0xFF800000> : vector<128xf32>
    %47 = vector.multi_reduction <maximumf>, %46, %cst_45 [0] : vector<16x128xf32> to vector<128xf32>
    %48 = vector.shape_cast %47 : vector<128xf32> to vector<1x128xf32>
    %49 = arith.maximumf %29, %48 : vector<1x128xf32>
    %c0_46 = arith.constant 0 : index
    %c0_47 = arith.constant 0 : index
    %50 = vector.load %arg14[%c0_46, %c0_47] : memref<1x128xf32, #tpu.memory_space<vmem>>, vector<1x128xf32>
    %51 = arith.addf %49, %50 : vector<1x128xf32>
    %c0_48 = arith.constant 0 : index
    %c0_49 = arith.constant 0 : index
    %52 = vector.load %arg15[%c0_48, %c0_49] : memref<128x64xf32, #tpu.memory_space<vmem>>, vector<128x64xf32>
    %cst_50 = arith.constant dense<0.000000e+00> : vector<1x64xf32>
    %53 = tpu.matmul %51, %52, %cst_50 {dimension_numbers = #tpu.dot_dimension_numbers<[1], [0], [0], [1], [0, 0, 1, 1], [], []>} : vector<1x128xf32>, vector<128x64xf32>, vector<1x64xf32> -> vector<1x64xf32>
    %c0_51 = arith.constant 0 : index
    %c0_52 = arith.constant 0 : index
    %54 = vector.load %arg17[%c0_51, %c0_52] : memref<1x64xf32, #tpu.memory_space<vmem>>, vector<1x64xf32>
    %55 = arith.addf %53, %54 : vector<1x64xf32>
    %cst_53 = arith.constant 0xFF800000 : f32
    %56 = vector.broadcast %cst_53 : f32 to vector<1x128xf32>
    %c0_54 = arith.constant 0 : index
    %c0_55 = arith.constant 0 : index
    %57 = vector.load %arg23[%c0_54, %c0_55] : memref<16x64xf32, #tpu.memory_space<vmem>>, vector<16x64xf32>
    %c0_56 = arith.constant 0 : index
    %c0_57 = arith.constant 0 : index
    %58 = vector.load %arg16[%c0_56, %c0_57] : memref<64x64xf32, #tpu.memory_space<vmem>>, vector<64x64xf32>
    %cst_58 = arith.constant dense<0.000000e+00> : vector<16x64xf32>
    %59 = tpu.matmul %57, %58, %cst_58 {dimension_numbers = #tpu.dot_dimension_numbers<[1], [0], [0], [1], [0, 0, 1, 1], [], []>} : vector<16x64xf32>, vector<64x64xf32>, vector<16x64xf32> -> vector<16x64xf32>
    %60 = vector.broadcast %55 : vector<1x64xf32> to vector<16x64xf32>
    %61 = arith.addf %59, %60 : vector<16x64xf32>
    %cst_59 = arith.constant 0.000000e+00 : f32
    %62 = vector.broadcast %cst_59 : f32 to vector<16x64xf32>
    %63 = arith.maximumf %61, %62 : vector<16x64xf32>
    %c0_60 = arith.constant 0 : index
    %c0_61 = arith.constant 0 : index
    %64 = vector.load %arg18[%c0_60, %c0_61] : memref<64x128xf32, #tpu.memory_space<vmem>>, vector<64x128xf32>
    %cst_62 = arith.constant dense<0.000000e+00> : vector<16x128xf32>
    %65 = tpu.matmul %63, %64, %cst_62 {dimension_numbers = #tpu.dot_dimension_numbers<[1], [0], [0], [1], [0, 0, 1, 1], [], []>} : vector<16x64xf32>, vector<64x128xf32>, vector<16x128xf32> -> vector<16x128xf32>
    %c0_63 = arith.constant 0 : index
    %c0_64 = arith.constant 0 : index
    %66 = vector.load %arg19[%c0_63, %c0_64] : memref<1x128xf32, #tpu.memory_space<vmem>>, vector<1x128xf32>
    %67 = vector.broadcast %66 : vector<1x128xf32> to vector<16x128xf32>
    %68 = arith.addf %65, %67 : vector<16x128xf32>
    %cst_65 = arith.constant 0.000000e+00 : f32
    %69 = vector.broadcast %cst_65 : f32 to vector<16x128xf32>
    %70 = arith.maximumf %68, %69 : vector<16x128xf32>
    %c0_66 = arith.constant 0 : index
    %c0_67 = arith.constant 0 : index
    %71 = vector.load %arg20[%c0_66, %c0_67] : memref<128x128xf32, #tpu.memory_space<vmem>>, vector<128x128xf32>
    %cst_68 = arith.constant dense<0.000000e+00> : vector<16x128xf32>
    %72 = tpu.matmul %70, %71, %cst_68 {dimension_numbers = #tpu.dot_dimension_numbers<[1], [0], [0], [1], [0, 0, 1, 1], [], []>} : vector<16x128xf32>, vector<128x128xf32>, vector<16x128xf32> -> vector<16x128xf32>
    %cst_69 = arith.constant dense<0xFF800000> : vector<128xf32>
    %73 = vector.multi_reduction <maximumf>, %72, %cst_69 [0] : vector<16x128xf32> to vector<128xf32>
    %74 = vector.shape_cast %73 : vector<128xf32> to vector<1x128xf32>
    %75 = arith.maximumf %56, %74 : vector<1x128xf32>
    %c0_70 = arith.constant 0 : index
    %c0_71 = arith.constant 0 : index
    %76 = vector.load %arg21[%c0_70, %c0_71] : memref<1x128xf32, #tpu.memory_space<vmem>>, vector<1x128xf32>
    %77 = arith.addf %75, %76 : vector<1x128xf32>
    %c0_72 = arith.constant 0 : index
    %c0_73 = arith.constant 0 : index
    %c0_74 = arith.constant 0 : index
    %78 = vector.load %arg22[%c0_72, %c0_73, %c0_74] : memref<1x1x128xf32, #tpu.memory_space<vmem>>, vector<1x1x128xf32>
    %79 = vector.shape_cast %78 : vector<1x1x128xf32> to vector<1x128xf32>
    %80 = vector.shape_cast %77 : vector<1x128xf32> to vector<1x1x128xf32>
    tpu.vector_store %arg22[%c0_72, %c0_73, %c0_74], %80 {strides = array<i32>} : memref<1x1x128xf32, #tpu.memory_space<vmem>>, vector<1x1x128xf32>,
    return
  }
  func.func @transform_0(%arg0: i32) -> (i32, i32, i32) {
    %c0_i32 = arith.constant 0 : i32
    %c0_i32_0 = arith.constant 0 : i32
    %c0_i32_1 = arith.constant 0 : i32
    return %arg0, %c0_i32, %c0_i32_0 : i32, i32, i32
  }
  func.func @transform_1(%arg0: i32) -> (i32, i32) {
    %c0_i32 = arith.constant 0 : i32
    %c0_i32_0 = arith.constant 0 : i32
    %c0_i32_1 = arith.constant 0 : i32
    return %c0_i32, %c0_i32_0 : i32, i32
  }
  func.func @transform_2(%arg0: i32) -> (i32, i32) {
    %c0_i32 = arith.constant 0 : i32
    %c0_i32_0 = arith.constant 0 : i32
    %c0_i32_1 = arith.constant 0 : i32
    return %c0_i32, %c0_i32_0 : i32, i32
  }
  func.func @transform_3(%arg0: i32) -> (i32, i32) {
    %c0_i32 = arith.constant 0 : i32
    %c0_i32_0 = arith.constant 0 : i32
    %c0_i32_1 = arith.constant 0 : i32
    return %c0_i32, %c0_i32_0 : i32, i32
  }
  func.func @transform_4(%arg0: i32) -> (i32, i32) {
    %c0_i32 = arith.constant 0 : i32
    %c0_i32_0 = arith.constant 0 : i32
    %c0_i32_1 = arith.constant 0 : i32
    return %c0_i32, %c0_i32_0 : i32, i32
  }
  func.func @transform_5(%arg0: i32) -> (i32, i32) {
    %c0_i32 = arith.constant 0 : i32
    %c0_i32_0 = arith.constant 0 : i32
    %c0_i32_1 = arith.constant 0 : i32
    return %c0_i32, %c0_i32_0 : i32, i32
  }
  func.func @transform_6(%arg0: i32) -> (i32, i32) {
    %c0_i32 = arith.constant 0 : i32
    %c0_i32_0 = arith.constant 0 : i32
    %c0_i32_1 = arith.constant 0 : i32
    return %c0_i32, %c0_i32_0 : i32, i32
  }
  func.func @transform_7(%arg0: i32) -> (i32, i32) {
    %c0_i32 = arith.constant 0 : i32
    %c0_i32_0 = arith.constant 0 : i32
    %c0_i32_1 = arith.constant 0 : i32
    return %c0_i32, %c0_i32_0 : i32, i32
  }
  func.func @transform_8(%arg0: i32) -> (i32, i32) {
    %c0_i32 = arith.constant 0 : i32
    %c0_i32_0 = arith.constant 0 : i32
    %c0_i32_1 = arith.constant 0 : i32
    return %c0_i32, %c0_i32_0 : i32, i32
  }
  func.func @transform_9(%arg0: i32) -> (i32, i32) {
    %c0_i32 = arith.constant 0 : i32
    %c0_i32_0 = arith.constant 0 : i32
    %c0_i32_1 = arith.constant 0 : i32
    return %c0_i32, %c0_i32_0 : i32, i32
  }
  func.func @transform_10(%arg0: i32) -> (i32, i32) {
    %c0_i32 = arith.constant 0 : i32
    %c0_i32_0 = arith.constant 0 : i32
    %c0_i32_1 = arith.constant 0 : i32
    return %c0_i32, %c0_i32_0 : i32, i32
  }
  func.func @transform_11(%arg0: i32) -> (i32, i32) {
    %c0_i32 = arith.constant 0 : i32
    %c0_i32_0 = arith.constant 0 : i32
    %c0_i32_1 = arith.constant 0 : i32
    return %c0_i32, %c0_i32_0 : i32, i32
  }
  func.func @transform_12(%arg0: i32) -> (i32, i32) {
    %c0_i32 = arith.constant 0 : i32
    %c0_i32_0 = arith.constant 0 : i32
    %c0_i32_1 = arith.constant 0 : i32
    return %c0_i32, %c0_i32_0 : i32, i32
  }
  func.func @transform_13(%arg0: i32) -> (i32, i32) {
    %c0_i32 = arith.constant 0 : i32
    %c0_i32_0 = arith.constant 0 : i32
    %c0_i32_1 = arith.constant 0 : i32
    return %c0_i32, %c0_i32_0 : i32, i32
  }
  func.func @transform_14(%arg0: i32) -> (i32, i32) {
    %c0_i32 = arith.constant 0 : i32
    %c0_i32_0 = arith.constant 0 : i32
    %c0_i32_1 = arith.constant 0 : i32
    return %c0_i32, %c0_i32_0 : i32, i32
  }
  func.func @transform_15(%arg0: i32) -> (i32, i32) {
    %c0_i32 = arith.constant 0 : i32
    %c0_i32_0 = arith.constant 0 : i32
    %c0_i32_1 = arith.constant 0 : i32
    return %c0_i32, %c0_i32_0 : i32, i32
  }
  func.func @transform_16(%arg0: i32) -> (i32, i32) {
    %c0_i32 = arith.constant 0 : i32
    %c0_i32_0 = arith.constant 0 : i32
    %c0_i32_1 = arith.constant 0 : i32
    return %c0_i32, %c0_i32_0 : i32, i32
  }
  func.func @transform_17(%arg0: i32) -> (i32, i32) {
    %c0_i32 = arith.constant 0 : i32
    %c0_i32_0 = arith.constant 0 : i32
    %c0_i32_1 = arith.constant 0 : i32
    return %c0_i32, %c0_i32_0 : i32, i32
  }
  func.func @transform_18(%arg0: i32) -> (i32, i32) {
    %c0_i32 = arith.constant 0 : i32
    %c0_i32_0 = arith.constant 0 : i32
    %c0_i32_1 = arith.constant 0 : i32
    return %c0_i32, %c0_i32_0 : i32, i32
  }
  func.func @transform_19(%arg0: i32) -> (i32, i32) {
    %c0_i32 = arith.constant 0 : i32
    %c0_i32_0 = arith.constant 0 : i32
    %c0_i32_1 = arith.constant 0 : i32
    return %c0_i32, %c0_i32_0 : i32, i32
  }
  func.func @transform_20(%arg0: i32) -> (i32, i32) {
    %c0_i32 = arith.constant 0 : i32
    %c0_i32_0 = arith.constant 0 : i32
    %c0_i32_1 = arith.constant 0 : i32
    return %c0_i32, %c0_i32_0 : i32, i32
  }
  func.func @transform_21(%arg0: i32) -> (i32, i32, i32) {
    %c0_i32 = arith.constant 0 : i32
    %c0_i32_0 = arith.constant 0 : i32
    %c0_i32_1 = arith.constant 0 : i32
    return %arg0, %c0_i32, %c0_i32_0 : i32, i32, i32
  }
}

</mosaic_0001>

<llo_original>
// kernel: tpu_custom_call.1
$region0: #{tpu_custom_call.1}
  #allocation0 [shape = 'u32[]', space=smem, size = 0x4, offset = 0x4, fixed_abs, tag = 'smem constant byte address 0x4 - core index']
  #allocation1 [shape = 'u32[144,128]{1,0:T(1,128)}', space=vmem, size = 0x12000, scoped, tag = 'internal scratch']
  #allocation2 [shape = 'f32[16,64]{1,0:T(8,128)}', space=vmem, size = 0x2000, scoped, tag = 'scratch operand']
  %s0 = inlined_call_operand.vmem [shape: f32[2,16,8], index: 0, kind: input, shape index: {}]
  %s1 = inlined_call_operand.hbm [shape: f32[8,64], index: 1, kind: input, shape index: {}]
  %s2 = inlined_call_operand.vmem [shape: f32[1,64], index: 2, kind: input, shape index: {}]
  %s3 = inlined_call_operand.hbm [shape: f32[64,128], index: 3, kind: input, shape index: {}]
  %s4 = inlined_call_operand.vmem [shape: f32[1,128], index: 4, kind: input, shape index: {}]
  %s5 = inlined_call_operand.vmem [shape: f32[128,128], index: 5, kind: input, shape index: {}]
  %s6 = inlined_call_operand.hbm [shape: f32[1,128], index: 6, kind: input, shape index: {}]
  %s7 = inlined_call_operand.vmem [shape: f32[128,64], index: 7, kind: input, shape index: {}]
  %s8 = inlined_call_operand.hbm [shape: f32[64,64], index: 8, kind: input, shape index: {}]
  %s9 = inlined_call_operand.hbm [shape: f32[1,64], index: 9, kind: input, shape index: {}]
  %s10 = inlined_call_operand.hbm [shape: f32[64,128], index: 10, kind: input, shape index: {}]
  %s11 = inlined_call_operand.hbm [shape: f32[1,128], index: 11, kind: input, shape index: {}]
  %s12 = inlined_call_operand.vmem [shape: f32[128,128], index: 12, kind: input, shape index: {}]
  %s13 = inlined_call_operand.vmem [shape: f32[1,128], index: 13, kind: input, shape index: {}]
  %s14 = inlined_call_operand.vmem [shape: f32[128,64], index: 14, kind: input, shape index: {}]
  %s15 = inlined_call_operand.hbm [shape: f32[64,64], index: 15, kind: input, shape index: {}]
  %s16 = inlined_call_operand.vmem [shape: f32[1,64], index: 16, kind: input, shape index: {}]
  %s17 = inlined_call_operand.hbm [shape: f32[64,128], index: 17, kind: input, shape index: {}]
  %s18 = inlined_call_operand.vmem [shape: f32[1,128], index: 18, kind: input, shape index: {}]
  %s19 = inlined_call_operand.vmem [shape: f32[128,128], index: 19, kind: input, shape index: {}]
  %s20 = inlined_call_operand.vmem [shape: f32[1,128], index: 20, kind: input, shape index: {}]
  %s21 = inlined_call_operand.hbm [shape: f32[2,1,128], index: 21, kind: output, shape index: {}]
  %s22 = sld [smem:[#allocation0]]
  $region153: #{tpu_custom_call.1} parent=0
    _
  %s24 = ssub.s32 1, %s22
  %s25 = scalar_select 0, %s24, %s22
  $region1: #{tpu_custom_call.1} parent=0
    #allocation3 [shape = 'u8[4096]{0}', space=vmem, size = 0x1000, scoped, tag = 'input window, operand 1, single buffered']
    #allocation4 [shape = 's32[2]{0}', space=sflag, size = 0x8, scoped, tag = 'scoped memory for tpu_custom_call.1']
    #allocation5 [shape = 's32[2]{0}', space=sflag, size = 0x8, scoped, tag = 'scoped memory for tpu_custom_call.1']
    #allocation6 [shape = 'u8[32768]{0}', space=vmem, size = 0x8000, scoped, tag = 'input window, operand 3, single buffered']
    #allocation7 [shape = 's32[1]{0}', space=sflag, size = 0x4, scoped, tag = 'scoped memory for tpu_custom_call.1']
    #allocation8 [shape = 'u8[512]{0}', space=vmem, size = 0x400, scoped, tag = 'input window, operand 6, single buffered']
    #allocation9 [shape = 'u8[32768]{0}', space=vmem, size = 0x8000, scoped, tag = 'input window, operand 8, single buffered']
    #allocation10 [shape = 's32[1]{0}', space=sflag, size = 0x4, scoped, tag = 'scoped memory for tpu_custom_call.1']
    #allocation11 [shape = 'u8[512]{0}', space=vmem, size = 0x400, scoped, tag = 'input window, operand 9, single buffered']
    #allocation12 [shape = 'u8[32768]{0}', space=vmem, size = 0x8000, scoped, tag = 'input window, operand 10, single buffered']
    #allocation13 [shape = 's32[1]{0}', space=sflag, size = 0x4, scoped, tag = 'scoped memory for tpu_custom_call.1']
    #allocation14 [shape = 'u8[512]{0}', space=vmem, size = 0x400, scoped, tag = 'input window, operand 11, single buffered']
    #allocation15 [shape = 'u8[32768]{0}', space=vmem, size = 0x8000, scoped, tag = 'input window, operand 15, single buffered']
    #allocation16 [shape = 's32[1]{0}', space=sflag, size = 0x4, scoped, tag = 'scoped memory for tpu_custom_call.1']
    #allocation17 [shape = 'u8[32768]{0}', space=vmem, size = 0x8000, scoped, tag = 'input window, operand 17, single buffered']
    #allocation18 [shape = 'u8[1024]{0}', space=vmem, size = 0x400, scoped, tag = 'output window, operand 0']
    %26 = vsyncpa [#allocation4], 0
    %27 = vsyncpa [#allocation7], 0
    %28 = vsyncpa [#allocation10], 0
    %29 = vsyncpa [#allocation13], 0
    %30 = vsyncpa [#allocation16], 0
    %31 = vsyncpa [#allocation5], 0
    %s32 = scalar_lea.sflag [#allocation5], 1
    %33 = vsyncpa %s32, 0
    loop: start=0, step=1, limit=4
    $region2: #{tpu_custom_call.1} parent=1 // loop_pre_header
      _
    $region3: #{tpu_custom_call.1} parent=1 // loop_header
      %s35 = sphi 0, %s39
      %p36 = scmp.ge.s32.totalorder %s35, 4
      %s45 = sphi 0, %s47
      %s48 = sphi 0, %s45
      %s49 = sphi 0, %s48
      %s65 = sphi 0, %s49
      %s69 = sphi 0, %s69
      %s71 = sphi 0, %s69
      %s72 = sphi 0, %s71
      %s86 = sphi 0, %s72
      %s90 = sphi 0, %s90
      %s92 = sphi 0, %s90
      %s93 = sphi 0, %s92
      %s107 = sphi 0, %s93
      %s111 = sphi 0, %s111
      %s113 = sphi 0, %s111
      %s114 = sphi 0, %s113
      %s128 = sphi 0, %s114
      %s132 = sphi 0, %s132
      %s134 = sphi 0, %s132
      %s135 = sphi 0, %s134
      %s149 = sphi 0, %s135
      %s153 = sphi 0, %s153
      %s155 = sphi 0, %s153
      %s156 = sphi 0, %s155
      %s170 = sphi 0, %s156
      %s174 = sphi 0, %s174
      %s176 = sphi 0, %s174
      %s177 = sphi 0, %s176
      %s191 = sphi 0, %s177
      %s195 = sphi 0, %s195
      %s197 = sphi 0, %s195
      %s198 = sphi 0, %s197
      %s212 = sphi 0, %s198
      %s216 = sphi 0, %s216
      %s218 = sphi 0, %s216
      %s219 = sphi 0, %s218
      %s233 = sphi 0, %s219
      %s237 = sphi 0, %s237
      %s239 = sphi 0, %s237
      %s240 = sphi 0, %s239
      %s254 = sphi 0, %s240
      %s258 = sphi 0, %s258
      %s260 = sphi 0, %s258
      %s261 = sphi 0, %s260
      %s275 = sphi 0, %s261
      %s279 = sphi 0, %s279
      %s281 = sphi 0, %s279
      %s282 = sphi 0, %s281
      %s296 = sphi 0, %s282
      %s300 = sphi 0, %s300
      %s302 = sphi 0, %s300
      %s303 = sphi 0, %s302
      %s317 = sphi 0, %s303
      %s321 = sphi 0, %s321
      %s323 = sphi 0, %s321
      %s324 = sphi 0, %s323
      %s338 = sphi 0, %s324
      %s342 = sphi 0, %s342
      %s344 = sphi 0, %s342
      %s345 = sphi 0, %s344
      %s359 = sphi 0, %s345
      %s363 = sphi 0, %s363
      %s365 = sphi 0, %s363
      %s366 = sphi 0, %s365
      %s380 = sphi 0, %s366
      %s384 = sphi 0, %s384
      %s386 = sphi 0, %s384
      %s387 = sphi 0, %s386
      %s401 = sphi 0, %s387
      %s405 = sphi 0, %s405
      %s407 = sphi 0, %s405
      %s408 = sphi 0, %s407
      %s422 = sphi 0, %s408
      %s426 = sphi 0, %s426
      %s428 = sphi 0, %s426
      %s429 = sphi 0, %s428
      %s443 = sphi 0, %s429
      %s447 = sphi 0, %s447
      %s449 = sphi 0, %s447
      %s450 = sphi 0, %s449
      %s464 = sphi 0, %s450
      %s468 = sphi 0, %s468
      %s470 = sphi 0, %s468
      %s471 = sphi 0, %s470
      %s485 = sphi 0, %s471
      %s491 = sphi 0, %s493
      %s494 = sphi 0, %s491
      %s495 = sphi 0, %s494
      %s511 = sphi 0, %s495
    $region4: #{tpu_custom_call.1} parent=1 // loop_header_branch
      %38 = sbr.rel (%p36) target = $region8
    $region5: #{tpu_custom_call.1} parent=1 // loop_body
      %s40 = ssub.s32 %s35, 1
      %s41 = ssub.s32 %s35, 2
      %s42 = sadd.s32 %s35, 1
      %s43 = ssub.s32 %s35, %s42
      %p44 = scmp.eq.s32.totalorder %s43, 0
      %s46 = sadd.s32 %s45, 1
      %s47 = scalar_select %p44, %s45, %s46
      %p50 = pneg %p44
      %p51 = scmp.eq.s32.totalorder %s35, 1
      %p52 = por %p50, %p51
      %p53 = scmp.ne.s32.totalorder %s45, %s48
      %p54 = scmp.eq.s32.totalorder %s35, 0
      %p55 = por %p53, %p54
      %p56 = scmp.ne.s32.totalorder %s45, %s48
      %p57 = scmp.eq.s32.totalorder %s40, 1
      %p58 = por %p56, %p57
      %p59 = scmp.ne.s32.totalorder %s48, %s49
      %p60 = scmp.eq.s32.totalorder %s40, 0
      %p61 = por %p59, %p60
      %p62 = scmp.ne.s32.totalorder %s48, %s49
      %p63 = scmp.eq.s32.totalorder %s41, 1
      %p64 = por %p62, %p63
      %p66 = scmp.ne.s32.totalorder %s49, %s65
      %p67 = scmp.eq.s32.totalorder %s41, 0
      %p68 = por %p66, %p67
      %s70 = sadd.s32 %s69, 1
      %p73 = scmp.eq.s32.totalorder %s35, 1
      %p74 = scmp.ne.s32.totalorder %s69, %s71
      %p75 = scmp.eq.s32.totalorder %s35, 0
      %p76 = por %p74, %p75
      %p77 = scmp.ne.s32.totalorder %s69, %s71
      %p78 = scmp.eq.s32.totalorder %s40, 1
      %p79 = por %p77, %p78
      %p80 = scmp.ne.s32.totalorder %s71, %s72
      %p81 = scmp.eq.s32.totalorder %s40, 0
      %p82 = por %p80, %p81
      %p83 = scmp.ne.s32.totalorder %s71, %s72
      %p84 = scmp.eq.s32.totalorder %s41, 1
      %p85 = por %p83, %p84
      %p87 = scmp.ne.s32.totalorder %s72, %s86
      %p88 = scmp.eq.s32.totalorder %s41, 0
      %p89 = por %p87, %p88
      %s91 = sadd.s32 %s90, 1
      %p94 = scmp.eq.s32.totalorder %s35, 1
      %p95 = scmp.ne.s32.totalorder %s90, %s92
      %p96 = scmp.eq.s32.totalorder %s35, 0
      %p97 = por %p95, %p96
      %p98 = scmp.ne.s32.totalorder %s90, %s92
      %p99 = scmp.eq.s32.totalorder %s40, 1
      %p100 = por %p98, %p99
      %p101 = scmp.ne.s32.totalorder %s92, %s93
      %p102 = scmp.eq.s32.totalorder %s40, 0
      %p103 = por %p101, %p102
      %p104 = scmp.ne.s32.totalorder %s92, %s93
      %p105 = scmp.eq.s32.totalorder %s41, 1
      %p106 = por %p104, %p105
      %p108 = scmp.ne.s32.totalorder %s93, %s107
      %p109 = scmp.eq.s32.totalorder %s41, 0
      %p110 = por %p108, %p109
      %s112 = sadd.s32 %s111, 1
      %p115 = scmp.eq.s32.totalorder %s35, 1
      %p116 = scmp.ne.s32.totalorder %s111, %s113
      %p117 = scmp.eq.s32.totalorder %s35, 0
      %p118 = por %p116, %p117
      %p119 = scmp.ne.s32.totalorder %s111, %s113
      %p120 = scmp.eq.s32.totalorder %s40, 1
      %p121 = por %p119, %p120
      %p122 = scmp.ne.s32.totalorder %s113, %s114
      %p123 = scmp.eq.s32.totalorder %s40, 0
      %p124 = por %p122, %p123
      %p125 = scmp.ne.s32.totalorder %s113, %s114
      %p126 = scmp.eq.s32.totalorder %s41, 1
      %p127 = por %p125, %p126
      %p129 = scmp.ne.s32.totalorder %s114, %s128
      %p130 = scmp.eq.s32.totalorder %s41, 0
      %p131 = por %p129, %p130
      %s133 = sadd.s32 %s132, 1
      %p136 = scmp.eq.s32.totalorder %s35, 1
      %p137 = scmp.ne.s32.totalorder %s132, %s134
      %p138 = scmp.eq.s32.totalorder %s35, 0
      %p139 = por %p137, %p138
      %p140 = scmp.ne.s32.totalorder %s132, %s134
      %p141 = scmp.eq.s32.totalorder %s40, 1
      %p142 = por %p140, %p141
      %p143 = scmp.ne.s32.totalorder %s134, %s135
      %p144 = scmp.eq.s32.totalorder %s40, 0
      %p145 = por %p143, %p144
      %p146 = scmp.ne.s32.totalorder %s134, %s135
      %p147 = scmp.eq.s32.totalorder %s41, 1
      %p148 = por %p146, %p147
      %p150 = scmp.ne.s32.totalorder %s135, %s149
      %p151 = scmp.eq.s32.totalorder %s41, 0
      %p152 = por %p150, %p151
      %s154 = sadd.s32 %s153, 1
      %p157 = scmp.eq.s32.totalorder %s35, 1
      %p158 = scmp.ne.s32.totalorder %s153, %s155
      %p159 = scmp.eq.s32.totalorder %s35, 0
      %p160 = por %p158, %p159
      %p161 = scmp.ne.s32.totalorder %s153, %s155
      %p162 = scmp.eq.s32.totalorder %s40, 1
      %p163 = por %p161, %p162
      %p164 = scmp.ne.s32.totalorder %s155, %s156
      %p165 = scmp.eq.s32.totalorder %s40, 0
      %p166 = por %p164, %p165
      %p167 = scmp.ne.s32.totalorder %s155, %s156
      %p168 = scmp.eq.s32.totalorder %s41, 1
      %p169 = por %p167, %p168
      %p171 = scmp.ne.s32.totalorder %s156, %s170
      %p172 = scmp.eq.s32.totalorder %s41, 0
      %p173 = por %p171, %p172
      %s175 = sadd.s32 %s174, 1
      %p178 = scmp.eq.s32.totalorder %s35, 1
      %p179 = scmp.ne.s32.totalorder %s174, %s176
      %p180 = scmp.eq.s32.totalorder %s35, 0
      %p181 = por %p179, %p180
      %p182 = scmp.ne.s32.totalorder %s174, %s176
      %p183 = scmp.eq.s32.totalorder %s40, 1
      %p184 = por %p182, %p183
      %p185 = scmp.ne.s32.totalorder %s176, %s177
      %p186 = scmp.eq.s32.totalorder %s40, 0
      %p187 = por %p185, %p186
      %p188 = scmp.ne.s32.totalorder %s176, %s177
      %p189 = scmp.eq.s32.totalorder %s41, 1
      %p190 = por %p188, %p189
      %p192 = scmp.ne.s32.totalorder %s177, %s191
      %p193 = scmp.eq.s32.totalorder %s41, 0
      %p194 = por %p192, %p193
      %s196 = sadd.s32 %s195, 1
      %p199 = scmp.eq.s32.totalorder %s35, 1
      %p200 = scmp.ne.s32.totalorder %s195, %s197
      %p201 = scmp.eq.s32.totalorder %s35, 0
      %p202 = por %p200, %p201
      %p203 = scmp.ne.s32.totalorder %s195, %s197
      %p204 = scmp.eq.s32.totalorder %s40, 1
      %p205 = por %p203, %p204
      %p206 = scmp.ne.s32.totalorder %s197, %s198
      %p207 = scmp.eq.s32.totalorder %s40, 0
      %p208 = por %p206, %p207
      %p209 = scmp.ne.s32.totalorder %s197, %s198
      %p210 = scmp.eq.s32.totalorder %s41, 1
      %p211 = por %p209, %p210
      %p213 = scmp.ne.s32.totalorder %s198, %s212
      %p214 = scmp.eq.s32.totalorder %s41, 0
      %p215 = por %p213, %p214
      %s217 = sadd.s32 %s216, 1
      %p220 = scmp.eq.s32.totalorder %s35, 1
      %p221 = scmp.ne.s32.totalorder %s216, %s218
      %p222 = scmp.eq.s32.totalorder %s35, 0
      %p223 = por %p221, %p222
      %p224 = scmp.ne.s32.totalorder %s216, %s218
      %p225 = scmp.eq.s32.totalorder %s40, 1
      %p226 = por %p224, %p225
      %p227 = scmp.ne.s32.totalorder %s218, %s219
      %p228 = scmp.eq.s32.totalorder %s40, 0
      %p229 = por %p227, %p228
      %p230 = scmp.ne.s32.totalorder %s218, %s219
      %p231 = scmp.eq.s32.totalorder %s41, 1
      %p232 = por %p230, %p231
      %p234 = scmp.ne.s32.totalorder %s219, %s233
      %p235 = scmp.eq.s32.totalorder %s41, 0
      %p236 = por %p234, %p235
      %s238 = sadd.s32 %s237, 1
      %p241 = scmp.eq.s32.totalorder %s35, 1
      %p242 = scmp.ne.s32.totalorder %s237, %s239
      %p243 = scmp.eq.s32.totalorder %s35, 0
      %p244 = por %p242, %p243
      %p245 = scmp.ne.s32.totalorder %s237, %s239
      %p246 = scmp.eq.s32.totalorder %s40, 1
      %p247 = por %p245, %p246
      %p248 = scmp.ne.s32.totalorder %s239, %s240
      %p249 = scmp.eq.s32.totalorder %s40, 0
      %p250 = por %p248, %p249
      %p251 = scmp.ne.s32.totalorder %s239, %s240
      %p252 = scmp.eq.s32.totalorder %s41, 1
      %p253 = por %p251, %p252
      %p255 = scmp.ne.s32.totalorder %s240, %s254
      %p256 = scmp.eq.s32.totalorder %s41, 0
      %p257 = por %p255, %p256
      %s259 = sadd.s32 %s258, 1
      %p262 = scmp.eq.s32.totalorder %s35, 1
      %p263 = scmp.ne.s32.totalorder %s258, %s260
      %p264 = scmp.eq.s32.totalorder %s35, 0
      %p265 = por %p263, %p264
      %p266 = scmp.ne.s32.totalorder %s258, %s260
      %p267 = scmp.eq.s32.totalorder %s40, 1
      %p268 = por %p266, %p267
      %p269 = scmp.ne.s32.totalorder %s260, %s261
      %p270 = scmp.eq.s32.totalorder %s40, 0
      %p271 = por %p269, %p270
      %p272 = scmp.ne.s32.totalorder %s260, %s261
      %p273 = scmp.eq.s32.totalorder %s41, 1
      %p274 = por %p272, %p273
      %p276 = scmp.ne.s32.totalorder %s261, %s275
      %p277 = scmp.eq.s32.totalorder %s41, 0
      %p278 = por %p276, %p277
      %s280 = sadd.s32 %s279, 1
      %p283 = scmp.eq.s32.totalorder %s35, 1
      %p284 = scmp.ne.s32.totalorder %s279, %s281
      %p285 = scmp.eq.s32.totalorder %s35, 0
      %p286 = por %p284, %p285
      %p287 = scmp.ne.s32.totalorder %s279, %s281
      %p288 = scmp.eq.s32.totalorder %s40, 1
      %p289 = por %p287, %p288
      %p290 = scmp.ne.s32.totalorder %s281, %s282
      %p291 = scmp.eq.s32.totalorder %s40, 0
      %p292 = por %p290, %p291
      %p293 = scmp.ne.s32.totalorder %s281, %s282
      %p294 = scmp.eq.s32.totalorder %s41, 1
      %p295 = por %p293, %p294
      %p297 = scmp.ne.s32.totalorder %s282, %s296
      %p298 = scmp.eq.s32.totalorder %s41, 0
      %p299 = por %p297, %p298
      %s301 = sadd.s32 %s300, 1
      %p304 = scmp.eq.s32.totalorder %s35, 1
      %p305 = scmp.ne.s32.totalorder %s300, %s302
      %p306 = scmp.eq.s32.totalorder %s35, 0
      %p307 = por %p305, %p306
      %p308 = scmp.ne.s32.totalorder %s300, %s302
      %p309 = scmp.eq.s32.totalorder %s40, 1
      %p310 = por %p308, %p309
      %p311 = scmp.ne.s32.totalorder %s302, %s303
      %p312 = scmp.eq.s32.totalorder %s40, 0
      %p313 = por %p311, %p312
      %p314 = scmp.ne.s32.totalorder %s302, %s303
      %p315 = scmp.eq.s32.totalorder %s41, 1
      %p316 = por %p314, %p315
      %p318 = scmp.ne.s32.totalorder %s303, %s317
      %p319 = scmp.eq.s32.totalorder %s41, 0
      %p320 = por %p318, %p319
      %s322 = sadd.s32 %s321, 1
      %p325 = scmp.eq.s32.totalorder %s35, 1
      %p326 = scmp.ne.s32.totalorder %s321, %s323
      %p327 = scmp.eq.s32.totalorder %s35, 0
      %p328 = por %p326, %p327
      %p329 = scmp.ne.s32.totalorder %s321, %s323
      %p330 = scmp.eq.s32.totalorder %s40, 1
      %p331 = por %p329, %p330
      %p332 = scmp.ne.s32.totalorder %s323, %s324
      %p333 = scmp.eq.s32.totalorder %s40, 0
      %p334 = por %p332, %p333
      %p335 = scmp.ne.s32.totalorder %s323, %s324
      %p336 = scmp.eq.s32.totalorder %s41, 1
      %p337 = por %p335, %p336
      %p339 = scmp.ne.s32.totalorder %s324, %s338
      %p340 = scmp.eq.s32.totalorder %s41, 0
      %p341 = por %p339, %p340
      %s343 = sadd.s32 %s342, 1
      %p346 = scmp.eq.s32.totalorder %s35, 1
      %p347 = scmp.ne.s32.totalorder %s342, %s344
      %p348 = scmp.eq.s32.totalorder %s35, 0
      %p349 = por %p347, %p348
      %p350 = scmp.ne.s32.totalorder %s342, %s344
      %p351 = scmp.eq.s32.totalorder %s40, 1
      %p352 = por %p350, %p351
      %p353 = scmp.ne.s32.totalorder %s344, %s345
      %p354 = scmp.eq.s32.totalorder %s40, 0
      %p355 = por %p353, %p354
      %p356 = scmp.ne.s32.totalorder %s344, %s345
      %p357 = scmp.eq.s32.totalorder %s41, 1
      %p358 = por %p356, %p357
      %p360 = scmp.ne.s32.totalorder %s345, %s359
      %p361 = scmp.eq.s32.totalorder %s41, 0
      %p362 = por %p360, %p361
      %s364 = sadd.s32 %s363, 1
      %p367 = scmp.eq.s32.totalorder %s35, 1
      %p368 = scmp.ne.s32.totalorder %s363, %s365
      %p369 = scmp.eq.s32.totalorder %s35, 0
      %p370 = por %p368, %p369
      %p371 = scmp.ne.s32.totalorder %s363, %s365
      %p372 = scmp.eq.s32.totalorder %s40, 1
      %p373 = por %p371, %p372
      %p374 = scmp.ne.s32.totalorder %s365, %s366
      %p375 = scmp.eq.s32.totalorder %s40, 0
      %p376 = por %p374, %p375
      %p377 = scmp.ne.s32.totalorder %s365, %s366
      %p378 = scmp.eq.s32.totalorder %s41, 1
      %p379 = por %p377, %p378
      %p381 = scmp.ne.s32.totalorder %s366, %s380
      %p382 = scmp.eq.s32.totalorder %s41, 0
      %p383 = por %p381, %p382
      %s385 = sadd.s32 %s384, 1
      %p388 = scmp.eq.s32.totalorder %s35, 1
      %p389 = scmp.ne.s32.totalorder %s384, %s386
      %p390 = scmp.eq.s32.totalorder %s35, 0
      %p391 = por %p389, %p390
      %p392 = scmp.ne.s32.totalorder %s384, %s386
      %p393 = scmp.eq.s32.totalorder %s40, 1
      %p394 = por %p392, %p393
      %p395 = scmp.ne.s32.totalorder %s386, %s387
      %p396 = scmp.eq.s32.totalorder %s40, 0
      %p397 = por %p395, %p396
      %p398 = scmp.ne.s32.totalorder %s386, %s387
      %p399 = scmp.eq.s32.totalorder %s41, 1
      %p400 = por %p398, %p399
      %p402 = scmp.ne.s32.totalorder %s387, %s401
      %p403 = scmp.eq.s32.totalorder %s41, 0
      %p404 = por %p402, %p403
      %s406 = sadd.s32 %s405, 1
      %p409 = scmp.eq.s32.totalorder %s35, 1
      %p410 = scmp.ne.s32.totalorder %s405, %s407
      %p411 = scmp.eq.s32.totalorder %s35, 0
      %p412 = por %p410, %p411
      %p413 = scmp.ne.s32.totalorder %s405, %s407
      %p414 = scmp.eq.s32.totalorder %s40, 1
      %p415 = por %p413, %p414
      %p416 = scmp.ne.s32.totalorder %s407, %s408
      %p417 = scmp.eq.s32.totalorder %s40, 0
      %p418 = por %p416, %p417
      %p419 = scmp.ne.s32.totalorder %s407, %s408
      %p420 = scmp.eq.s32.totalorder %s41, 1
      %p421 = por %p419, %p420
      %p423 = scmp.ne.s32.totalorder %s408, %s422
      %p424 = scmp.eq.s32.totalorder %s41, 0
      %p425 = por %p423, %p424
      %s427 = sadd.s32 %s426, 1
      %p430 = scmp.eq.s32.totalorder %s35, 1
      %p431 = scmp.ne.s32.totalorder %s426, %s428
      %p432 = scmp.eq.s32.totalorder %s35, 0
      %p433 = por %p431, %p432
      %p434 = scmp.ne.s32.totalorder %s426, %s428
      %p435 = scmp.eq.s32.totalorder %s40, 1
      %p436 = por %p434, %p435
      %p437 = scmp.ne.s32.totalorder %s428, %s429
      %p438 = scmp.eq.s32.totalorder %s40, 0
      %p439 = por %p437, %p438
      %p440 = scmp.ne.s32.totalorder %s428, %s429
      %p441 = scmp.eq.s32.totalorder %s41, 1
      %p442 = por %p440, %p441
      %p444 = scmp.ne.s32.totalorder %s429, %s443
      %p445 = scmp.eq.s32.totalorder %s41, 0
      %p446 = por %p444, %p445
      %s448 = sadd.s32 %s447, 1
      %p451 = scmp.eq.s32.totalorder %s35, 1
      %p452 = scmp.ne.s32.totalorder %s447, %s449
      %p453 = scmp.eq.s32.totalorder %s35, 0
      %p454 = por %p452, %p453
      %p455 = scmp.ne.s32.totalorder %s447, %s449
      %p456 = scmp.eq.s32.totalorder %s40, 1
      %p457 = por %p455, %p456
      %p458 = scmp.ne.s32.totalorder %s449, %s450
      %p459 = scmp.eq.s32.totalorder %s40, 0
      %p460 = por %p458, %p459
      %p461 = scmp.ne.s32.totalorder %s449, %s450
      %p462 = scmp.eq.s32.totalorder %s41, 1
      %p463 = por %p461, %p462
      %p465 = scmp.ne.s32.totalorder %s450, %s464
      %p466 = scmp.eq.s32.totalorder %s41, 0
      %p467 = por %p465, %p466
      %s469 = sadd.s32 %s468, 1
      %p472 = scmp.eq.s32.totalorder %s35, 1
      %p473 = scmp.ne.s32.totalorder %s468, %s470
      %p474 = scmp.eq.s32.totalorder %s35, 0
      %p475 = por %p473, %p474
      %p476 = scmp.ne.s32.totalorder %s468, %s470
      %p477 = scmp.eq.s32.totalorder %s40, 1
      %p478 = por %p476, %p477
      %p479 = scmp.ne.s32.totalorder %s470, %s471
      %p480 = scmp.eq.s32.totalorder %s40, 0
      %p481 = por %p479, %p480
      %p482 = scmp.ne.s32.totalorder %s470, %s471
      %p483 = scmp.eq.s32.totalorder %s41, 1
      %p484 = por %p482, %p483
      %p486 = scmp.ne.s32.totalorder %s471, %s485
      %p487 = scmp.eq.s32.totalorder %s41, 0
      %p488 = por %p486, %p487
      %s489 = ssub.s32 %s35, %s42
      %p490 = scmp.eq.s32.totalorder %s489, 0
      %s492 = sadd.s32 %s491, 1
      %s493 = scalar_select %p490, %s491, %s492
      %p496 = pneg %p490
      %p497 = scmp.eq.s32.totalorder %s35, 1
      %p498 = por %p496, %p497
      %p499 = scmp.ne.s32.totalorder %s491, %s494
      %p500 = scmp.eq.s32.totalorder %s35, 0
      %p501 = por %p499, %p500
      %p502 = scmp.ne.s32.totalorder %s491, %s494
      %p503 = scmp.eq.s32.totalorder %s40, 1
      %p504 = por %p502, %p503
      %p505 = scmp.ne.s32.totalorder %s494, %s495
      %p506 = scmp.eq.s32.totalorder %s40, 0
      %p507 = por %p505, %p506
      %p508 = scmp.ne.s32.totalorder %s494, %s495
      %p509 = scmp.eq.s32.totalorder %s41, 1
      %p510 = por %p508, %p509
      %p512 = scmp.ne.s32.totalorder %s495, %s511
      %p513 = scmp.eq.s32.totalorder %s41, 0
      %p514 = por %p512, %p513
      %p515 = scmp.le.s32.totalorder 1, %s35
      %p516 = scmp.lt.s32.totalorder %s35, 3
      %p517 = pnand %p515, %p516
      %p518 = pneg %p517
      // Predicated region
      $region9: #{tpu_custom_call.1} parent=5 // pred_check
        _
      $region10: #{tpu_custom_call.1} parent=5 // pred_check_branch
        %520 = sbr.rel (%p517) target = $region12
      $region11: #{tpu_custom_call.1} parent=5 // pred_region
        %s521 = ssub.s32 %s35, 1
        // Predicated region
        $region13: #{tpu_custom_call.1} parent=11 // pred_check
          %p522 = pneg %p82
        $region14: #{tpu_custom_call.1} parent=11 // pred_check_branch
          %524 = sbr.rel (%p522) target = $region16
        $region15: #{tpu_custom_call.1} parent=11 // pred_region
          %s526 = ssub.s32 128, 128
          %527 = vsyncadd [#allocation4], %s526
          %s529 = sshll.u32 [#allocation3], 4
          %s530 = int_to_ptr.vmem [resolvable:$true] %s529
          %532 = dma.hbm_to_vmem [thread:$0]  %s1, 128, %s530, [#allocation4]
        $region16: #{tpu_custom_call.1} parent=11 // pred_fallthru
          _
        // Predicated region
        $region17: #{tpu_custom_call.1} parent=11 // pred_check
          %p533 = pneg %p103
        $region18: #{tpu_custom_call.1} parent=11 // pred_check_branch
          %535 = sbr.rel (%p533) target = $region20
        $region19: #{tpu_custom_call.1} parent=11 // pred_region
          _
        $region20: #{tpu_custom_call.1} parent=11 // pred_fallthru
          _
        // Predicated region
        $region21: #{tpu_custom_call.1} parent=11 // pred_check
          %p536 = pneg %p124
        $region22: #{tpu_custom_call.1} parent=11 // pred_check_branch
          %538 = sbr.rel (%p536) target = $region24
        $region23: #{tpu_custom_call.1} parent=11 // pred_region
          %s540 = ssub.s32 1024, 1024
          %541 = vsyncadd [#allocation7], %s540
          %s542 = sshll.u32 [#allocation6], 4
          %s543 = int_to_ptr.vmem [resolvable:$true] %s542
          %548 = dma.hbm_to_vmem [thread:$0]  %s3, 1024, %s543, [#allocation7], 128, 128, 8
        $region24: #{tpu_custom_call.1} parent=11 // pred_fallthru
          _
        // Predicated region
        $region25: #{tpu_custom_call.1} parent=11 // pred_check
          %p549 = pneg %p145
        $region26: #{tpu_custom_call.1} parent=11 // pred_check_branch
          %551 = sbr.rel (%p549) target = $region28
        $region27: #{tpu_custom_call.1} parent=11 // pred_region
          _
        $region28: #{tpu_custom_call.1} parent=11 // pred_fallthru
          _
        // Predicated region
        $region29: #{tpu_custom_call.1} parent=11 // pred_check
          %p552 = pneg %p166
        $region30: #{tpu_custom_call.1} parent=11 // pred_check_branch
          %554 = sbr.rel (%p552) target = $region32
        $region31: #{tpu_custom_call.1} parent=11 // pred_region
          _
        $region32: #{tpu_custom_call.1} parent=11 // pred_fallthru
          _
        // Predicated region
        $region33: #{tpu_custom_call.1} parent=11 // pred_check
          %p555 = pneg %p187
        $region34: #{tpu_custom_call.1} parent=11 // pred_check_branch
          %557 = sbr.rel (%p555) target = $region36
        $region35: #{tpu_custom_call.1} parent=11 // pred_region
          %s559 = ssub.s32 16, 16
          %560 = vsyncadd [#allocation7], %s559
          %s562 = sshll.u32 [#allocation8], 4
          %s563 = int_to_ptr.vmem [resolvable:$true] %s562
          %565 = dma.hbm_to_vmem [thread:$0]  %s6, 16, %s563, [#allocation7]
        $region36: #{tpu_custom_call.1} parent=11 // pred_fallthru
          _
        // Predicated region
        $region37: #{tpu_custom_call.1} parent=11 // pred_check
          %p566 = pneg %p208
        $region38: #{tpu_custom_call.1} parent=11 // pred_check_branch
          %568 = sbr.rel (%p566) target = $region40
        $region39: #{tpu_custom_call.1} parent=11 // pred_region
          _
        $region40: #{tpu_custom_call.1} parent=11 // pred_fallthru
          _
        // Predicated region
        $region41: #{tpu_custom_call.1} parent=11 // pred_check
          %p569 = pneg %p229
        $region42: #{tpu_custom_call.1} parent=11 // pred_check_branch
          %571 = sbr.rel (%p569) target = $region44
        $region43: #{tpu_custom_call.1} parent=11 // pred_region
          %s573 = ssub.s32 1024, 1024
          %574 = vsyncadd [#allocation10], %s573
          %s575 = sshll.u32 [#allocation9], 4
          %s576 = int_to_ptr.vmem [resolvable:$true] %s575
          %581 = dma.hbm_to_vmem [thread:$0]  %s8, 1024, %s576, [#allocation10], 128, 128, 8
        $region44: #{tpu_custom_call.1} parent=11 // pred_fallthru
          _
        // Predicated region
        $region45: #{tpu_custom_call.1} parent=11 // pred_check
          %p582 = pneg %p250
        $region46: #{tpu_custom_call.1} parent=11 // pred_check_branch
          %584 = sbr.rel (%p582) target = $region48
        $region47: #{tpu_custom_call.1} parent=11 // pred_region
          %s586 = ssub.s32 16, 16
          %587 = vsyncadd [#allocation10], %s586
          %s589 = sshll.u32 [#allocation11], 4
          %s590 = int_to_ptr.vmem [resolvable:$true] %s589
          %592 = dma.hbm_to_vmem [thread:$0]  %s9, 16, %s590, [#allocation10]
        $region48: #{tpu_custom_call.1} parent=11 // pred_fallthru
          _
        // Predicated region
        $region49: #{tpu_custom_call.1} parent=11 // pred_check
          %p593 = pneg %p271
        $region50: #{tpu_custom_call.1} parent=11 // pred_check_branch
          %595 = sbr.rel (%p593) target = $region52
        $region51: #{tpu_custom_call.1} parent=11 // pred_region
          %s597 = ssub.s32 1024, 1024
          %598 = vsyncadd [#allocation13], %s597
          %s599 = sshll.u32 [#allocation12], 4
          %s600 = int_to_ptr.vmem [resolvable:$true] %s599
          %605 = dma.hbm_to_vmem [thread:$0]  %s10, 1024, %s600, [#allocation13], 128, 128, 8
        $region52: #{tpu_custom_call.1} parent=11 // pred_fallthru
          _
        // Predicated region
        $region53: #{tpu_custom_call.1} parent=11 // pred_check
          %p606 = pneg %p292
        $region54: #{tpu_custom_call.1} parent=11 // pred_check_branch
          %608 = sbr.rel (%p606) target = $region56
        $region55: #{tpu_custom_call.1} parent=11 // pred_region
          %s610 = ssub.s32 16, 16
          %611 = vsyncadd [#allocation13], %s610
          %s613 = sshll.u32 [#allocation14], 4
          %s614 = int_to_ptr.vmem [resolvable:$true] %s613
          %616 = dma.hbm_to_vmem [thread:$0]  %s11, 16, %s614, [#allocation13]
        $region56: #{tpu_custom_call.1} parent=11 // pred_fallthru
          _
        // Predicated region
        $region57: #{tpu_custom_call.1} parent=11 // pred_check
          %p617 = pneg %p313
        $region58: #{tpu_custom_call.1} parent=11 // pred_check_branch
          %619 = sbr.rel (%p617) target = $region60
        $region59: #{tpu_custom_call.1} parent=11 // pred_region
          _
        $region60: #{tpu_custom_call.1} parent=11 // pred_fallthru
          _
        // Predicated region
        $region61: #{tpu_custom_call.1} parent=11 // pred_check
          %p620 = pneg %p334
        $region62: #{tpu_custom_call.1} parent=11 // pred_check_branch
          %622 = sbr.rel (%p620) target = $region64
        $region63: #{tpu_custom_call.1} parent=11 // pred_region
          _
        $region64: #{tpu_custom_call.1} parent=11 // pred_fallthru
          _
        // Predicated region
        $region65: #{tpu_custom_call.1} parent=11 // pred_check
          %p623 = pneg %p355
        $region66: #{tpu_custom_call.1} parent=11 // pred_check_branch
          %625 = sbr.rel (%p623) target = $region68
        $region67: #{tpu_custom_call.1} parent=11 // pred_region
          _
        $region68: #{tpu_custom_call.1} parent=11 // pred_fallthru
          _
        // Predicated region
        $region69: #{tpu_custom_call.1} parent=11 // pred_check
          %p626 = pneg %p376
        $region70: #{tpu_custom_call.1} parent=11 // pred_check_branch
          %628 = sbr.rel (%p626) target = $region72
        $region71: #{tpu_custom_call.1} parent=11 // pred_region
          %s630 = ssub.s32 1024, 1024
          %631 = vsyncadd [#allocation16], %s630
          %s632 = sshll.u32 [#allocation15], 4
          %s633 = int_to_ptr.vmem [resolvable:$true] %s632
          %638 = dma.hbm_to_vmem [thread:$0]  %s15, 1024, %s633, [#allocation16], 128, 128, 8
        $region72: #{tpu_custom_call.1} parent=11 // pred_fallthru
          _
        // Predicated region
        $region73: #{tpu_custom_call.1} parent=11 // pred_check
          %p639 = pneg %p397
        $region74: #{tpu_custom_call.1} parent=11 // pred_check_branch
          %641 = sbr.rel (%p639) target = $region76
        $region75: #{tpu_custom_call.1} parent=11 // pred_region
          _
        $region76: #{tpu_custom_call.1} parent=11 // pred_fallthru
          _
        // Predicated region
        $region77: #{tpu_custom_call.1} parent=11 // pred_check
          %p642 = pneg %p418
        $region78: #{tpu_custom_call.1} parent=11 // pred_check_branch
          %644 = sbr.rel (%p642) target = $region80
        $region79: #{tpu_custom_call.1} parent=11 // pred_region
          %s646 = ssub.s32 1024, 1024
          %647 = vsyncadd [#allocation16], %s646
          %s648 = sshll.u32 [#allocation17], 4
          %s649 = int_to_ptr.vmem [resolvable:$true] %s648
          %654 = dma.hbm_to_vmem [thread:$0]  %s17, 1024, %s649, [#allocation16], 128, 128, 8
        $region80: #{tpu_custom_call.1} parent=11 // pred_fallthru
          _
        // Predicated region
        $region81: #{tpu_custom_call.1} parent=11 // pred_check
          %p655 = pneg %p439
        $region82: #{tpu_custom_call.1} parent=11 // pred_check_branch
          %657 = sbr.rel (%p655) target = $region84
        $region83: #{tpu_custom_call.1} parent=11 // pred_region
          _
        $region84: #{tpu_custom_call.1} parent=11 // pred_fallthru
          _
        // Predicated region
        $region85: #{tpu_custom_call.1} parent=11 // pred_check
          %p658 = pneg %p460
        $region86: #{tpu_custom_call.1} parent=11 // pred_check_branch
          %660 = sbr.rel (%p658) target = $region88
        $region87: #{tpu_custom_call.1} parent=11 // pred_region
          _
        $region88: #{tpu_custom_call.1} parent=11 // pred_fallthru
          _
        // Predicated region
        $region89: #{tpu_custom_call.1} parent=11 // pred_check
          %p661 = pneg %p481
        $region90: #{tpu_custom_call.1} parent=11 // pred_check_branch
          %663 = sbr.rel (%p661) target = $region92
        $region91: #{tpu_custom_call.1} parent=11 // pred_region
          _
        $region92: #{tpu_custom_call.1} parent=11 // pred_fallthru
          _
      $region12: #{tpu_custom_call.1} parent=5 // pred_fallthru
        _
      %p664 = scmp.lt.s32.totalorder %s35, 2
      // Predicated region
      $region93: #{tpu_custom_call.1} parent=5 // pred_check
        %p665 = pneg %p664
      $region94: #{tpu_custom_call.1} parent=5 // pred_check_branch
        %667 = sbr.rel (%p665) target = $region96
      $region95: #{tpu_custom_call.1} parent=5 // pred_region
        // Predicated region
        $region97: #{tpu_custom_call.1} parent=95 // pred_check
          %p668 = pneg %p55
        $region98: #{tpu_custom_call.1} parent=95 // pred_check_branch
          %670 = sbr.rel (%p668) target = $region100
        $region99: #{tpu_custom_call.1} parent=95 // pred_region
          %p671 = scmp.lt.s32.totalorder %s35, 1
          %s672 = scalar_select %p671, %s35, 1
          %s673 = smul.addr %s672, 2
          %s674 = smul.addr %s673, 8
          %s675 = scalar_lea.vmem %s0, %s674
        $region100: #{tpu_custom_call.1} parent=95 // pred_fallthru
          _
      $region96: #{tpu_custom_call.1} parent=5 // pred_fallthru
        _
      %p676 = scmp.le.s32.totalorder 1, %s35
      %p677 = scmp.lt.s32.totalorder %s35, 3
      %p678 = pnand %p676, %p677
      %p679 = pneg %p678
      // Predicated region
      $region101: #{tpu_custom_call.1} parent=5 // pred_check
        _
      $region102: #{tpu_custom_call.1} parent=5 // pred_check_branch
        %681 = sbr.rel (%p678) target = $region104
      $region103: #{tpu_custom_call.1} parent=5 // pred_region
        %s682 = ssub.s32 %s35, 1
        // Predicated region
        $region105: #{tpu_custom_call.1} parent=103 // pred_check
          %p683 = pneg %p82
        $region106: #{tpu_custom_call.1} parent=103 // pred_check_branch
          %685 = sbr.rel (%p683) target = $region108
        $region107: #{tpu_custom_call.1} parent=103 // pred_region
          %686 = dma.done [#allocation4], 128
        $region108: #{tpu_custom_call.1} parent=103 // pred_fallthru
          _
        // Predicated region
        $region109: #{tpu_custom_call.1} parent=103 // pred_check
          %p687 = pneg %p124
        $region110: #{tpu_custom_call.1} parent=103 // pred_check_branch
          %689 = sbr.rel (%p687) target = $region112
        $region111: #{tpu_custom_call.1} parent=103 // pred_region
          %690 = dma.done [#allocation7], 1024
        $region112: #{tpu_custom_call.1} parent=103 // pred_fallthru
          _
        // Predicated region
        $region113: #{tpu_custom_call.1} parent=103 // pred_check
          %p691 = pneg %p187
        $region114: #{tpu_custom_call.1} parent=103 // pred_check_branch
          %693 = sbr.rel (%p691) target = $region116
        $region115: #{tpu_custom_call.1} parent=103 // pred_region
          %694 = dma.done [#allocation7], 16
        $region116: #{tpu_custom_call.1} parent=103 // pred_fallthru
          _
        // Predicated region
        $region117: #{tpu_custom_call.1} parent=103 // pred_check
          %p695 = pneg %p229
        $region118: #{tpu_custom_call.1} parent=103 // pred_check_branch
          %697 = sbr.rel (%p695) target = $region120
        $region119: #{tpu_custom_call.1} parent=103 // pred_region
          %698 = dma.done [#allocation10], 1024
        $region120: #{tpu_custom_call.1} parent=103 // pred_fallthru
          _
        // Predicated region
        $region121: #{tpu_custom_call.1} parent=103 // pred_check
          %p699 = pneg %p250
        $region122: #{tpu_custom_call.1} parent=103 // pred_check_branch
          %701 = sbr.rel (%p699) target = $region124
        $region123: #{tpu_custom_call.1} parent=103 // pred_region
          %702 = dma.done [#allocation10], 16
        $region124: #{tpu_custom_call.1} parent=103 // pred_fallthru
          _
        // Predicated region
        $region125: #{tpu_custom_call.1} parent=103 // pred_check
          %p703 = pneg %p271
        $region126: #{tpu_custom_call.1} parent=103 // pred_check_branch
          %705 = sbr.rel (%p703) target = $region128
        $region127: #{tpu_custom_call.1} parent=103 // pred_region
          %706 = dma.done [#allocation13], 1024
        $region128: #{tpu_custom_call.1} parent=103 // pred_fallthru
          _
        // Predicated region
        $region129: #{tpu_custom_call.1} parent=103 // pred_check
          %p707 = pneg %p292
        $region130: #{tpu_custom_call.1} parent=103 // pred_check_branch
          %709 = sbr.rel (%p707) target = $region132
        $region131: #{tpu_custom_call.1} parent=103 // pred_region
          %710 = dma.done [#allocation13], 16
        $region132: #{tpu_custom_call.1} parent=103 // pred_fallthru
          _
        // Predicated region
        $region133: #{tpu_custom_call.1} parent=103 // pred_check
          %p711 = pneg %p376
        $region134: #{tpu_custom_call.1} parent=103 // pred_check_branch
          %713 = sbr.rel (%p711) target = $region136
        $region135: #{tpu_custom_call.1} parent=103 // pred_region
          %714 = dma.done [#allocation16], 1024
        $region136: #{tpu_custom_call.1} parent=103 // pred_fallthru
          _
        // Predicated region
        $region137: #{tpu_custom_call.1} parent=103 // pred_check
          %p715 = pneg %p418
        $region138: #{tpu_custom_call.1} parent=103 // pred_check_branch
          %717 = sbr.rel (%p715) target = $region140
        $region139: #{tpu_custom_call.1} parent=103 // pred_region
          %718 = dma.done [#allocation16], 1024
        $region140: #{tpu_custom_call.1} parent=103 // pred_fallthru
          _
        %p719 = scmp.lt.s32.totalorder %s40, 1
        %s720 = scalar_select %p719, %s40, 1
        %s721 = smul.addr %s720, 2
        %s722 = smul.addr %s721, 8
        %s723 = scalar_lea.vmem %s0, %s722
        %p724 = pneg %p61
        %p725 = pneg %p58
        %p726 = pneg %p82
        %p727 = pneg %p79
        %p728 = pneg %p103
        %p729 = pneg %p100
        %p730 = pneg %p124
        %p731 = pneg %p121
        %p732 = pneg %p145
        %p733 = pneg %p142
        %p734 = pneg %p166
        %p735 = pneg %p163
        %p736 = pneg %p187
        %p737 = pneg %p184
        %p738 = pneg %p208
        %p739 = pneg %p205
        %p740 = pneg %p229
        %p741 = pneg %p226
        %p742 = pneg %p250
        %p743 = pneg %p247
        %p744 = pneg %p271
        %p745 = pneg %p268
        %p746 = pneg %p292
        %p747 = pneg %p289
        %p748 = pneg %p313
        %p749 = pneg %p310
        %p750 = pneg %p334
        %p751 = pneg %p331
        %p752 = pneg %p355
        %p753 = pneg %p352
        %p754 = pneg %p376
        %p755 = pneg %p373
        %p756 = pneg %p397
        %p757 = pneg %p394
        %p758 = pneg %p418
        %p759 = pneg %p415
        %p760 = pneg %p439
        %p761 = pneg %p436
        %p762 = pneg %p460
        %p763 = pneg %p457
        %p764 = pneg %p481
        %p765 = pneg %p478
        %p766 = pneg %p507
        %p767 = pneg %p504
        %s768 = sand.u32 %s494, 1
        %s769 = scalar_lea.sflag [#allocation5], %s768
        %s770 = sand.u32 %s494, 1
        %s771 = scalar_lea.vmem [#allocation18], %s770
        %p772 = scmp.lt.s32.totalorder %s40, 1
        %s773 = scalar_select %p772, %s40, 1
        %s774 = smul.addr %s773, 2
        %s775 = smul.addr %s774, 8
        %s776 = scalar_lea.vmem %s0, %s775
        %v777 = vld [vmem:[%s776] sm:$0xff]
        %v778 = vld [vmem:[%s776 + $0x8] sm:$0xff]
        %v779 = vld [vmem:[#allocation3] sm:$0xff]
        %v780 = vld [vmem:[%s2] sm:$0x1]
        %v782 = vlaneseq
        %v783 = vshrl.u32 %v782, 7
        %v784 = vsub.s32 0, %v783
        %v785 = vrot.slane %v780, %v784
        %vm787 = vcmask 64512
        %v789 = vsel %vm787, %v777, 0
        %v792 = vsel %vm787, %v778, 0
        %794 = vmatprep.subr.mxu0 0.0
        %795 = vmatpush1.msra.mxu0 0.0
        %796 = vmatprep.subr.mxu0 0.0
        %797 = vmatpush1.msra.mxu0 0.0
        %798 = vmatprep.subr.mxu0 0.0
        %799 = vmatpush1.msra.mxu0 0.0
        %800 = vmatprep.subr.mxu0 0.0
        %801 = vmatpush1.msra.mxu0 0.0
        %802 = vmatprep.subr.mxu0 0.0
        %803 = vmatpush1.msra.mxu0 0.0
        %804 = vmatprep.subr.mxu0 0.0
        %805 = vmatpush1.msra.mxu0 0.0
        %806 = vmatprep.subr.mxu0 0.0
        %807 = vmatpush1.msra.mxu0 0.0
        %808 = vmatprep.subr.mxu0 0.0
        %809 = vmatpush1.msra.mxu0 0.0
        %810 = vmatprep.subr.mxu0 0.0
        %811 = vmatpush1.msra.mxu0 0.0
        %812 = vmatprep.subr.mxu0 0.0
        %813 = vmatpush1.msra.mxu0 0.0
        %814 = vmatprep.subr.mxu0 0.0
        %815 = vmatpush1.msra.mxu0 0.0
        %816 = vmatprep.subr.mxu0 0.0
        %817 = vmatpush1.msra.mxu0 0.0
        %818 = vmatprep.subr.mxu0 0.0
        %819 = vmatpush1.msra.mxu0 0.0
        %820 = vmatprep.subr.mxu0 0.0
        %821 = vmatpush1.msra.mxu0 0.0
        %822 = vmatprep.subr.mxu0 0.0
        %823 = vmatpush1.msra.mxu0 0.0
        %824 = vmatprep.subr.mxu0 0.0
        %825 = vmatpush1.msra.mxu0 %v779
        %826 = vmatprep.subr.mxu0 0.0
        %827 = vmatpush2.msra.mxu0 0.0
        %828 = vmatprep.subr.mxu0 0.0
        %829 = vmatpush2.msra.mxu0 0.0
        %830 = vmatprep.subr.mxu0 0.0
        %831 = vmatpush2.msra.mxu0 0.0
        %832 = vmatprep.subr.mxu0 0.0
        %833 = vmatpush2.msra.mxu0 0.0
        %834 = vmatprep.subr.mxu0 0.0
        %835 = vmatpush2.msra.mxu0 0.0
        %836 = vmatprep.subr.mxu0 0.0
        %837 = vmatpush2.msra.mxu0 0.0
        %838 = vmatprep.subr.mxu0 0.0
        %839 = vmatpush2.msra.mxu0 0.0
        %840 = vmatprep.subr.mxu0 0.0
        %841 = vmatpush2.msra.mxu0 0.0
        %842 = vmatprep.subr.mxu0 0.0
        %843 = vmatpush2.msra.mxu0 0.0
        %844 = vmatprep.subr.mxu0 0.0
        %845 = vmatpush2.msra.mxu0 0.0
        %846 = vmatprep.subr.mxu0 0.0
        %847 = vmatpush2.msra.mxu0 0.0
        %848 = vmatprep.subr.mxu0 0.0
        %849 = vmatpush2.msra.mxu0 0.0
        %850 = vmatprep.subr.mxu0 0.0
        %851 = vmatpush2.msra.mxu0 0.0
        %852 = vmatprep.subr.mxu0 0.0
        %853 = vmatpush2.msra.mxu0 0.0
        %854 = vmatprep.subr.mxu0 0.0
        %855 = vmatpush2.msra.mxu0 0.0
        %856 = vmatprep.subr.mxu0 0.0
        %857 = vmatpush2.msra.mxu0 0.0
        %858 = vmatprep.mubr.f32.mxu0 0.0
        %859 = vmatmul.mubr.f32.gmra.mxu0 %v789
        %v860 = vpop.f32.mrf.mxu0
        %v861 = vadd.f32 %v785, %v860
        %v862 = vpop.f32.mrf.mxu0
        %863 = vmatprep.mubr.f32.mxu0 0.0
        %864 = vmatmul.mubr.f32.gmra.mxu0 %v792
        %v865 = vpop.f32.mrf.mxu0
        %v866 = vadd.f32 %v785, %v865
        %v867 = vpop.f32.mrf.mxu0
        %868 = vdwg.mxu0
        %v869 = vmax.f32 %v861, 0.0
        %v870 = vmax.f32 %v866, 0.0
        %vm871 = vcmask 523264
        %872 = vst.msk [vmem:[#allocation2] sm:$0xff] %vm871, %v869
        %873 = vst.msk [vmem:[#allocation2 + $0x8] sm:$0xff] %vm871, %v870
        %v874 = vld [vmem:[#allocation6] sm:$0xff]
        %v875 = vld [vmem:[#allocation6 + $0x8] sm:$0xff]
        %v876 = vld [vmem:[#allocation6 + $0x10] sm:$0xff]
        %v877 = vld [vmem:[#allocation6 + $0x18] sm:$0xff]
        %v878 = vld [vmem:[#allocation6 + $0x20] sm:$0xff]
        %v879 = vld [vmem:[#allocation6 + $0x28] sm:$0xff]
        %v880 = vld [vmem:[#allocation6 + $0x30] sm:$0xff]
        %v881 = vld [vmem:[#allocation6 + $0x38] sm:$0xff]
        %v882 = vld [vmem:[%s4] sm:$0x1]
        %v884 = vlaneseq
        %v885 = vshrl.u32 %v884, 7
        %v886 = vsub.s32 0, %v885
        %v887 = vrot.slane %v882, %v886
        %v890 = vsel %vm871, %v869, 0
        %v893 = vsel %vm871, %v870, 0
        %895 = vmatprep.subr.mxu0 0.0
        %896 = vmatpush1.msra.mxu0 0.0
        %897 = vmatprep.subr.mxu0 0.0
        %898 = vmatpush1.msra.mxu0 0.0
        %899 = vmatprep.subr.mxu0 0.0
        %900 = vmatpush1.msra.mxu0 0.0
        %901 = vmatprep.subr.mxu0 0.0
        %902 = vmatpush1.msra.mxu0 0.0
        %903 = vmatprep.subr.mxu0 0.0
        %904 = vmatpush1.msra.mxu0 0.0
        %905 = vmatprep.subr.mxu0 0.0
        %906 = vmatpush1.msra.mxu0 0.0
        %907 = vmatprep.subr.mxu0 0.0
        %908 = vmatpush1.msra.mxu0 0.0
        %909 = vmatprep.subr.mxu0 0.0
        %910 = vmatpush1.msra.mxu0 0.0
        %911 = vmatprep.subr.mxu0 0.0
        %912 = vmatpush1.msra.mxu0 %v881
        %913 = vmatprep.subr.mxu0 0.0
        %914 = vmatpush1.msra.mxu0 %v880
        %915 = vmatprep.subr.mxu0 0.0
        %916 = vmatpush1.msra.mxu0 %v879
        %917 = vmatprep.subr.mxu0 0.0
        %918 = vmatpush1.msra.mxu0 %v878
        %919 = vmatprep.subr.mxu0 0.0
        %920 = vmatpush1.msra.mxu0 %v877
        %921 = vmatprep.subr.mxu0 0.0
        %922 = vmatpush1.msra.mxu0 %v876
        %923 = vmatprep.subr.mxu0 0.0
        %924 = vmatpush1.msra.mxu0 %v875
        %925 = vmatprep.subr.mxu0 0.0
        %926 = vmatpush1.msra.mxu0 %v874
        %927 = vmatprep.subr.mxu0 0.0
        %928 = vmatpush2.msra.mxu0 0.0
        %929 = vmatprep.subr.mxu0 0.0
        %930 = vmatpush2.msra.mxu0 0.0
        %931 = vmatprep.subr.mxu0 0.0
        %932 = vmatpush2.msra.mxu0 0.0
        %933 = vmatprep.subr.mxu0 0.0
        %934 = vmatpush2.msra.mxu0 0.0
        %935 = vmatprep.subr.mxu0 0.0
        %936 = vmatpush2.msra.mxu0 0.0
        %937 = vmatprep.subr.mxu0 0.0
        %938 = vmatpush2.msra.mxu0 0.0
        %939 = vmatprep.subr.mxu0 0.0
        %940 = vmatpush2.msra.mxu0 0.0
        %941 = vmatprep.subr.mxu0 0.0
        %942 = vmatpush2.msra.mxu0 0.0
        %943 = vmatprep.subr.mxu0 0.0
        %944 = vmatpush2.msra.mxu0 0.0
        %945 = vmatprep.subr.mxu0 0.0
        %946 = vmatpush2.msra.mxu0 0.0
        %947 = vmatprep.subr.mxu0 0.0
        %948 = vmatpush2.msra.mxu0 0.0
        %949 = vmatprep.subr.mxu0 0.0
        %950 = vmatpush2.msra.mxu0 0.0
        %951 = vmatprep.subr.mxu0 0.0
        %952 = vmatpush2.msra.mxu0 0.0
        %953 = vmatprep.subr.mxu0 0.0
        %954 = vmatpush2.msra.mxu0 0.0
        %955 = vmatprep.subr.mxu0 0.0
        %956 = vmatpush2.msra.mxu0 0.0
        %957 = vmatprep.subr.mxu0 0.0
        %958 = vmatpush2.msra.mxu0 0.0
        %959 = vmatprep.mubr.f32.mxu0 0.0
        %960 = vmatmul.mubr.f32.gmra.mxu0 %v890
        %v961 = vpop.f32.mrf.mxu0
        %v962 = vadd.f32 %v887, %v961
        %v963 = vpop.f32.mrf.mxu0
        %964 = vmatprep.mubr.f32.mxu0 0.0
        %965 = vmatmul.mubr.f32.gmra.mxu0 %v893
        %v966 = vpop.f32.mrf.mxu0
        %v967 = vadd.f32 %v887, %v966
        %v968 = vpop.f32.mrf.mxu0
        %969 = vdwg.mxu0
        %v970 = vmax.f32 %v962, 0.0
        %v971 = vmax.f32 %v967, 0.0
        %v972 = vld [vmem:[%s5] sm:$0xff]
        %v973 = vld [vmem:[%s5 + $0x8] sm:$0xff]
        %v974 = vld [vmem:[%s5 + $0x10] sm:$0xff]
        %v975 = vld [vmem:[%s5 + $0x18] sm:$0xff]
        %v976 = vld [vmem:[%s5 + $0x20] sm:$0xff]
        %v977 = vld [vmem:[%s5 + $0x28] sm:$0xff]
        %v978 = vld [vmem:[%s5 + $0x30] sm:$0xff]
        %v979 = vld [vmem:[%s5 + $0x38] sm:$0xff]
        %v980 = vld [vmem:[%s5 + $0x40] sm:$0xff]
        %v981 = vld [vmem:[%s5 + $0x48] sm:$0xff]
        %v982 = vld [vmem:[%s5 + $0x50] sm:$0xff]
        %v983 = vld [vmem:[%s5 + $0x58] sm:$0xff]
        %v984 = vld [vmem:[%s5 + $0x60] sm:$0xff]
        %v985 = vld [vmem:[%s5 + $0x68] sm:$0xff]
        %v986 = vld [vmem:[%s5 + $0x70] sm:$0xff]
        %v987 = vld [vmem:[%s5 + $0x78] sm:$0xff]
        %988 = vmatprep.subr.mxu0 0.0
        %989 = vmatpush1.msra.mxu0 %v987
        %990 = vmatprep.subr.mxu0 0.0
        %991 = vmatpush1.msra.mxu0 %v986
        %992 = vmatprep.subr.mxu0 0.0
        %993 = vmatpush1.msra.mxu0 %v985
        %994 = vmatprep.subr.mxu0 0.0
        %995 = vmatpush1.msra.mxu0 %v984
        %996 = vmatprep.subr.mxu0 0.0
        %997 = vmatpush1.msra.mxu0 %v983
        %998 = vmatprep.subr.mxu0 0.0
        %999 = vmatpush1.msra.mxu0 %v982
        %1000 = vmatprep.subr.mxu0 0.0
        %1001 = vmatpush1.msra.mxu0 %v981
        %1002 = vmatprep.subr.mxu0 0.0
        %1003 = vmatpush1.msra.mxu0 %v980
        %1004 = vmatprep.subr.mxu0 0.0
        %1005 = vmatpush1.msra.mxu0 %v979
        %1006 = vmatprep.subr.mxu0 0.0
        %1007 = vmatpush1.msra.mxu0 %v978
        %1008 = vmatprep.subr.mxu0 0.0
        %1009 = vmatpush1.msra.mxu0 %v977
        %1010 = vmatprep.subr.mxu0 0.0
        %1011 = vmatpush1.msra.mxu0 %v976
        %1012 = vmatprep.subr.mxu0 0.0
        %1013 = vmatpush1.msra.mxu0 %v975
        %1014 = vmatprep.subr.mxu0 0.0
        %1015 = vmatpush1.msra.mxu0 %v974
        %1016 = vmatprep.subr.mxu0 0.0
        %1017 = vmatpush1.msra.mxu0 %v973
        %1018 = vmatprep.subr.mxu0 0.0
        %1019 = vmatpush1.msra.mxu0 %v972
        %1020 = vmatprep.subr.mxu0 0.0
        %1021 = vmatpush2.msra.mxu0 0.0
        %1022 = vmatprep.subr.mxu0 0.0
        %1023 = vmatpush2.msra.mxu0 0.0
        %1024 = vmatprep.subr.mxu0 0.0
        %1025 = vmatpush2.msra.mxu0 0.0
        %1026 = vmatprep.subr.mxu0 0.0
        %1027 = vmatpush2.msra.mxu0 0.0
        %1028 = vmatprep.subr.mxu0 0.0
        %1029 = vmatpush2.msra.mxu0 0.0
        %1030 = vmatprep.subr.mxu0 0.0
        %1031 = vmatpush2.msra.mxu0 0.0
        %1032 = vmatprep.subr.mxu0 0.0
        %1033 = vmatpush2.msra.mxu0 0.0
        %1034 = vmatprep.subr.mxu0 0.0
        %1035 = vmatpush2.msra.mxu0 0.0
        %1036 = vmatprep.subr.mxu0 0.0
        %1037 = vmatpush2.msra.mxu0 0.0
        %1038 = vmatprep.subr.mxu0 0.0
        %1039 = vmatpush2.msra.mxu0 0.0
        %1040 = vmatprep.subr.mxu0 0.0
        %1041 = vmatpush2.msra.mxu0 0.0
        %1042 = vmatprep.subr.mxu0 0.0
        %1043 = vmatpush2.msra.mxu0 0.0
        %1044 = vmatprep.subr.mxu0 0.0
        %1045 = vmatpush2.msra.mxu0 0.0
        %1046 = vmatprep.subr.mxu0 0.0
        %1047 = vmatpush2.msra.mxu0 0.0
        %1048 = vmatprep.subr.mxu0 0.0
        %1049 = vmatpush2.msra.mxu0 0.0
        %1050 = vmatprep.subr.mxu0 0.0
        %1051 = vmatpush2.msra.mxu0 0.0
        %1052 = vmatprep.mubr.f32.mxu0 0.0
        %1053 = vmatmul.mubr.f32.gmra.mxu0 %v970
        %v1054 = vpop.f32.mrf.mxu0
        %v1055 = vadd.f32 0.0, %v1054
        %v1056 = vpop.f32.mrf.mxu0
        %1057 = vmatprep.mubr.f32.mxu0 0.0
        %1058 = vmatmul.mubr.f32.gmra.mxu0 %v971
        %v1059 = vpop.f32.mrf.mxu0
        %v1060 = vadd.f32 0.0, %v1059
        %v1061 = vpop.f32.mrf.mxu0
        %1062 = vdwg.mxu0
        %v1063 = vmax.f32 %v1055, %v1060
        %v1064 = vrot.slane %v1063, 4
        %v1065 = vmax.f32 %v1063, %v1064
        %v1066 = vrot.slane %v1065, 2
        %v1067 = vmax.f32 %v1065, %v1066
        %v1068 = vrot.slane %v1067, 1
        %v1069 = vmax.f32 %v1067, %v1068
        %v1070 = vld [vmem:[#allocation8] sm:$0x1]
        %v1071 = vadd.f32 %v1069, %v1070
        %v1072 = vld [vmem:[%s7] sm:$0xff]
        %v1073 = vld [vmem:[%s7 + $0x8] sm:$0xff]
        %v1074 = vld [vmem:[%s7 + $0x10] sm:$0xff]
        %v1075 = vld [vmem:[%s7 + $0x18] sm:$0xff]
        %v1076 = vld [vmem:[%s7 + $0x20] sm:$0xff]
        %v1077 = vld [vmem:[%s7 + $0x28] sm:$0xff]
        %v1078 = vld [vmem:[%s7 + $0x30] sm:$0xff]
        %v1079 = vld [vmem:[%s7 + $0x38] sm:$0xff]
        %v1080 = vld [vmem:[%s7 + $0x40] sm:$0xff]
        %v1081 = vld [vmem:[%s7 + $0x48] sm:$0xff]
        %v1082 = vld [vmem:[%s7 + $0x50] sm:$0xff]
        %v1083 = vld [vmem:[%s7 + $0x58] sm:$0xff]
        %v1084 = vld [vmem:[%s7 + $0x60] sm:$0xff]
        %v1085 = vld [vmem:[%s7 + $0x68] sm:$0xff]
        %v1086 = vld [vmem:[%s7 + $0x70] sm:$0xff]
        %v1087 = vld [vmem:[%s7 + $0x78] sm:$0xff]
        %v1088 = vld [vmem:[#allocation11] sm:$0x1]
        %1089 = vmatprep.subr.mxu0 0.0
        %1090 = vmatpush1.msra.mxu0 %v1087
        %1091 = vmatprep.subr.mxu0 0.0
        %1092 = vmatpush1.msra.mxu0 %v1086
        %1093 = vmatprep.subr.mxu0 0.0
        %1094 = vmatpush1.msra.mxu0 %v1085
        %1095 = vmatprep.subr.mxu0 0.0
        %1096 = vmatpush1.msra.mxu0 %v1084
        %1097 = vmatprep.subr.mxu0 0.0
        %1098 = vmatpush1.msra.mxu0 %v1083
        %1099 = vmatprep.subr.mxu0 0.0
        %1100 = vmatpush1.msra.mxu0 %v1082
        %1101 = vmatprep.subr.mxu0 0.0
        %1102 = vmatpush1.msra.mxu0 %v1081
        %1103 = vmatprep.subr.mxu0 0.0
        %1104 = vmatpush1.msra.mxu0 %v1080
        %1105 = vmatprep.subr.mxu0 0.0
        %1106 = vmatpush1.msra.mxu0 %v1079
        %1107 = vmatprep.subr.mxu0 0.0
        %1108 = vmatpush1.msra.mxu0 %v1078
        %1109 = vmatprep.subr.mxu0 0.0
        %1110 = vmatpush1.msra.mxu0 %v1077
        %1111 = vmatprep.subr.mxu0 0.0
        %1112 = vmatpush1.msra.mxu0 %v1076
        %1113 = vmatprep.subr.mxu0 0.0
        %1114 = vmatpush1.msra.mxu0 %v1075
        %1115 = vmatprep.subr.mxu0 0.0
        %1116 = vmatpush1.msra.mxu0 %v1074
        %1117 = vmatprep.subr.mxu0 0.0
        %1118 = vmatpush1.msra.mxu0 %v1073
        %1119 = vmatprep.subr.mxu0 0.0
        %1120 = vmatpush1.msra.mxu0 %v1072
        %1121 = vmatprep.subr.mxu0 0.0
        %1122 = vmatpush2.msra.mxu0 0.0
        %1123 = vmatprep.subr.mxu0 0.0
        %1124 = vmatpush2.msra.mxu0 0.0
        %1125 = vmatprep.subr.mxu0 0.0
        %1126 = vmatpush2.msra.mxu0 0.0
        %1127 = vmatprep.subr.mxu0 0.0
        %1128 = vmatpush2.msra.mxu0 0.0
        %1129 = vmatprep.subr.mxu0 0.0
        %1130 = vmatpush2.msra.mxu0 0.0
        %1131 = vmatprep.subr.mxu0 0.0
        %1132 = vmatpush2.msra.mxu0 0.0
        %1133 = vmatprep.subr.mxu0 0.0
        %1134 = vmatpush2.msra.mxu0 0.0
        %1135 = vmatprep.subr.mxu0 0.0
        %1136 = vmatpush2.msra.mxu0 0.0
        %1137 = vmatprep.subr.mxu0 0.0
        %1138 = vmatpush2.msra.mxu0 0.0
        %1139 = vmatprep.subr.mxu0 0.0
        %1140 = vmatpush2.msra.mxu0 0.0
        %1141 = vmatprep.subr.mxu0 0.0
        %1142 = vmatpush2.msra.mxu0 0.0
        %1143 = vmatprep.subr.mxu0 0.0
        %1144 = vmatpush2.msra.mxu0 0.0
        %1145 = vmatprep.subr.mxu0 0.0
        %1146 = vmatpush2.msra.mxu0 0.0
        %1147 = vmatprep.subr.mxu0 0.0
        %1148 = vmatpush2.msra.mxu0 0.0
        %1149 = vmatprep.subr.mxu0 0.0
        %1150 = vmatpush2.msra.mxu0 0.0
        %1151 = vmatprep.subr.mxu0 0.0
        %1152 = vmatpush2.msra.mxu0 0.0
        %1153 = vmatprep.mubr.f32.mxu0 0.0
        %1154 = vmatmul.mubr.f32.gmra.mxu0 %v1071
        %v1155 = vpop.f32.mrf.mxu0
        %v1156 = vadd.f32 %v1088, %v1155
        %v1157 = vpop.f32.mrf.mxu0
        %1158 = vdwg.mxu0
        %v1159 = vld [vmem:[#allocation2] sm:$0xff]
        %v1160 = vld [vmem:[#allocation2 + $0x8] sm:$0xff]
        %v1161 = vld [vmem:[#allocation9] sm:$0xff]
        %v1162 = vld [vmem:[#allocation9 + $0x8] sm:$0xff]
        %v1163 = vld [vmem:[#allocation9 + $0x10] sm:$0xff]
        %v1164 = vld [vmem:[#allocation9 + $0x18] sm:$0xff]
        %v1165 = vld [vmem:[#allocation9 + $0x20] sm:$0xff]
        %v1166 = vld [vmem:[#allocation9 + $0x28] sm:$0xff]
        %v1167 = vld [vmem:[#allocation9 + $0x30] sm:$0xff]
        %v1168 = vld [vmem:[#allocation9 + $0x38] sm:$0xff]
        %v1169 = vlaneseq
        %v1170 = vshrl.u32 %v1169, 7
        %v1171 = vsub.s32 0, %v1170
        %v1172 = vrot.slane %v1156, %v1171
        %v1174 = vsel %vm871, %v1159, 0
        %v1177 = vsel %vm871, %v1160, 0
        %1179 = vmatprep.subr.mxu0 0.0
        %1180 = vmatpush1.msra.mxu0 0.0
        %1181 = vmatprep.subr.mxu0 0.0
        %1182 = vmatpush1.msra.mxu0 0.0
        %1183 = vmatprep.subr.mxu0 0.0
        %1184 = vmatpush1.msra.mxu0 0.0
        %1185 = vmatprep.subr.mxu0 0.0
        %1186 = vmatpush1.msra.mxu0 0.0
        %1187 = vmatprep.subr.mxu0 0.0
        %1188 = vmatpush1.msra.mxu0 0.0
        %1189 = vmatprep.subr.mxu0 0.0
        %1190 = vmatpush1.msra.mxu0 0.0
        %1191 = vmatprep.subr.mxu0 0.0
        %1192 = vmatpush1.msra.mxu0 0.0
        %1193 = vmatprep.subr.mxu0 0.0
        %1194 = vmatpush1.msra.mxu0 0.0
        %1195 = vmatprep.subr.mxu0 0.0
        %1196 = vmatpush1.msra.mxu0 %v1168
        %1197 = vmatprep.subr.mxu0 0.0
        %1198 = vmatpush1.msra.mxu0 %v1167
        %1199 = vmatprep.subr.mxu0 0.0
        %1200 = vmatpush1.msra.mxu0 %v1166
        %1201 = vmatprep.subr.mxu0 0.0
        %1202 = vmatpush1.msra.mxu0 %v1165
        %1203 = vmatprep.subr.mxu0 0.0
        %1204 = vmatpush1.msra.mxu0 %v1164
        %1205 = vmatprep.subr.mxu0 0.0
        %1206 = vmatpush1.msra.mxu0 %v1163
        %1207 = vmatprep.subr.mxu0 0.0
        %1208 = vmatpush1.msra.mxu0 %v1162
        %1209 = vmatprep.subr.mxu0 0.0
        %1210 = vmatpush1.msra.mxu0 %v1161
        %1211 = vmatprep.subr.mxu0 0.0
        %1212 = vmatpush2.msra.mxu0 0.0
        %1213 = vmatprep.subr.mxu0 0.0
        %1214 = vmatpush2.msra.mxu0 0.0
        %1215 = vmatprep.subr.mxu0 0.0
        %1216 = vmatpush2.msra.mxu0 0.0
        %1217 = vmatprep.subr.mxu0 0.0
        %1218 = vmatpush2.msra.mxu0 0.0
        %1219 = vmatprep.subr.mxu0 0.0
        %1220 = vmatpush2.msra.mxu0 0.0
        %1221 = vmatprep.subr.mxu0 0.0
        %1222 = vmatpush2.msra.mxu0 0.0
        %1223 = vmatprep.subr.mxu0 0.0
        %1224 = vmatpush2.msra.mxu0 0.0
        %1225 = vmatprep.subr.mxu0 0.0
        %1226 = vmatpush2.msra.mxu0 0.0
        %1227 = vmatprep.subr.mxu0 0.0
        %1228 = vmatpush2.msra.mxu0 0.0
        %1229 = vmatprep.subr.mxu0 0.0
        %1230 = vmatpush2.msra.mxu0 0.0
        %1231 = vmatprep.subr.mxu0 0.0
        %1232 = vmatpush2.msra.mxu0 0.0
        %1233 = vmatprep.subr.mxu0 0.0
        %1234 = vmatpush2.msra.mxu0 0.0
        %1235 = vmatprep.subr.mxu0 0.0
        %1236 = vmatpush2.msra.mxu0 0.0
        %1237 = vmatprep.subr.mxu0 0.0
        %1238 = vmatpush2.msra.mxu0 0.0
        %1239 = vmatprep.subr.mxu0 0.0
        %1240 = vmatpush2.msra.mxu0 0.0
        %1241 = vmatprep.subr.mxu0 0.0
        %1242 = vmatpush2.msra.mxu0 0.0
        %1243 = vmatprep.mubr.f32.mxu0 0.0
        %1244 = vmatmul.mubr.f32.gmra.mxu0 %v1174
        %v1245 = vpop.f32.mrf.mxu0
        %v1246 = vadd.f32 %v1172, %v1245
        %v1247 = vpop.f32.mrf.mxu0
        %1248 = vmatprep.mubr.f32.mxu0 0.0
        %1249 = vmatmul.mubr.f32.gmra.mxu0 %v1177
        %v1250 = vpop.f32.mrf.mxu0
        %v1251 = vadd.f32 %v1172, %v1250
        %v1252 = vpop.f32.mrf.mxu0
        %1253 = vdwg.mxu0
        %v1254 = vmax.f32 %v1246, 0.0
        %v1255 = vmax.f32 %v1251, 0.0
        %1256 = vst.msk [vmem:[#allocation2] sm:$0xff] %vm871, %v1254
        %1257 = vst.msk [vmem:[#allocation2 + $0x8] sm:$0xff] %vm871, %v1255
        %v1258 = vld [vmem:[#allocation12] sm:$0xff]
        %v1259 = vld [vmem:[#allocation12 + $0x8] sm:$0xff]
        %v1260 = vld [vmem:[#allocation12 + $0x10] sm:$0xff]
        %v1261 = vld [vmem:[#allocation12 + $0x18] sm:$0xff]
        %v1262 = vld [vmem:[#allocation12 + $0x20] sm:$0xff]
        %v1263 = vld [vmem:[#allocation12 + $0x28] sm:$0xff]
        %v1264 = vld [vmem:[#allocation12 + $0x30] sm:$0xff]
        %v1265 = vld [vmem:[#allocation12 + $0x38] sm:$0xff]
        %v1266 = vld [vmem:[#allocation14] sm:$0x1]
        %v1268 = vlaneseq
        %v1269 = vshrl.u32 %v1268, 7
        %v1270 = vsub.s32 0, %v1269
        %v1271 = vrot.slane %v1266, %v1270
        %v1274 = vsel %vm871, %v1254, 0
        %v1277 = vsel %vm871, %v1255, 0
        %1279 = vmatprep.subr.mxu0 0.0
        %1280 = vmatpush1.msra.mxu0 0.0
        %1281 = vmatprep.subr.mxu0 0.0
        %1282 = vmatpush1.msra.mxu0 0.0
        %1283 = vmatprep.subr.mxu0 0.0
        %1284 = vmatpush1.msra.mxu0 0.0
        %1285 = vmatprep.subr.mxu0 0.0
        %1286 = vmatpush1.msra.mxu0 0.0
        %1287 = vmatprep.subr.mxu0 0.0
        %1288 = vmatpush1.msra.mxu0 0.0
        %1289 = vmatprep.subr.mxu0 0.0
        %1290 = vmatpush1.msra.mxu0 0.0
        %1291 = vmatprep.subr.mxu0 0.0
        %1292 = vmatpush1.msra.mxu0 0.0
        %1293 = vmatprep.subr.mxu0 0.0
        %1294 = vmatpush1.msra.mxu0 0.0
        %1295 = vmatprep.subr.mxu0 0.0
        %1296 = vmatpush1.msra.mxu0 %v1265
        %1297 = vmatprep.subr.mxu0 0.0
        %1298 = vmatpush1.msra.mxu0 %v1264
        %1299 = vmatprep.subr.mxu0 0.0
        %1300 = vmatpush1.msra.mxu0 %v1263
        %1301 = vmatprep.subr.mxu0 0.0
        %1302 = vmatpush1.msra.mxu0 %v1262
        %1303 = vmatprep.subr.mxu0 0.0
        %1304 = vmatpush1.msra.mxu0 %v1261
        %1305 = vmatprep.subr.mxu0 0.0
        %1306 = vmatpush1.msra.mxu0 %v1260
        %1307 = vmatprep.subr.mxu0 0.0
        %1308 = vmatpush1.msra.mxu0 %v1259
        %1309 = vmatprep.subr.mxu0 0.0
        %1310 = vmatpush1.msra.mxu0 %v1258
        %1311 = vmatprep.subr.mxu0 0.0
        %1312 = vmatpush2.msra.mxu0 0.0
        %1313 = vmatprep.subr.mxu0 0.0
        %1314 = vmatpush2.msra.mxu0 0.0
        %1315 = vmatprep.subr.mxu0 0.0
        %1316 = vmatpush2.msra.mxu0 0.0
        %1317 = vmatprep.subr.mxu0 0.0
        %1318 = vmatpush2.msra.mxu0 0.0
        %1319 = vmatprep.subr.mxu0 0.0
        %1320 = vmatpush2.msra.mxu0 0.0
        %1321 = vmatprep.subr.mxu0 0.0
        %1322 = vmatpush2.msra.mxu0 0.0
        %1323 = vmatprep.subr.mxu0 0.0
        %1324 = vmatpush2.msra.mxu0 0.0
        %1325 = vmatprep.subr.mxu0 0.0
        %1326 = vmatpush2.msra.mxu0 0.0
        %1327 = vmatprep.subr.mxu0 0.0
        %1328 = vmatpush2.msra.mxu0 0.0
        %1329 = vmatprep.subr.mxu0 0.0
        %1330 = vmatpush2.msra.mxu0 0.0
        %1331 = vmatprep.subr.mxu0 0.0
        %1332 = vmatpush2.msra.mxu0 0.0
        %1333 = vmatprep.subr.mxu0 0.0
        %1334 = vmatpush2.msra.mxu0 0.0
        %1335 = vmatprep.subr.mxu0 0.0
        %1336 = vmatpush2.msra.mxu0 0.0
        %1337 = vmatprep.subr.mxu0 0.0
        %1338 = vmatpush2.msra.mxu0 0.0
        %1339 = vmatprep.subr.mxu0 0.0
        %1340 = vmatpush2.msra.mxu0 0.0
        %1341 = vmatprep.subr.mxu0 0.0
        %1342 = vmatpush2.msra.mxu0 0.0
        %1343 = vmatprep.mubr.f32.mxu0 0.0
        %1344 = vmatmul.mubr.f32.gmra.mxu0 %v1274
        %v1345 = vpop.f32.mrf.mxu0
        %v1346 = vadd.f32 %v1271, %v1345
        %v1347 = vpop.f32.mrf.mxu0
        %1348 = vmatprep.mubr.f32.mxu0 0.0
        %1349 = vmatmul.mubr.f32.gmra.mxu0 %v1277
        %v1350 = vpop.f32.mrf.mxu0
        %v1351 = vadd.f32 %v1271, %v1350
        %v1352 = vpop.f32.mrf.mxu0
        %1353 = vdwg.mxu0
        %v1354 = vmax.f32 %v1346, 0.0
        %v1355 = vmax.f32 %v1351, 0.0
        %v1356 = vld [vmem:[%s12] sm:$0xff]
        %v1357 = vld [vmem:[%s12 + $0x8] sm:$0xff]
        %v1358 = vld [vmem:[%s12 + $0x10] sm:$0xff]
        %v1359 = vld [vmem:[%s12 + $0x18] sm:$0xff]
        %v1360 = vld [vmem:[%s12 + $0x20] sm:$0xff]
        %v1361 = vld [vmem:[%s12 + $0x28] sm:$0xff]
        %v1362 = vld [vmem:[%s12 + $0x30] sm:$0xff]
        %v1363 = vld [vmem:[%s12 + $0x38] sm:$0xff]
        %v1364 = vld [vmem:[%s12 + $0x40] sm:$0xff]
        %v1365 = vld [vmem:[%s12 + $0x48] sm:$0xff]
        %v1366 = vld [vmem:[%s12 + $0x50] sm:$0xff]
        %v1367 = vld [vmem:[%s12 + $0x58] sm:$0xff]
        %v1368 = vld [vmem:[%s12 + $0x60] sm:$0xff]
        %v1369 = vld [vmem:[%s12 + $0x68] sm:$0xff]
        %v1370 = vld [vmem:[%s12 + $0x70] sm:$0xff]
        %v1371 = vld [vmem:[%s12 + $0x78] sm:$0xff]
        %1372 = vmatprep.subr.mxu0 0.0
        %1373 = vmatpush1.msra.mxu0 %v1371
        %1374 = vmatprep.subr.mxu0 0.0
        %1375 = vmatpush1.msra.mxu0 %v1370
        %1376 = vmatprep.subr.mxu0 0.0
        %1377 = vmatpush1.msra.mxu0 %v1369
        %1378 = vmatprep.subr.mxu0 0.0
        %1379 = vmatpush1.msra.mxu0 %v1368
        %1380 = vmatprep.subr.mxu0 0.0
        %1381 = vmatpush1.msra.mxu0 %v1367
        %1382 = vmatprep.subr.mxu0 0.0
        %1383 = vmatpush1.msra.mxu0 %v1366
        %1384 = vmatprep.subr.mxu0 0.0
        %1385 = vmatpush1.msra.mxu0 %v1365
        %1386 = vmatprep.subr.mxu0 0.0
        %1387 = vmatpush1.msra.mxu0 %v1364
        %1388 = vmatprep.subr.mxu0 0.0
        %1389 = vmatpush1.msra.mxu0 %v1363
        %1390 = vmatprep.subr.mxu0 0.0
        %1391 = vmatpush1.msra.mxu0 %v1362
        %1392 = vmatprep.subr.mxu0 0.0
        %1393 = vmatpush1.msra.mxu0 %v1361
        %1394 = vmatprep.subr.mxu0 0.0
        %1395 = vmatpush1.msra.mxu0 %v1360
        %1396 = vmatprep.subr.mxu0 0.0
        %1397 = vmatpush1.msra.mxu0 %v1359
        %1398 = vmatprep.subr.mxu0 0.0
        %1399 = vmatpush1.msra.mxu0 %v1358
        %1400 = vmatprep.subr.mxu0 0.0
        %1401 = vmatpush1.msra.mxu0 %v1357
        %1402 = vmatprep.subr.mxu0 0.0
        %1403 = vmatpush1.msra.mxu0 %v1356
        %1404 = vmatprep.subr.mxu0 0.0
        %1405 = vmatpush2.msra.mxu0 0.0
        %1406 = vmatprep.subr.mxu0 0.0
        %1407 = vmatpush2.msra.mxu0 0.0
        %1408 = vmatprep.subr.mxu0 0.0
        %1409 = vmatpush2.msra.mxu0 0.0
        %1410 = vmatprep.subr.mxu0 0.0
        %1411 = vmatpush2.msra.mxu0 0.0
        %1412 = vmatprep.subr.mxu0 0.0
        %1413 = vmatpush2.msra.mxu0 0.0
        %1414 = vmatprep.subr.mxu0 0.0
        %1415 = vmatpush2.msra.mxu0 0.0
        %1416 = vmatprep.subr.mxu0 0.0
        %1417 = vmatpush2.msra.mxu0 0.0
        %1418 = vmatprep.subr.mxu0 0.0
        %1419 = vmatpush2.msra.mxu0 0.0
        %1420 = vmatprep.subr.mxu0 0.0
        %1421 = vmatpush2.msra.mxu0 0.0
        %1422 = vmatprep.subr.mxu0 0.0
        %1423 = vmatpush2.msra.mxu0 0.0
        %1424 = vmatprep.subr.mxu0 0.0
        %1425 = vmatpush2.msra.mxu0 0.0
        %1426 = vmatprep.subr.mxu0 0.0
        %1427 = vmatpush2.msra.mxu0 0.0
        %1428 = vmatprep.subr.mxu0 0.0
        %1429 = vmatpush2.msra.mxu0 0.0
        %1430 = vmatprep.subr.mxu0 0.0
        %1431 = vmatpush2.msra.mxu0 0.0
        %1432 = vmatprep.subr.mxu0 0.0
        %1433 = vmatpush2.msra.mxu0 0.0
        %1434 = vmatprep.subr.mxu0 0.0
        %1435 = vmatpush2.msra.mxu0 0.0
        %1436 = vmatprep.mubr.f32.mxu0 0.0
        %1437 = vmatmul.mubr.f32.gmra.mxu0 %v1354
        %v1438 = vpop.f32.mrf.mxu0
        %v1439 = vadd.f32 0.0, %v1438
        %v1440 = vpop.f32.mrf.mxu0
        %1441 = vmatprep.mubr.f32.mxu0 0.0
        %1442 = vmatmul.mubr.f32.gmra.mxu0 %v1355
        %v1443 = vpop.f32.mrf.mxu0
        %v1444 = vadd.f32 0.0, %v1443
        %v1445 = vpop.f32.mrf.mxu0
        %1446 = vdwg.mxu0
        %v1447 = vmax.f32 %v1439, %v1444
        %v1448 = vrot.slane %v1447, 4
        %v1449 = vmax.f32 %v1447, %v1448
        %v1450 = vrot.slane %v1449, 2
        %v1451 = vmax.f32 %v1449, %v1450
        %v1452 = vrot.slane %v1451, 1
        %v1453 = vmax.f32 %v1451, %v1452
        %v1454 = vld [vmem:[%s13] sm:$0x1]
        %v1455 = vadd.f32 %v1453, %v1454
        %v1456 = vld [vmem:[%s14] sm:$0xff]
        %v1457 = vld [vmem:[%s14 + $0x8] sm:$0xff]
        %v1458 = vld [vmem:[%s14 + $0x10] sm:$0xff]
        %v1459 = vld [vmem:[%s14 + $0x18] sm:$0xff]
        %v1460 = vld [vmem:[%s14 + $0x20] sm:$0xff]
        %v1461 = vld [vmem:[%s14 + $0x28] sm:$0xff]
        %v1462 = vld [vmem:[%s14 + $0x30] sm:$0xff]
        %v1463 = vld [vmem:[%s14 + $0x38] sm:$0xff]
        %v1464 = vld [vmem:[%s14 + $0x40] sm:$0xff]
        %v1465 = vld [vmem:[%s14 + $0x48] sm:$0xff]
        %v1466 = vld [vmem:[%s14 + $0x50] sm:$0xff]
        %v1467 = vld [vmem:[%s14 + $0x58] sm:$0xff]
        %v1468 = vld [vmem:[%s14 + $0x60] sm:$0xff]
        %v1469 = vld [vmem:[%s14 + $0x68] sm:$0xff]
        %v1470 = vld [vmem:[%s14 + $0x70] sm:$0xff]
        %v1471 = vld [vmem:[%s14 + $0x78] sm:$0xff]
        %v1472 = vld [vmem:[%s16] sm:$0x1]
        %1473 = vmatprep.subr.mxu0 0.0
        %1474 = vmatpush1.msra.mxu0 %v1471
        %1475 = vmatprep.subr.mxu0 0.0
        %1476 = vmatpush1.msra.mxu0 %v1470
        %1477 = vmatprep.subr.mxu0 0.0
        %1478 = vmatpush1.msra.mxu0 %v1469
        %1479 = vmatprep.subr.mxu0 0.0
        %1480 = vmatpush1.msra.mxu0 %v1468
        %1481 = vmatprep.subr.mxu0 0.0
        %1482 = vmatpush1.msra.mxu0 %v1467
        %1483 = vmatprep.subr.mxu0 0.0
        %1484 = vmatpush1.msra.mxu0 %v1466
        %1485 = vmatprep.subr.mxu0 0.0
        %1486 = vmatpush1.msra.mxu0 %v1465
        %1487 = vmatprep.subr.mxu0 0.0
        %1488 = vmatpush1.msra.mxu0 %v1464
        %1489 = vmatprep.subr.mxu0 0.0
        %1490 = vmatpush1.msra.mxu0 %v1463
        %1491 = vmatprep.subr.mxu0 0.0
        %1492 = vmatpush1.msra.mxu0 %v1462
        %1493 = vmatprep.subr.mxu0 0.0
        %1494 = vmatpush1.msra.mxu0 %v1461
        %1495 = vmatprep.subr.mxu0 0.0
        %1496 = vmatpush1.msra.mxu0 %v1460
        %1497 = vmatprep.subr.mxu0 0.0
        %1498 = vmatpush1.msra.mxu0 %v1459
        %1499 = vmatprep.subr.mxu0 0.0
        %1500 = vmatpush1.msra.mxu0 %v1458
        %1501 = vmatprep.subr.mxu0 0.0
        %1502 = vmatpush1.msra.mxu0 %v1457
        %1503 = vmatprep.subr.mxu0 0.0
        %1504 = vmatpush1.msra.mxu0 %v1456
        %1505 = vmatprep.subr.mxu0 0.0
        %1506 = vmatpush2.msra.mxu0 0.0
        %1507 = vmatprep.subr.mxu0 0.0
        %1508 = vmatpush2.msra.mxu0 0.0
        %1509 = vmatprep.subr.mxu0 0.0
        %1510 = vmatpush2.msra.mxu0 0.0
        %1511 = vmatprep.subr.mxu0 0.0
        %1512 = vmatpush2.msra.mxu0 0.0
        %1513 = vmatprep.subr.mxu0 0.0
        %1514 = vmatpush2.msra.mxu0 0.0
        %1515 = vmatprep.subr.mxu0 0.0
        %1516 = vmatpush2.msra.mxu0 0.0
        %1517 = vmatprep.subr.mxu0 0.0
        %1518 = vmatpush2.msra.mxu0 0.0
        %1519 = vmatprep.subr.mxu0 0.0
        %1520 = vmatpush2.msra.mxu0 0.0
        %1521 = vmatprep.subr.mxu0 0.0
        %1522 = vmatpush2.msra.mxu0 0.0
        %1523 = vmatprep.subr.mxu0 0.0
        %1524 = vmatpush2.msra.mxu0 0.0
        %1525 = vmatprep.subr.mxu0 0.0
        %1526 = vmatpush2.msra.mxu0 0.0
        %1527 = vmatprep.subr.mxu0 0.0
        %1528 = vmatpush2.msra.mxu0 0.0
        %1529 = vmatprep.subr.mxu0 0.0
        %1530 = vmatpush2.msra.mxu0 0.0
        %1531 = vmatprep.subr.mxu0 0.0
        %1532 = vmatpush2.msra.mxu0 0.0
        %1533 = vmatprep.subr.mxu0 0.0
        %1534 = vmatpush2.msra.mxu0 0.0
        %1535 = vmatprep.subr.mxu0 0.0
        %1536 = vmatpush2.msra.mxu0 0.0
        %1537 = vmatprep.mubr.f32.mxu0 0.0
        %1538 = vmatmul.mubr.f32.gmra.mxu0 %v1455
        %v1539 = vpop.f32.mrf.mxu0
        %v1540 = vadd.f32 %v1472, %v1539
        %v1541 = vpop.f32.mrf.mxu0
        %1542 = vdwg.mxu0
        %v1543 = vld [vmem:[#allocation2] sm:$0xff]
        %v1544 = vld [vmem:[#allocation2 + $0x8] sm:$0xff]
        %v1545 = vld [vmem:[#allocation15] sm:$0xff]
        %v1546 = vld [vmem:[#allocation15 + $0x8] sm:$0xff]
        %v1547 = vld [vmem:[#allocation15 + $0x10] sm:$0xff]
        %v1548 = vld [vmem:[#allocation15 + $0x18] sm:$0xff]
        %v1549 = vld [vmem:[#allocation15 + $0x20] sm:$0xff]
        %v1550 = vld [vmem:[#allocation15 + $0x28] sm:$0xff]
        %v1551 = vld [vmem:[#allocation15 + $0x30] sm:$0xff]
        %v1552 = vld [vmem:[#allocation15 + $0x38] sm:$0xff]
        %v1553 = vlaneseq
        %v1554 = vshrl.u32 %v1553, 7
        %v1555 = vsub.s32 0, %v1554
        %v1556 = vrot.slane %v1540, %v1555
        %v1558 = vsel %vm871, %v1543, 0
        %v1561 = vsel %vm871, %v1544, 0
        %1563 = vmatprep.subr.mxu0 0.0
        %1564 = vmatpush1.msra.mxu0 0.0
        %1565 = vmatprep.subr.mxu0 0.0
        %1566 = vmatpush1.msra.mxu0 0.0
        %1567 = vmatprep.subr.mxu0 0.0
        %1568 = vmatpush1.msra.mxu0 0.0
        %1569 = vmatprep.subr.mxu0 0.0
        %1570 = vmatpush1.msra.mxu0 0.0
        %1571 = vmatprep.subr.mxu0 0.0
        %1572 = vmatpush1.msra.mxu0 0.0
        %1573 = vmatprep.subr.mxu0 0.0
        %1574 = vmatpush1.msra.mxu0 0.0
        %1575 = vmatprep.subr.mxu0 0.0
        %1576 = vmatpush1.msra.mxu0 0.0
        %1577 = vmatprep.subr.mxu0 0.0
        %1578 = vmatpush1.msra.mxu0 0.0
        %1579 = vmatprep.subr.mxu0 0.0
        %1580 = vmatpush1.msra.mxu0 %v1552
        %1581 = vmatprep.subr.mxu0 0.0
        %1582 = vmatpush1.msra.mxu0 %v1551
        %1583 = vmatprep.subr.mxu0 0.0
        %1584 = vmatpush1.msra.mxu0 %v1550
        %1585 = vmatprep.subr.mxu0 0.0
        %1586 = vmatpush1.msra.mxu0 %v1549
        %1587 = vmatprep.subr.mxu0 0.0
        %1588 = vmatpush1.msra.mxu0 %v1548
        %1589 = vmatprep.subr.mxu0 0.0
        %1590 = vmatpush1.msra.mxu0 %v1547
        %1591 = vmatprep.subr.mxu0 0.0
        %1592 = vmatpush1.msra.mxu0 %v1546
        %1593 = vmatprep.subr.mxu0 0.0
        %1594 = vmatpush1.msra.mxu0 %v1545
        %1595 = vmatprep.subr.mxu0 0.0
        %1596 = vmatpush2.msra.mxu0 0.0
        %1597 = vmatprep.subr.mxu0 0.0
        %1598 = vmatpush2.msra.mxu0 0.0
        %1599 = vmatprep.subr.mxu0 0.0
        %1600 = vmatpush2.msra.mxu0 0.0
        %1601 = vmatprep.subr.mxu0 0.0
        %1602 = vmatpush2.msra.mxu0 0.0
        %1603 = vmatprep.subr.mxu0 0.0
        %1604 = vmatpush2.msra.mxu0 0.0
        %1605 = vmatprep.subr.mxu0 0.0
        %1606 = vmatpush2.msra.mxu0 0.0
        %1607 = vmatprep.subr.mxu0 0.0
        %1608 = vmatpush2.msra.mxu0 0.0
        %1609 = vmatprep.subr.mxu0 0.0
        %1610 = vmatpush2.msra.mxu0 0.0
        %1611 = vmatprep.subr.mxu0 0.0
        %1612 = vmatpush2.msra.mxu0 0.0
        %1613 = vmatprep.subr.mxu0 0.0
        %1614 = vmatpush2.msra.mxu0 0.0
        %1615 = vmatprep.subr.mxu0 0.0
        %1616 = vmatpush2.msra.mxu0 0.0
        %1617 = vmatprep.subr.mxu0 0.0
        %1618 = vmatpush2.msra.mxu0 0.0
        %1619 = vmatprep.subr.mxu0 0.0
        %1620 = vmatpush2.msra.mxu0 0.0
        %1621 = vmatprep.subr.mxu0 0.0
        %1622 = vmatpush2.msra.mxu0 0.0
        %1623 = vmatprep.subr.mxu0 0.0
        %1624 = vmatpush2.msra.mxu0 0.0
        %1625 = vmatprep.subr.mxu0 0.0
        %1626 = vmatpush2.msra.mxu0 0.0
        %1627 = vmatprep.mubr.f32.mxu0 0.0
        %1628 = vmatmul.mubr.f32.gmra.mxu0 %v1558
        %v1629 = vpop.f32.mrf.mxu0
        %v1630 = vadd.f32 %v1556, %v1629
        %v1631 = vpop.f32.mrf.mxu0
        %1632 = vmatprep.mubr.f32.mxu0 0.0
        %1633 = vmatmul.mubr.f32.gmra.mxu0 %v1561
        %v1634 = vpop.f32.mrf.mxu0
        %v1635 = vadd.f32 %v1556, %v1634
        %v1636 = vpop.f32.mrf.mxu0
        %1637 = vdwg.mxu0
        %v1638 = vmax.f32 %v1630, 0.0
        %v1639 = vmax.f32 %v1635, 0.0
        %v1640 = vld [vmem:[#allocation17] sm:$0xff]
        %v1641 = vld [vmem:[#allocation17 + $0x8] sm:$0xff]
        %v1642 = vld [vmem:[#allocation17 + $0x10] sm:$0xff]
        %v1643 = vld [vmem:[#allocation17 + $0x18] sm:$0xff]
        %v1644 = vld [vmem:[#allocation17 + $0x20] sm:$0xff]
        %v1645 = vld [vmem:[#allocation17 + $0x28] sm:$0xff]
        %v1646 = vld [vmem:[#allocation17 + $0x30] sm:$0xff]
        %v1647 = vld [vmem:[#allocation17 + $0x38] sm:$0xff]
        %v1648 = vld [vmem:[%s18] sm:$0x1]
        %v1650 = vlaneseq
        %v1651 = vshrl.u32 %v1650, 7
        %v1652 = vsub.s32 0, %v1651
        %v1653 = vrot.slane %v1648, %v1652
        %v1656 = vsel %vm871, %v1638, 0
        %v1659 = vsel %vm871, %v1639, 0
        %1661 = vmatprep.subr.mxu0 0.0
        %1662 = vmatpush1.msra.mxu0 0.0
        %1663 = vmatprep.subr.mxu0 0.0
        %1664 = vmatpush1.msra.mxu0 0.0
        %1665 = vmatprep.subr.mxu0 0.0
        %1666 = vmatpush1.msra.mxu0 0.0
        %1667 = vmatprep.subr.mxu0 0.0
        %1668 = vmatpush1.msra.mxu0 0.0
        %1669 = vmatprep.subr.mxu0 0.0
        %1670 = vmatpush1.msra.mxu0 0.0
        %1671 = vmatprep.subr.mxu0 0.0
        %1672 = vmatpush1.msra.mxu0 0.0
        %1673 = vmatprep.subr.mxu0 0.0
        %1674 = vmatpush1.msra.mxu0 0.0
        %1675 = vmatprep.subr.mxu0 0.0
        %1676 = vmatpush1.msra.mxu0 0.0
        %1677 = vmatprep.subr.mxu0 0.0
        %1678 = vmatpush1.msra.mxu0 %v1647
        %1679 = vmatprep.subr.mxu0 0.0
        %1680 = vmatpush1.msra.mxu0 %v1646
        %1681 = vmatprep.subr.mxu0 0.0
        %1682 = vmatpush1.msra.mxu0 %v1645
        %1683 = vmatprep.subr.mxu0 0.0
        %1684 = vmatpush1.msra.mxu0 %v1644
        %1685 = vmatprep.subr.mxu0 0.0
        %1686 = vmatpush1.msra.mxu0 %v1643
        %1687 = vmatprep.subr.mxu0 0.0
        %1688 = vmatpush1.msra.mxu0 %v1642
        %1689 = vmatprep.subr.mxu0 0.0
        %1690 = vmatpush1.msra.mxu0 %v1641
        %1691 = vmatprep.subr.mxu0 0.0
        %1692 = vmatpush1.msra.mxu0 %v1640
        %1693 = vmatprep.subr.mxu0 0.0
        %1694 = vmatpush2.msra.mxu0 0.0
        %1695 = vmatprep.subr.mxu0 0.0
        %1696 = vmatpush2.msra.mxu0 0.0
        %1697 = vmatprep.subr.mxu0 0.0
        %1698 = vmatpush2.msra.mxu0 0.0
        %1699 = vmatprep.subr.mxu0 0.0
        %1700 = vmatpush2.msra.mxu0 0.0
        %1701 = vmatprep.subr.mxu0 0.0
        %1702 = vmatpush2.msra.mxu0 0.0
        %1703 = vmatprep.subr.mxu0 0.0
        %1704 = vmatpush2.msra.mxu0 0.0
        %1705 = vmatprep.subr.mxu0 0.0
        %1706 = vmatpush2.msra.mxu0 0.0
        %1707 = vmatprep.subr.mxu0 0.0
        %1708 = vmatpush2.msra.mxu0 0.0
        %1709 = vmatprep.subr.mxu0 0.0
        %1710 = vmatpush2.msra.mxu0 0.0
        %1711 = vmatprep.subr.mxu0 0.0
        %1712 = vmatpush2.msra.mxu0 0.0
        %1713 = vmatprep.subr.mxu0 0.0
        %1714 = vmatpush2.msra.mxu0 0.0
        %1715 = vmatprep.subr.mxu0 0.0
        %1716 = vmatpush2.msra.mxu0 0.0
        %1717 = vmatprep.subr.mxu0 0.0
        %1718 = vmatpush2.msra.mxu0 0.0
        %1719 = vmatprep.subr.mxu0 0.0
        %1720 = vmatpush2.msra.mxu0 0.0
        %1721 = vmatprep.subr.mxu0 0.0
        %1722 = vmatpush2.msra.mxu0 0.0
        %1723 = vmatprep.subr.mxu0 0.0
        %1724 = vmatpush2.msra.mxu0 0.0
        %1725 = vmatprep.mubr.f32.mxu0 0.0
        %1726 = vmatmul.mubr.f32.gmra.mxu0 %v1656
        %v1727 = vpop.f32.mrf.mxu0
        %v1728 = vadd.f32 %v1653, %v1727
        %v1729 = vpop.f32.mrf.mxu0
        %1730 = vmatprep.mubr.f32.mxu0 0.0
        %1731 = vmatmul.mubr.f32.gmra.mxu0 %v1659
        %v1732 = vpop.f32.mrf.mxu0
        %v1733 = vadd.f32 %v1653, %v1732
        %v1734 = vpop.f32.mrf.mxu0
        %1735 = vdwg.mxu0
        %v1736 = vmax.f32 %v1728, 0.0
        %v1737 = vmax.f32 %v1733, 0.0
        %v1738 = vld [vmem:[%s19] sm:$0xff]
        %v1739 = vld [vmem:[%s19 + $0x8] sm:$0xff]
        %v1740 = vld [vmem:[%s19 + $0x10] sm:$0xff]
        %v1741 = vld [vmem:[%s19 + $0x18] sm:$0xff]
        %v1742 = vld [vmem:[%s19 + $0x20] sm:$0xff]
        %v1743 = vld [vmem:[%s19 + $0x28] sm:$0xff]
        %v1744 = vld [vmem:[%s19 + $0x30] sm:$0xff]
        %v1745 = vld [vmem:[%s19 + $0x38] sm:$0xff]
        %v1746 = vld [vmem:[%s19 + $0x40] sm:$0xff]
        %v1747 = vld [vmem:[%s19 + $0x48] sm:$0xff]
        %v1748 = vld [vmem:[%s19 + $0x50] sm:$0xff]
        %v1749 = vld [vmem:[%s19 + $0x58] sm:$0xff]
        %v1750 = vld [vmem:[%s19 + $0x60] sm:$0xff]
        %v1751 = vld [vmem:[%s19 + $0x68] sm:$0xff]
        %v1752 = vld [vmem:[%s19 + $0x70] sm:$0xff]
        %v1753 = vld [vmem:[%s19 + $0x78] sm:$0xff]
        %1754 = vmatprep.subr.mxu0 0.0
        %1755 = vmatpush1.msra.mxu0 %v1753
        %1756 = vmatprep.subr.mxu0 0.0
        %1757 = vmatpush1.msra.mxu0 %v1752
        %1758 = vmatprep.subr.mxu0 0.0
        %1759 = vmatpush1.msra.mxu0 %v1751
        %1760 = vmatprep.subr.mxu0 0.0
        %1761 = vmatpush1.msra.mxu0 %v1750
        %1762 = vmatprep.subr.mxu0 0.0
        %1763 = vmatpush1.msra.mxu0 %v1749
        %1764 = vmatprep.subr.mxu0 0.0
        %1765 = vmatpush1.msra.mxu0 %v1748
        %1766 = vmatprep.subr.mxu0 0.0
        %1767 = vmatpush1.msra.mxu0 %v1747
        %1768 = vmatprep.subr.mxu0 0.0
        %1769 = vmatpush1.msra.mxu0 %v1746
        %1770 = vmatprep.subr.mxu0 0.0
        %1771 = vmatpush1.msra.mxu0 %v1745
        %1772 = vmatprep.subr.mxu0 0.0
        %1773 = vmatpush1.msra.mxu0 %v1744
        %1774 = vmatprep.subr.mxu0 0.0
        %1775 = vmatpush1.msra.mxu0 %v1743
        %1776 = vmatprep.subr.mxu0 0.0
        %1777 = vmatpush1.msra.mxu0 %v1742
        %1778 = vmatprep.subr.mxu0 0.0
        %1779 = vmatpush1.msra.mxu0 %v1741
        %1780 = vmatprep.subr.mxu0 0.0
        %1781 = vmatpush1.msra.mxu0 %v1740
        %1782 = vmatprep.subr.mxu0 0.0
        %1783 = vmatpush1.msra.mxu0 %v1739
        %1784 = vmatprep.subr.mxu0 0.0
        %1785 = vmatpush1.msra.mxu0 %v1738
        %1786 = vmatprep.subr.mxu0 0.0
        %1787 = vmatpush2.msra.mxu0 0.0
        %1788 = vmatprep.subr.mxu0 0.0
        %1789 = vmatpush2.msra.mxu0 0.0
        %1790 = vmatprep.subr.mxu0 0.0
        %1791 = vmatpush2.msra.mxu0 0.0
        %1792 = vmatprep.subr.mxu0 0.0
        %1793 = vmatpush2.msra.mxu0 0.0
        %1794 = vmatprep.subr.mxu0 0.0
        %1795 = vmatpush2.msra.mxu0 0.0
        %1796 = vmatprep.subr.mxu0 0.0
        %1797 = vmatpush2.msra.mxu0 0.0
        %1798 = vmatprep.subr.mxu0 0.0
        %1799 = vmatpush2.msra.mxu0 0.0
        %1800 = vmatprep.subr.mxu0 0.0
        %1801 = vmatpush2.msra.mxu0 0.0
        %1802 = vmatprep.subr.mxu0 0.0
        %1803 = vmatpush2.msra.mxu0 0.0
        %1804 = vmatprep.subr.mxu0 0.0
        %1805 = vmatpush2.msra.mxu0 0.0
        %1806 = vmatprep.subr.mxu0 0.0
        %1807 = vmatpush2.msra.mxu0 0.0
        %1808 = vmatprep.subr.mxu0 0.0
        %1809 = vmatpush2.msra.mxu0 0.0
        %1810 = vmatprep.subr.mxu0 0.0
        %1811 = vmatpush2.msra.mxu0 0.0
        %1812 = vmatprep.subr.mxu0 0.0
        %1813 = vmatpush2.msra.mxu0 0.0
        %1814 = vmatprep.subr.mxu0 0.0
        %1815 = vmatpush2.msra.mxu0 0.0
        %1816 = vmatprep.subr.mxu0 0.0
        %1817 = vmatpush2.msra.mxu0 0.0
        %1818 = vmatprep.mubr.f32.mxu0 0.0
        %1819 = vmatmul.mubr.f32.gmra.mxu0 %v1736
        %v1820 = vpop.f32.mrf.mxu0
        %v1821 = vadd.f32 0.0, %v1820
        %v1822 = vpop.f32.mrf.mxu0
        %1823 = vmatprep.mubr.f32.mxu0 0.0
        %1824 = vmatmul.mubr.f32.gmra.mxu0 %v1737
        %v1825 = vpop.f32.mrf.mxu0
        %v1826 = vadd.f32 0.0, %v1825
        %v1827 = vpop.f32.mrf.mxu0
        %1828 = vdwg.mxu0
        %v1829 = vmax.f32 %v1821, %v1826
        %v1830 = vrot.slane %v1829, 4
        %v1831 = vmax.f32 %v1829, %v1830
        %v1832 = vrot.slane %v1831, 2
        %v1833 = vmax.f32 %v1831, %v1832
        %v1834 = vrot.slane %v1833, 1
        %v1835 = vmax.f32 %v1833, %v1834
        %v1836 = vld [vmem:[%s20] sm:$0x1]
        %v1837 = vadd.f32 %v1835, %v1836
        %1838 = vst [vmem:[%s771] sm:$0x1] %v1837
        %s1839 = sand.u32 %s494, 1
        %s1840 = scalar_lea.sflag [#allocation5], %s1839
        %s1841 = sand.u32 %s494, 1
        %s1842 = scalar_lea.vmem [#allocation18], %s1841
        // Predicated region
        $region141: #{tpu_custom_call.1} parent=103 // pred_check
          %p1843 = pneg %p504
        $region142: #{tpu_custom_call.1} parent=103 // pred_check_branch
          %1845 = sbr.rel (%p1843) target = $region144
        $region143: #{tpu_custom_call.1} parent=103 // pred_region
          %s1847 = ssub.s32 16, 16
          %1848 = vsyncadd %s1840, %s1847
          %s1849 = smul.addr %s40, 16
          %s1850 = scalar_lea.hbm %s21, %s1849
          %s1852 = sshll.u32 %s1842, 4
          %s1853 = int_to_ptr.vmem [resolvable:$true] %s1852
          %1855 = dma.vmem_to_hbm [thread:$0]  %s1853, 16, %s1850, %s1840
        $region144: #{tpu_custom_call.1} parent=103 // pred_fallthru
          _
      $region104: #{tpu_custom_call.1} parent=5 // pred_fallthru
        _
      %p1856 = scmp.le.s32.totalorder 2, %s35
      // Predicated region
      $region145: #{tpu_custom_call.1} parent=5 // pred_check
        %p1857 = pneg %p1856
      $region146: #{tpu_custom_call.1} parent=5 // pred_check_branch
        %1859 = sbr.rel (%p1857) target = $region148
      $region147: #{tpu_custom_call.1} parent=5 // pred_region
        %s1860 = ssub.s32 %s35, 2
        // Predicated region
        $region149: #{tpu_custom_call.1} parent=147 // pred_check
          %p1861 = pneg %p510
        $region150: #{tpu_custom_call.1} parent=147 // pred_check_branch
          %1863 = sbr.rel (%p1861) target = $region152
        $region151: #{tpu_custom_call.1} parent=147 // pred_region
          %s1864 = sand.u32 %s495, 1
          %s1865 = scalar_lea.sflag [#allocation5], %s1864
          %s1866 = sand.u32 %s495, 1
          %s1867 = scalar_lea.vmem [#allocation18], %s1866
          %1868 = dma.done %s1865, 16
        $region152: #{tpu_custom_call.1} parent=147 // pred_fallthru
          _
      $region148: #{tpu_custom_call.1} parent=5 // pred_fallthru
        _
    $region6: #{tpu_custom_call.1} parent=1 // loop_footer
      %s39 = sadd.s32 1, %s35
    $region7: #{tpu_custom_call.1} parent=1 // loop_footer_branch
      %34 = sbr.rel target = $region3
    $region8: #{tpu_custom_call.1} parent=1 // loop_exit
      _
    %1869 = vsyncpa [#allocation4], 1
    %s1870 = scalar_lea.sflag [#allocation4], 1
    %1871 = vsyncpa %s1870, 1
    %1872 = vsyncpa [#allocation7], 1
    %1873 = vsyncpa [#allocation10], 1
    %1874 = vsyncpa [#allocation13], 1
    %1875 = vsyncpa [#allocation16], 1
    %1876 = vsyncpa [#allocation5], 1
    %s1877 = scalar_lea.sflag [#allocation5], 1
    %1878 = vsyncpa %s1877, 1

// kernel: tpu_custom_call.1
$region0: #{tpu_custom_call.1}
  #allocation0 [shape = 'u32[]', space=smem, size = 0x4, offset = 0x4, fixed_abs, tag = 'smem constant byte address 0x4 - core index']
  #allocation1 [shape = 'u32[144,128]{1,0:T(1,128)}', space=vmem, size = 0x12000, scoped, tag = 'internal scratch']
  #allocation2 [shape = 'f32[16,64]{1,0:T(8,128)}', space=vmem, size = 0x2000, scoped, tag = 'scratch operand']
  %s0 = inlined_call_operand.vmem [shape: f32[2,16,8], index: 0, kind: input, shape index: {}]
  %s1 = inlined_call_operand.hbm [shape: f32[8,64], index: 1, kind: input, shape index: {}]
  %s2 = inlined_call_operand.vmem [shape: f32[1,64], index: 2, kind: input, shape index: {}]
  %s3 = inlined_call_operand.hbm [shape: f32[64,128], index: 3, kind: input, shape index: {}]
  %s4 = inlined_call_operand.vmem [shape: f32[1,128], index: 4, kind: input, shape index: {}]
  %s5 = inlined_call_operand.vmem [shape: f32[128,128], index: 5, kind: input, shape index: {}]
  %s6 = inlined_call_operand.hbm [shape: f32[1,128], index: 6, kind: input, shape index: {}]
  %s7 = inlined_call_operand.vmem [shape: f32[128,64], index: 7, kind: input, shape index: {}]
  %s8 = inlined_call_operand.hbm [shape: f32[64,64], index: 8, kind: input, shape index: {}]
  %s9 = inlined_call_operand.hbm [shape: f32[1,64], index: 9, kind: input, shape index: {}]
  %s10 = inlined_call_operand.hbm [shape: f32[64,128], index: 10, kind: input, shape index: {}]
  %s11 = inlined_call_operand.hbm [shape: f32[1,128], index: 11, kind: input, shape index: {}]
  %s12 = inlined_call_operand.vmem [shape: f32[128,128], index: 12, kind: input, shape index: {}]
  %s13 = inlined_call_operand.vmem [shape: f32[1,128], index: 13, kind: input, shape index: {}]
  %s14 = inlined_call_operand.vmem [shape: f32[128,64], index: 14, kind: input, shape index: {}]
  %s15 = inlined_call_operand.hbm [shape: f32[64,64], index: 15, kind: input, shape index: {}]
  %s16 = inlined_call_operand.vmem [shape: f32[1,64], index: 16, kind: input, shape index: {}]
  %s17 = inlined_call_operand.hbm [shape: f32[64,128], index: 17, kind: input, shape index: {}]
  %s18 = inlined_call_operand.vmem [shape: f32[1,128], index: 18, kind: input, shape index: {}]
  %s19 = inlined_call_operand.vmem [shape: f32[128,128], index: 19, kind: input, shape index: {}]
  %s20 = inlined_call_operand.vmem [shape: f32[1,128], index: 20, kind: input, shape index: {}]
  %s21 = inlined_call_operand.hbm [shape: f32[2,1,128], index: 21, kind: output, shape index: {}]
  %s22 = sld [smem:[#allocation0]]
  $region153: #{tpu_custom_call.1} parent=0
    _
  %s24 = ssub.s32 1, %s22
  %s25 = scalar_select 0, %s24, %s22
  $region1: #{tpu_custom_call.1} parent=0
    #allocation3 [shape = 'u8[4096]{0}', space=vmem, size = 0x1000, scoped, tag = 'input window, operand 1, single buffered']
    #allocation4 [shape = 's32[2]{0}', space=sflag, size = 0x8, scoped, tag = 'scoped memory for tpu_custom_call.1']
    #allocation5 [shape = 's32[2]{0}', space=sflag, size = 0x8, scoped, tag = 'scoped memory for tpu_custom_call.1']
    #allocation6 [shape = 'u8[32768]{0}', space=vmem, size = 0x8000, scoped, tag = 'input window, operand 3, single buffered']
    #allocation7 [shape = 's32[1]{0}', space=sflag, size = 0x4, scoped, tag = 'scoped memory for tpu_custom_call.1']
    #allocation8 [shape = 'u8[512]{0}', space=vmem, size = 0x400, scoped, tag = 'input window, operand 6, single buffered']
    #allocation9 [shape = 'u8[32768]{0}', space=vmem, size = 0x8000, scoped, tag = 'input window, operand 8, single buffered']
    #allocation10 [shape = 's32[1]{0}', space=sflag, size = 0x4, scoped, tag = 'scoped memory for tpu_custom_call.1']
    #allocation11 [shape = 'u8[512]{0}', space=vmem, size = 0x400, scoped, tag = 'input window, operand 9, single buffered']
    #allocation12 [shape = 'u8[32768]{0}', space=vmem, size = 0x8000, scoped, tag = 'input window, operand 10, single buffered']
    #allocation13 [shape = 's32[1]{0}', space=sflag, size = 0x4, scoped, tag = 'scoped memory for tpu_custom_call.1']
    #allocation14 [shape = 'u8[512]{0}', space=vmem, size = 0x400, scoped, tag = 'input window, operand 11, single buffered']
    #allocation15 [shape = 'u8[32768]{0}', space=vmem, size = 0x8000, scoped, tag = 'input window, operand 15, single buffered']
    #allocation16 [shape = 's32[1]{0}', space=sflag, size = 0x4, scoped, tag = 'scoped memory for tpu_custom_call.1']
    #allocation17 [shape = 'u8[32768]{0}', space=vmem, size = 0x8000, scoped, tag = 'input window, operand 17, single buffered']
    #allocation18 [shape = 'u8[1024]{0}', space=vmem, size = 0x400, scoped, tag = 'output window, operand 0']
    %26 = vsyncpa [#allocation4], 0
    %27 = vsyncpa [#allocation7], 0
    %28 = vsyncpa [#allocation10], 0
    %29 = vsyncpa [#allocation13], 0
    %30 = vsyncpa [#allocation16], 0
    %31 = vsyncpa [#allocation5], 0
    %s32 = scalar_lea.sflag [#allocation5], 1
    %33 = vsyncpa %s32, 0
    loop: start=0, step=1, limit=4
    $region2: #{tpu_custom_call.1} parent=1 // loop_pre_header
      _
    $region3: #{tpu_custom_call.1} parent=1 // loop_header
      %s35 = sphi 0, %s39
      %p36 = scmp.ge.s32.totalorder %s35, 4
      %s45 = sphi 0, %s47
      %s48 = sphi 0, %s45
      %s49 = sphi 0, %s48
      %s65 = sphi 0, %s49
      %s69 = sphi 0, %s69
      %s71 = sphi 0, %s69
      %s72 = sphi 0, %s71
      %s86 = sphi 0, %s72
      %s90 = sphi 0, %s90
      %s92 = sphi 0, %s90
      %s93 = sphi 0, %s92
      %s107 = sphi 0, %s93
      %s111 = sphi 0, %s111
      %s113 = sphi 0, %s111
      %s114 = sphi 0, %s113
      %s128 = sphi 0, %s114
      %s132 = sphi 0, %s132
      %s134 = sphi 0, %s132
      %s135 = sphi 0, %s134
      %s149 = sphi 0, %s135
      %s153 = sphi 0, %s153
      %s155 = sphi 0, %s153
      %s156 = sphi 0, %s155
      %s170 = sphi 0, %s156
      %s174 = sphi 0, %s174
      %s176 = sphi 0, %s174
      %s177 = sphi 0, %s176
      %s191 = sphi 0, %s177
      %s195 = sphi 0, %s195
      %s197 = sphi 0, %s195
      %s198 = sphi 0, %s197
      %s212 = sphi 0, %s198
      %s216 = sphi 0, %s216
      %s218 = sphi 0, %s216
      %s219 = sphi 0, %s218
      %s233 = sphi 0, %s219
      %s237 = sphi 0, %s237
      %s239 = sphi 0, %s237
      %s240 = sphi 0, %s239
      %s254 = sphi 0, %s240
      %s258 = sphi 0, %s258
      %s260 = sphi 0, %s258
      %s261 = sphi 0, %s260
      %s275 = sphi 0, %s261
      %s279 = sphi 0, %s279
      %s281 = sphi 0, %s279
      %s282 = sphi 0, %s281
      %s296 = sphi 0, %s282
      %s300 = sphi 0, %s300
      %s302 = sphi 0, %s300
      %s303 = sphi 0, %s302
      %s317 = sphi 0, %s303
      %s321 = sphi 0, %s321
      %s323 = sphi 0, %s321
      %s324 = sphi 0, %s323
      %s338 = sphi 0, %s324
      %s342 = sphi 0, %s342
      %s344 = sphi 0, %s342
      %s345 = sphi 0, %s344
      %s359 = sphi 0, %s345
      %s363 = sphi 0, %s363
      %s365 = sphi 0, %s363
      %s366 = sphi 0, %s365
      %s380 = sphi 0, %s366
      %s384 = sphi 0, %s384
      %s386 = sphi 0, %s384
      %s387 = sphi 0, %s386
      %s401 = sphi 0, %s387
      %s405 = sphi 0, %s405
      %s407 = sphi 0, %s405
      %s408 = sphi 0, %s407
      %s422 = sphi 0, %s408
      %s426 = sphi 0, %s426
      %s428 = sphi 0, %s426
      %s429 = sphi 0, %s428
      %s443 = sphi 0, %s429
      %s447 = sphi 0, %s447
      %s449 = sphi 0, %s447
      %s450 = sphi 0, %s449
      %s464 = sphi 0, %s450
      %s468 = sphi 0, %s468
      %s470 = sphi 0, %s468
      %s471 = sphi 0, %s470
      %s485 = sphi 0, %s471
      %s491 = sphi 0, %s493
      %s494 = sphi 0, %s491
      %s495 = sphi 0, %s494
      %s511 = sphi 0, %s495
    $region4: #{tpu_custom_call.1} parent=1 // loop_header_branch
      %38 = sbr.rel (%p36) target = $region8
    $region5: #{tpu_custom_call.1} parent=1 // loop_body
      %s40 = ssub.s32 %s35, 1
      %s41 = ssub.s32 %s35, 2
      %s42 = sadd.s32 %s35, 1
      %s43 = ssub.s32 %s35, %s42
      %p44 = scmp.eq.s32.totalorder %s43, 0
      %s46 = sadd.s32 %s45, 1
      %s47 = scalar_select %p44, %s45, %s46
      %p50 = pneg %p44
      %p51 = scmp.eq.s32.totalorder %s35, 1
      %p52 = por %p50, %p51
      %p53 = scmp.ne.s32.totalorder %s45, %s48
      %p54 = scmp.eq.s32.totalorder %s35, 0
      %p55 = por %p53, %p54
      %p56 = scmp.ne.s32.totalorder %s45, %s48
      %p57 = scmp.eq.s32.totalorder %s40, 1
      %p58 = por %p56, %p57
      %p59 = scmp.ne.s32.totalorder %s48, %s49
      %p60 = scmp.eq.s32.totalorder %s40, 0
      %p61 = por %p59, %p60
      %p62 = scmp.ne.s32.totalorder %s48, %s49
      %p63 = scmp.eq.s32.totalorder %s41, 1
      %p64 = por %p62, %p63
      %p66 = scmp.ne.s32.totalorder %s49, %s65
      %p67 = scmp.eq.s32.totalorder %s41, 0
      %p68 = por %p66, %p67
      %s70 = sadd.s32 %s69, 1
      %p73 = scmp.eq.s32.totalorder %s35, 1
      %p74 = scmp.ne.s32.totalorder %s69, %s71
      %p75 = scmp.eq.s32.totalorder %s35, 0
      %p76 = por %p74, %p75
      %p77 = scmp.ne.s32.totalorder %s69, %s71
      %p78 = scmp.eq.s32.totalorder %s40, 1
      %p79 = por %p77, %p78
      %p80 = scmp.ne.s32.totalorder %s71, %s72
      %p81 = scmp.eq.s32.totalorder %s40, 0
      %p82 = por %p80, %p81
      %p83 = scmp.ne.s32.totalorder %s71, %s72
      %p84 = scmp.eq.s32.totalorder %s41, 1
      %p85 = por %p83, %p84
      %p87 = scmp.ne.s32.totalorder %s72, %s86
      %p88 = scmp.eq.s32.totalorder %s41, 0
      %p89 = por %p87, %p88
      %s91 = sadd.s32 %s90, 1
      %p94 = scmp.eq.s32.totalorder %s35, 1
      %p95 = scmp.ne.s32.totalorder %s90, %s92
      %p96 = scmp.eq.s32.totalorder %s35, 0
      %p97 = por %p95, %p96
      %p98 = scmp.ne.s32.totalorder %s90, %s92
      %p99 = scmp.eq.s32.totalorder %s40, 1
      %p100 = por %p98, %p99
      %p101 = scmp.ne.s32.totalorder %s92, %s93
      %p102 = scmp.eq.s32.totalorder %s40, 0
      %p103 = por %p101, %p102
      %p104 = scmp.ne.s32.totalorder %s92, %s93
      %p105 = scmp.eq.s32.totalorder %s41, 1
      %p106 = por %p104, %p105
      %p108 = scmp.ne.s32.totalorder %s93, %s107
      %p109 = scmp.eq.s32.totalorder %s41, 0
      %p110 = por %p108, %p109
      %s112 = sadd.s32 %s111, 1
      %p115 = scmp.eq.s32.totalorder %s35, 1
      %p116 = scmp.ne.s32.totalorder %s111, %s113
      %p117 = scmp.eq.s32.totalorder %s35, 0
      %p118 = por %p116, %p117
      %p119 = scmp.ne.s32.totalorder %s111, %s113
      %p120 = scmp.eq.s32.totalorder %s40, 1
      %p121 = por %p119, %p120
      %p122 = scmp.ne.s32.totalorder %s113, %s114
      %p123 = scmp.eq.s32.totalorder %s40, 0
      %p124 = por %p122, %p123
      %p125 = scmp.ne.s32.totalorder %s113, %s114
      %p126 = scmp.eq.s32.totalorder %s41, 1
      %p127 = por %p125, %p126
      %p129 = scmp.ne.s32.totalorder %s114, %s128
      %p130 = scmp.eq.s32.totalorder %s41, 0
      %p131 = por %p129, %p130
      %s133 = sadd.s32 %s132, 1
      %p136 = scmp.eq.s32.totalorder %s35, 1
      %p137 = scmp.ne.s32.totalorder %s132, %s134
      %p138 = scmp.eq.s32.totalorder %s35, 0
      %p139 = por %p137, %p138
      %p140 = scmp.ne.s32.totalorder %s132, %s134
      %p141 = scmp.eq.s32.totalorder %s40, 1
      %p142 = por %p140, %p141
      %p143 = scmp.ne.s32.totalorder %s134, %s135
      %p144 = scmp.eq.s32.totalorder %s40, 0
      %p145 = por %p143, %p144
      %p146 = scmp.ne.s32.totalorder %s134, %s135
      %p147 = scmp.eq.s32.totalorder %s41, 1
      %p148 = por %p146, %p147
      %p150 = scmp.ne.s32.totalorder %s135, %s149
      %p151 = scmp.eq.s32.totalorder %s41, 0
      %p152 = por %p150, %p151
      %s154 = sadd.s32 %s153, 1
      %p157 = scmp.eq.s32.totalorder %s35, 1
      %p158 = scmp.ne.s32.totalorder %s153, %s155
      %p159 = scmp.eq.s32.totalorder %s35, 0
      %p160 = por %p158, %p159
      %p161 = scmp.ne.s32.totalorder %s153, %s155
      %p162 = scmp.eq.s32.totalorder %s40, 1
      %p163 = por %p161, %p162
      %p164 = scmp.ne.s32.totalorder %s155, %s156
      %p165 = scmp.eq.s32.totalorder %s40, 0
      %p166 = por %p164, %p165
      %p167 = scmp.ne.s32.totalorder %s155, %s156
      %p168 = scmp.eq.s32.totalorder %s41, 1
      %p169 = por %p167, %p168
      %p171 = scmp.ne.s32.totalorder %s156, %s170
      %p172 = scmp.eq.s32.totalorder %s41, 0
      %p173 = por %p171, %p172
      %s175 = sadd.s32 %s174, 1
      %p178 = scmp.eq.s32.totalorder %s35, 1
      %p179 = scmp.ne.s32.totalorder %s174, %s176
      %p180 = scmp.eq.s32.totalorder %s35, 0
      %p181 = por %p179, %p180
      %p182 = scmp.ne.s32.totalorder %s174, %s176
      %p183 = scmp.eq.s32.totalorder %s40, 1
      %p184 = por %p182, %p183
      %p185 = scmp.ne.s32.totalorder %s176, %s177
      %p186 = scmp.eq.s32.totalorder %s40, 0
      %p187 = por %p185, %p186
      %p188 = scmp.ne.s32.totalorder %s176, %s177
      %p189 = scmp.eq.s32.totalorder %s41, 1
      %p190 = por %p188, %p189
      %p192 = scmp.ne.s32.totalorder %s177, %s191
      %p193 = scmp.eq.s32.totalorder %s41, 0
      %p194 = por %p192, %p193
      %s196 = sadd.s32 %s195, 1
      %p199 = scmp.eq.s32.totalorder %s35, 1
      %p200 = scmp.ne.s32.totalorder %s195, %s197
      %p201 = scmp.eq.s32.totalorder %s35, 0
      %p202 = por %p200, %p201
      %p203 = scmp.ne.s32.totalorder %s195, %s197
      %p204 = scmp.eq.s32.totalorder %s40, 1
      %p205 = por %p203, %p204
      %p206 = scmp.ne.s32.totalorder %s197, %s198
      %p207 = scmp.eq.s32.totalorder %s40, 0
      %p208 = por %p206, %p207
      %p209 = scmp.ne.s32.totalorder %s197, %s198
      %p210 = scmp.eq.s32.totalorder %s41, 1
      %p211 = por %p209, %p210
      %p213 = scmp.ne.s32.totalorder %s198, %s212
      %p214 = scmp.eq.s32.totalorder %s41, 0
      %p215 = por %p213, %p214
      %s217 = sadd.s32 %s216, 1
      %p220 = scmp.eq.s32.totalorder %s35, 1
      %p221 = scmp.ne.s32.totalorder %s216, %s218
      %p222 = scmp.eq.s32.totalorder %s35, 0
      %p223 = por %p221, %p222
      %p224 = scmp.ne.s32.totalorder %s216, %s218
      %p225 = scmp.eq.s32.totalorder %s40, 1
      %p226 = por %p224, %p225
      %p227 = scmp.ne.s32.totalorder %s218, %s219
      %p228 = scmp.eq.s32.totalorder %s40, 0
      %p229 = por %p227, %p228
      %p230 = scmp.ne.s32.totalorder %s218, %s219
      %p231 = scmp.eq.s32.totalorder %s41, 1
      %p232 = por %p230, %p231
      %p234 = scmp.ne.s32.totalorder %s219, %s233
      %p235 = scmp.eq.s32.totalorder %s41, 0
      %p236 = por %p234, %p235
      %s238 = sadd.s32 %s237, 1
      %p241 = scmp.eq.s32.totalorder %s35, 1
      %p242 = scmp.ne.s32.totalorder %s237, %s239
      %p243 = scmp.eq.s32.totalorder %s35, 0
      %p244 = por %p242, %p243
      %p245 = scmp.ne.s32.totalorder %s237, %s239
      %p246 = scmp.eq.s32.totalorder %s40, 1
      %p247 = por %p245, %p246
      %p248 = scmp.ne.s32.totalorder %s239, %s240
      %p249 = scmp.eq.s32.totalorder %s40, 0
      %p250 = por %p248, %p249
      %p251 = scmp.ne.s32.totalorder %s239, %s240
      %p252 = scmp.eq.s32.totalorder %s41, 1
      %p253 = por %p251, %p252
      %p255 = scmp.ne.s32.totalorder %s240, %s254
      %p256 = scmp.eq.s32.totalorder %s41, 0
      %p257 = por %p255, %p256
      %s259 = sadd.s32 %s258, 1
      %p262 = scmp.eq.s32.totalorder %s35, 1
      %p263 = scmp.ne.s32.totalorder %s258, %s260
      %p264 = scmp.eq.s32.totalorder %s35, 0
      %p265 = por %p263, %p264
      %p266 = scmp.ne.s32.totalorder %s258, %s260
      %p267 = scmp.eq.s32.totalorder %s40, 1
      %p268 = por %p266, %p267
      %p269 = scmp.ne.s32.totalorder %s260, %s261
      %p270 = scmp.eq.s32.totalorder %s40, 0
      %p271 = por %p269, %p270
      %p272 = scmp.ne.s32.totalorder %s260, %s261
      %p273 = scmp.eq.s32.totalorder %s41, 1
      %p274 = por %p272, %p273
      %p276 = scmp.ne.s32.totalorder %s261, %s275
      %p277 = scmp.eq.s32.totalorder %s41, 0
      %p278 = por %p276, %p277
      %s280 = sadd.s32 %s279, 1
      %p283 = scmp.eq.s32.totalorder %s35, 1
      %p284 = scmp.ne.s32.totalorder %s279, %s281
      %p285 = scmp.eq.s32.totalorder %s35, 0
      %p286 = por %p284, %p285
      %p287 = scmp.ne.s32.totalorder %s279, %s281
      %p288 = scmp.eq.s32.totalorder %s40, 1
      %p289 = por %p287, %p288
      %p290 = scmp.ne.s32.totalorder %s281, %s282
      %p291 = scmp.eq.s32.totalorder %s40, 0
      %p292 = por %p290, %p291
      %p293 = scmp.ne.s32.totalorder %s281, %s282
      %p294 = scmp.eq.s32.totalorder %s41, 1
      %p295 = por %p293, %p294
      %p297 = scmp.ne.s32.totalorder %s282, %s296
      %p298 = scmp.eq.s32.totalorder %s41, 0
      %p299 = por %p297, %p298
      %s301 = sadd.s32 %s300, 1
      %p304 = scmp.eq.s32.totalorder %s35, 1
      %p305 = scmp.ne.s32.totalorder %s300, %s302
      %p306 = scmp.eq.s32.totalorder %s35, 0
      %p307 = por %p305, %p306
      %p308 = scmp.ne.s32.totalorder %s300, %s302
      %p309 = scmp.eq.s32.totalorder %s40, 1
      %p310 = por %p308, %p309
      %p311 = scmp.ne.s32.totalorder %s302, %s303
      %p312 = scmp.eq.s32.totalorder %s40, 0
      %p313 = por %p311, %p312
      %p314 = scmp.ne.s32.totalorder %s302, %s303
      %p315 = scmp.eq.s32.totalorder %s41, 1
      %p316 = por %p314, %p315
      %p318 = scmp.ne.s32.totalorder %s303, %s317
      %p319 = scmp.eq.s32.totalorder %s41, 0
      %p320 = por %p318, %p319
      %s322 = sadd.s32 %s321, 1
      %p325 = scmp.eq.s32.totalorder %s35, 1
      %p326 = scmp.ne.s32.totalorder %s321, %s323
      %p327 = scmp.eq.s32.totalorder %s35, 0
      %p328 = por %p326, %p327
      %p329 = scmp.ne.s32.totalorder %s321, %s323
      %p330 = scmp.eq.s32.totalorder %s40, 1
      %p331 = por %p329, %p330
      %p332 = scmp.ne.s32.totalorder %s323, %s324
      %p333 = scmp.eq.s32.totalorder %s40, 0
      %p334 = por %p332, %p333
      %p335 = scmp.ne.s32.totalorder %s323, %s324
      %p336 = scmp.eq.s32.totalorder %s41, 1
      %p337 = por %p335, %p336
      %p339 = scmp.ne.s32.totalorder %s324, %s338
      %p340 = scmp.eq.s32.totalorder %s41, 0
      %p341 = por %p339, %p340
      %s343 = sadd.s32 %s342, 1
      %p346 = scmp.eq.s32.totalorder %s35, 1
      %p347 = scmp.ne.s32.totalorder %s342, %s344
      %p348 = scmp.eq.s32.totalorder %s35, 0
      %p349 = por %p347, %p348
      %p350 = scmp.ne.s32.totalorder %s342, %s344
      %p351 = scmp.eq.s32.totalorder %s40, 1
      %p352 = por %p350, %p351
      %p353 = scmp.ne.s32.totalorder %s344, %s345
      %p354 = scmp.eq.s32.totalorder %s40, 0
      %p355 = por %p353, %p354
      %p356 = scmp.ne.s32.totalorder %s344, %s345
      %p357 = scmp.eq.s32.totalorder %s41, 1
      %p358 = por %p356, %p357
      %p360 = scmp.ne.s32.totalorder %s345, %s359
      %p361 = scmp.eq.s32.totalorder %s41, 0
      %p362 = por %p360, %p361
      %s364 = sadd.s32 %s363, 1
      %p367 = scmp.eq.s32.totalorder %s35, 1
      %p368 = scmp.ne.s32.totalorder %s363, %s365
      %p369 = scmp.eq.s32.totalorder %s35, 0
      %p370 = por %p368, %p369
      %p371 = scmp.ne.s32.totalorder %s363, %s365
      %p372 = scmp.eq.s32.totalorder %s40, 1
      %p373 = por %p371, %p372
      %p374 = scmp.ne.s32.totalorder %s365, %s366
      %p375 = scmp.eq.s32.totalorder %s40, 0
      %p376 = por %p374, %p375
      %p377 = scmp.ne.s32.totalorder %s365, %s366
      %p378 = scmp.eq.s32.totalorder %s41, 1
      %p379 = por %p377, %p378
      %p381 = scmp.ne.s32.totalorder %s366, %s380
      %p382 = scmp.eq.s32.totalorder %s41, 0
      %p383 = por %p381, %p382
      %s385 = sadd.s32 %s384, 1
      %p388 = scmp.eq.s32.totalorder %s35, 1
      %p389 = scmp.ne.s32.totalorder %s384, %s386
      %p390 = scmp.eq.s32.totalorder %s35, 0
      %p391 = por %p389, %p390
      %p392 = scmp.ne.s32.totalorder %s384, %s386
      %p393 = scmp.eq.s32.totalorder %s40, 1
      %p394 = por %p392, %p393
      %p395 = scmp.ne.s32.totalorder %s386, %s387
      %p396 = scmp.eq.s32.totalorder %s40, 0
      %p397 = por %p395, %p396
      %p398 = scmp.ne.s32.totalorder %s386, %s387
      %p399 = scmp.eq.s32.totalorder %s41, 1
      %p400 = por %p398, %p399
      %p402 = scmp.ne.s32.totalorder %s387, %s401
      %p403 = scmp.eq.s32.totalorder %s41, 0
      %p404 = por %p402, %p403
      %s406 = sadd.s32 %s405, 1
      %p409 = scmp.eq.s32.totalorder %s35, 1
      %p410 = scmp.ne.s32.totalorder %s405, %s407
      %p411 = scmp.eq.s32.totalorder %s35, 0
      %p412 = por %p410, %p411
      %p413 = scmp.ne.s32.totalorder %s405, %s407
      %p414 = scmp.eq.s32.totalorder %s40, 1
      %p415 = por %p413, %p414
      %p416 = scmp.ne.s32.totalorder %s407, %s408
      %p417 = scmp.eq.s32.totalorder %s40, 0
      %p418 = por %p416, %p417
      %p419 = scmp.ne.s32.totalorder %s407, %s408
      %p420 = scmp.eq.s32.totalorder %s41, 1
      %p421 = por %p419, %p420
      %p423 = scmp.ne.s32.totalorder %s408, %s422
      %p424 = scmp.eq.s32.totalorder %s41, 0
      %p425 = por %p423, %p424
      %s427 = sadd.s32 %s426, 1
      %p430 = scmp.eq.s32.totalorder %s35, 1
      %p431 = scmp.ne.s32.totalorder %s426, %s428
      %p432 = scmp.eq.s32.totalorder %s35, 0
      %p433 = por %p431, %p432
      %p434 = scmp.ne.s32.totalorder %s426, %s428
      %p435 = scmp.eq.s32.totalorder %s40, 1
      %p436 = por %p434, %p435
      %p437 = scmp.ne.s32.totalorder %s428, %s429
      %p438 = scmp.eq.s32.totalorder %s40, 0
      %p439 = por %p437, %p438
      %p440 = scmp.ne.s32.totalorder %s428, %s429
      %p441 = scmp.eq.s32.totalorder %s41, 1
      %p442 = por %p440, %p441
      %p444 = scmp.ne.s32.totalorder %s429, %s443
      %p445 = scmp.eq.s32.totalorder %s41, 0
      %p446 = por %p444, %p445
      %s448 = sadd.s32 %s447, 1
      %p451 = scmp.eq.s32.totalorder %s35, 1
      %p452 = scmp.ne.s32.totalorder %s447, %s449
      %p453 = scmp.eq.s32.totalorder %s35, 0
      %p454 = por %p452, %p453
      %p455 = scmp.ne.s32.totalorder %s447, %s449
      %p456 = scmp.eq.s32.totalorder %s40, 1
      %p457 = por %p455, %p456
      %p458 = scmp.ne.s32.totalorder %s449, %s450
      %p459 = scmp.eq.s32.totalorder %s40, 0
      %p460 = por %p458, %p459
      %p461 = scmp.ne.s32.totalorder %s449, %s450
      %p462 = scmp.eq.s32.totalorder %s41, 1
      %p463 = por %p461, %p462
      %p465 = scmp.ne.s32.totalorder %s450, %s464
      %p466 = scmp.eq.s32.totalorder %s41, 0
      %p467 = por %p465, %p466
      %s469 = sadd.s32 %s468, 1
      %p472 = scmp.eq.s32.totalorder %s35, 1
      %p473 = scmp.ne.s32.totalorder %s468, %s470
      %p474 = scmp.eq.s32.totalorder %s35, 0
      %p475 = por %p473, %p474
      %p476 = scmp.ne.s32.totalorder %s468, %s470
      %p477 = scmp.eq.s32.totalorder %s40, 1
      %p478 = por %p476, %p477
      %p479 = scmp.ne.s32.totalorder %s470, %s471
      %p480 = scmp.eq.s32.totalorder %s40, 0
      %p481 = por %p479, %p480
      %p482 = scmp.ne.s32.totalorder %s470, %s471
      %p483 = scmp.eq.s32.totalorder %s41, 1
      %p484 = por %p482, %p483
      %p486 = scmp.ne.s32.totalorder %s471, %s485
      %p487 = scmp.eq.s32.totalorder %s41, 0
      %p488 = por %p486, %p487
      %s489 = ssub.s32 %s35, %s42
      %p490 = scmp.eq.s32.totalorder %s489, 0
      %s492 = sadd.s32 %s491, 1
      %s493 = scalar_select %p490, %s491, %s492
      %p496 = pneg %p490
      %p497 = scmp.eq.s32.totalorder %s35, 1
      %p498 = por %p496, %p497
      %p499 = scmp.ne.s32.totalorder %s491, %s494
      %p500 = scmp.eq.s32.totalorder %s35, 0
      %p501 = por %p499, %p500
      %p502 = scmp.ne.s32.totalorder %s491, %s494
      %p503 = scmp.eq.s32.totalorder %s40, 1
      %p504 = por %p502, %p503
      %p505 = scmp.ne.s32.totalorder %s494, %s495
      %p506 = scmp.eq.s32.totalorder %s40, 0
      %p507 = por %p505, %p506
      %p508 = scmp.ne.s32.totalorder %s494, %s495
      %p509 = scmp.eq.s32.totalorder %s41, 1
      %p510 = por %p508, %p509
      %p512 = scmp.ne.s32.totalorder %s495, %s511
      %p513 = scmp.eq.s32.totalorder %s41, 0
      %p514 = por %p512, %p513
      %p515 = scmp.le.s32.totalorder 1, %s35
      %p516 = scmp.lt.s32.totalorder %s35, 3
      %p517 = pnand %p515, %p516
      %p518 = pneg %p517
      // Predicated region
      $region9: #{tpu_custom_call.1} parent=5 // pred_check
        _
      $region10: #{tpu_custom_call.1} parent=5 // pred_check_branch
        %520 = sbr.rel (%p517) target = $region12
      $region11: #{tpu_custom_call.1} parent=5 // pred_region
        %s521 = ssub.s32 %s35, 1
        // Predicated region
        $region13: #{tpu_custom_call.1} parent=11 // pred_check
          %p522 = pneg %p82
        $region14: #{tpu_custom_call.1} parent=11 // pred_check_branch
          %524 = sbr.rel (%p522) target = $region16
        $region15: #{tpu_custom_call.1} parent=11 // pred_region
          %s526 = ssub.s32 128, 128
          %527 = vsyncadd [#allocation4], %s526
          %s529 = sshll.u32 [#allocation3], 4
          %s530 = int_to_ptr.vmem [resolvable:$true] %s529
          %532 = dma.hbm_to_vmem [thread:$0]  %s1, 128, %s530, [#allocation4]
        $region16: #{tpu_custom_call.1} parent=11 // pred_fallthru
          _
        // Predicated region
        $region17: #{tpu_custom_call.1} parent=11 // pred_check
          %p533 = pneg %p103
        $region18: #{tpu_custom_call.1} parent=11 // pred_check_branch
          %535 = sbr.rel (%p533) target = $region20
        $region19: #{tpu_custom_call.1} parent=11 // pred_region
          _
        $region20: #{tpu_custom_call.1} parent=11 // pred_fallthru
          _
        // Predicated region
        $region21: #{tpu_custom_call.1} parent=11 // pred_check
          %p536 = pneg %p124
        $region22: #{tpu_custom_call.1} parent=11 // pred_check_branch
          %538 = sbr.rel (%p536) target = $region24
        $region23: #{tpu_custom_call.1} parent=11 // pred_region
          %s540 = ssub.s32 1024, 1024
          %541 = vsyncadd [#allocation7], %s540
          %s542 = sshll.u32 [#allocation6], 4
          %s543 = int_to_ptr.vmem [resolvable:$true] %s542
          %548 = dma.hbm_to_vmem [thread:$0]  %s3, 1024, %s543, [#allocation7], 128, 128, 8
        $region24: #{tpu_custom_call.1} parent=11 // pred_fallthru
          _
        // Predicated region
        $region25: #{tpu_custom_call.1} parent=11 // pred_check
          %p549 = pneg %p145
        $region26: #{tpu_custom_call.1} parent=11 // pred_check_branch
          %551 = sbr.rel (%p549) target = $region28
        $region27: #{tpu_custom_call.1} parent=11 // pred_region
          _
        $region28: #{tpu_custom_call.1} parent=11 // pred_fallthru
          _
        // Predicated region
        $region29: #{tpu_custom_call.1} parent=11 // pred_check
          %p552 = pneg %p166
        $region30: #{tpu_custom_call.1} parent=11 // pred_check_branch
          %554 = sbr.rel (%p552) target = $region32
        $region31: #{tpu_custom_call.1} parent=11 // pred_region
          _
        $region32: #{tpu_custom_call.1} parent=11 // pred_fallthru
          _
        // Predicated region
        $region33: #{tpu_custom_call.1} parent=11 // pred_check
          %p555 = pneg %p187
        $region34: #{tpu_custom_call.1} parent=11 // pred_check_branch
          %557 = sbr.rel (%p555) target = $region36
        $region35: #{tpu_custom_call.1} parent=11 // pred_region
          %s559 = ssub.s32 16, 16
          %560 = vsyncadd [#allocation7], %s559
          %s562 = sshll.u32 [#allocation8], 4
          %s563 = int_to_ptr.vmem [resolvable:$true] %s562
          %565 = dma.hbm_to_vmem [thread:$0]  %s6, 16, %s563, [#allocation7]
        $region36: #{tpu_custom_call.1} parent=11 // pred_fallthru
          _
        // Predicated region
        $region37: #{tpu_custom_call.1} parent=11 // pred_check
          %p566 = pneg %p208
        $region38: #{tpu_custom_call.1} parent=11 // pred_check_branch
          %568 = sbr.rel (%p566) target = $region40
        $region39: #{tpu_custom_call.1} parent=11 // pred_region
          _
        $region40: #{tpu_custom_call.1} parent=11 // pred_fallthru
          _
        // Predicated region
        $region41: #{tpu_custom_call.1} parent=11 // pred_check
          %p569 = pneg %p229
        $region42: #{tpu_custom_call.1} parent=11 // pred_check_branch
          %571 = sbr.rel (%p569) target = $region44
        $region43: #{tpu_custom_call.1} parent=11 // pred_region
          %s573 = ssub.s32 1024, 1024
          %574 = vsyncadd [#allocation10], %s573
          %s575 = sshll.u32 [#allocation9], 4
          %s576 = int_to_ptr.vmem [resolvable:$true] %s575
          %581 = dma.hbm_to_vmem [thread:$0]  %s8, 1024, %s576, [#allocation10], 128, 128, 8
        $region44: #{tpu_custom_call.1} parent=11 // pred_fallthru
          _
        // Predicated region
        $region45: #{tpu_custom_call.1} parent=11 // pred_check
          %p582 = pneg %p250
        $region46: #{tpu_custom_call.1} parent=11 // pred_check_branch
          %584 = sbr.rel (%p582) target = $region48
        $region47: #{tpu_custom_call.1} parent=11 // pred_region
          %s586 = ssub.s32 16, 16
          %587 = vsyncadd [#allocation10], %s586
          %s589 = sshll.u32 [#allocation11], 4
          %s590 = int_to_ptr.vmem [resolvable:$true] %s589
          %592 = dma.hbm_to_vmem [thread:$0]  %s9, 16, %s590, [#allocation10]
        $region48: #{tpu_custom_call.1} parent=11 // pred_fallthru
          _
        // Predicated region
        $region49: #{tpu_custom_call.1} parent=11 // pred_check
          %p593 = pneg %p271
        $region50: #{tpu_custom_call.1} parent=11 // pred_check_branch
          %595 = sbr.rel (%p593) target = $region52
        $region51: #{tpu_custom_call.1} parent=11 // pred_region
          %s597 = ssub.s32 1024, 1024
          %598 = vsyncadd [#allocation13], %s597
          %s599 = sshll.u32 [#allocation12], 4
          %s600 = int_to_ptr.vmem [resolvable:$true] %s599
          %605 = dma.hbm_to_vmem [thread:$0]  %s10, 1024, %s600, [#allocation13], 128, 128, 8
        $region52: #{tpu_custom_call.1} parent=11 // pred_fallthru
          _
        // Predicated region
        $region53: #{tpu_custom_call.1} parent=11 // pred_check
          %p606 = pneg %p292
        $region54: #{tpu_custom_call.1} parent=11 // pred_check_branch
          %608 = sbr.rel (%p606) target = $region56
        $region55: #{tpu_custom_call.1} parent=11 // pred_region
          %s610 = ssub.s32 16, 16
          %611 = vsyncadd [#allocation13], %s610
          %s613 = sshll.u32 [#allocation14], 4
          %s614 = int_to_ptr.vmem [resolvable:$true] %s613
          %616 = dma.hbm_to_vmem [thread:$0]  %s11, 16, %s614, [#allocation13]
        $region56: #{tpu_custom_call.1} parent=11 // pred_fallthru
          _
        // Predicated region
        $region57: #{tpu_custom_call.1} parent=11 // pred_check
          %p617 = pneg %p313
        $region58: #{tpu_custom_call.1} parent=11 // pred_check_branch
          %619 = sbr.rel (%p617) target = $region60
        $region59: #{tpu_custom_call.1} parent=11 // pred_region
          _
        $region60: #{tpu_custom_call.1} parent=11 // pred_fallthru
          _
        // Predicated region
        $region61: #{tpu_custom_call.1} parent=11 // pred_check
          %p620 = pneg %p334
        $region62: #{tpu_custom_call.1} parent=11 // pred_check_branch
          %622 = sbr.rel (%p620) target = $region64
        $region63: #{tpu_custom_call.1} parent=11 // pred_region
          _
        $region64: #{tpu_custom_call.1} parent=11 // pred_fallthru
          _
        // Predicated region
        $region65: #{tpu_custom_call.1} parent=11 // pred_check
          %p623 = pneg %p355
        $region66: #{tpu_custom_call.1} parent=11 // pred_check_branch
          %625 = sbr.rel (%p623) target = $region68
        $region67: #{tpu_custom_call.1} parent=11 // pred_region
          _
        $region68: #{tpu_custom_call.1} parent=11 // pred_fallthru
          _
        // Predicated region
        $region69: #{tpu_custom_call.1} parent=11 // pred_check
          %p626 = pneg %p376
        $region70: #{tpu_custom_call.1} parent=11 // pred_check_branch
          %628 = sbr.rel (%p626) target = $region72
        $region71: #{tpu_custom_call.1} parent=11 // pred_region
          %s630 = ssub.s32 1024, 1024
          %631 = vsyncadd [#allocation16], %s630
          %s632 = sshll.u32 [#allocation15], 4
          %s633 = int_to_ptr.vmem [resolvable:$true] %s632
          %638 = dma.hbm_to_vmem [thread:$0]  %s15, 1024, %s633, [#allocation16], 128, 128, 8
        $region72: #{tpu_custom_call.1} parent=11 // pred_fallthru
          _
        // Predicated region
        $region73: #{tpu_custom_call.1} parent=11 // pred_check
          %p639 = pneg %p397
        $region74: #{tpu_custom_call.1} parent=11 // pred_check_branch
          %641 = sbr.rel (%p639) target = $region76
        $region75: #{tpu_custom_call.1} parent=11 // pred_region
          _
        $region76: #{tpu_custom_call.1} parent=11 // pred_fallthru
          _
        // Predicated region
        $region77: #{tpu_custom_call.1} parent=11 // pred_check
          %p642 = pneg %p418
        $region78: #{tpu_custom_call.1} parent=11 // pred_check_branch
          %644 = sbr.rel (%p642) target = $region80
        $region79: #{tpu_custom_call.1} parent=11 // pred_region
          %s646 = ssub.s32 1024, 1024
          %647 = vsyncadd [#allocation16], %s646
          %s648 = sshll.u32 [#allocation17], 4
          %s649 = int_to_ptr.vmem [resolvable:$true] %s648
          %654 = dma.hbm_to_vmem [thread:$0]  %s17, 1024, %s649, [#allocation16], 128, 128, 8
        $region80: #{tpu_custom_call.1} parent=11 // pred_fallthru
          _
        // Predicated region
        $region81: #{tpu_custom_call.1} parent=11 // pred_check
          %p655 = pneg %p439
        $region82: #{tpu_custom_call.1} parent=11 // pred_check_branch
          %657 = sbr.rel (%p655) target = $region84
        $region83: #{tpu_custom_call.1} parent=11 // pred_region
          _
        $region84: #{tpu_custom_call.1} parent=11 // pred_fallthru
          _
        // Predicated region
        $region85: #{tpu_custom_call.1} parent=11 // pred_check
          %p658 = pneg %p460
        $region86: #{tpu_custom_call.1} parent=11 // pred_check_branch
          %660 = sbr.rel (%p658) target = $region88
        $region87: #{tpu_custom_call.1} parent=11 // pred_region
          _
        $region88: #{tpu_custom_call.1} parent=11 // pred_fallthru
          _
        // Predicated region
        $region89: #{tpu_custom_call.1} parent=11 // pred_check
          %p661 = pneg %p481
        $region90: #{tpu_custom_call.1} parent=11 // pred_check_branch
          %663 = sbr.rel (%p661) target = $region92
        $region91: #{tpu_custom_call.1} parent=11 // pred_region
          _
        $region92: #{tpu_custom_call.1} parent=11 // pred_fallthru
          _
      $region12: #{tpu_custom_call.1} parent=5 // pred_fallthru
        _
      %p664 = scmp.lt.s32.totalorder %s35, 2
      // Predicated region
      $region93: #{tpu_custom_call.1} parent=5 // pred_check
        %p665 = pneg %p664
      $region94: #{tpu_custom_call.1} parent=5 // pred_check_branch
        %667 = sbr.rel (%p665) target = $region96
      $region95: #{tpu_custom_call.1} parent=5 // pred_region
        // Predicated region
        $region97: #{tpu_custom_call.1} parent=95 // pred_check
          %p668 = pneg %p55
        $region98: #{tpu_custom_call.1} parent=95 // pred_check_branch
          %670 = sbr.rel (%p668) target = $region100
        $region99: #{tpu_custom_call.1} parent=95 // pred_region
          %p671 = scmp.lt.s32.totalorder %s35, 1
          %s672 = scalar_select %p671, %s35, 1
          %s673 = smul.addr %s672, 2
          %s674 = smul.addr %s673, 8
          %s675 = scalar_lea.vmem %s0, %s674
        $region100: #{tpu_custom_call.1} parent=95 // pred_fallthru
          _
      $region96: #{tpu_custom_call.1} parent=5 // pred_fallthru
        _
      %p676 = scmp.le.s32.totalorder 1, %s35
      %p677 = scmp.lt.s32.totalorder %s35, 3
      %p678 = pnand %p676, %p677
      %p679 = pneg %p678
      // Predicated region
      $region101: #{tpu_custom_call.1} parent=5 // pred_check
        _
      $region102: #{tpu_custom_call.1} parent=5 // pred_check_branch
        %681 = sbr.rel (%p678) target = $region104
      $region103: #{tpu_custom_call.1} parent=5 // pred_region
        %s682 = ssub.s32 %s35, 1
        // Predicated region
        $region105: #{tpu_custom_call.1} parent=103 // pred_check
          %p683 = pneg %p82
        $region106: #{tpu_custom_call.1} parent=103 // pred_check_branch
          %685 = sbr.rel (%p683) target = $region108
        $region107: #{tpu_custom_call.1} parent=103 // pred_region
          %686 = dma.done [#allocation4], 128
        $region108: #{tpu_custom_call.1} parent=103 // pred_fallthru
          _
        // Predicated region
        $region109: #{tpu_custom_call.1} parent=103 // pred_check
          %p687 = pneg %p124
        $region110: #{tpu_custom_call.1} parent=103 // pred_check_branch
          %689 = sbr.rel (%p687) target = $region112
        $region111: #{tpu_custom_call.1} parent=103 // pred_region
          %690 = dma.done [#allocation7], 1024
        $region112: #{tpu_custom_call.1} parent=103 // pred_fallthru
          _
        // Predicated region
        $region113: #{tpu_custom_call.1} parent=103 // pred_check
          %p691 = pneg %p187
        $region114: #{tpu_custom_call.1} parent=103 // pred_check_branch
          %693 = sbr.rel (%p691) target = $region116
        $region115: #{tpu_custom_call.1} parent=103 // pred_region
          %694 = dma.done [#allocation7], 16
        $region116: #{tpu_custom_call.1} parent=103 // pred_fallthru
          _
        // Predicated region
        $region117: #{tpu_custom_call.1} parent=103 // pred_check
          %p695 = pneg %p229
        $region118: #{tpu_custom_call.1} parent=103 // pred_check_branch
          %697 = sbr.rel (%p695) target = $region120
        $region119: #{tpu_custom_call.1} parent=103 // pred_region
          %698 = dma.done [#allocation10], 1024
        $region120: #{tpu_custom_call.1} parent=103 // pred_fallthru
          _
        // Predicated region
        $region121: #{tpu_custom_call.1} parent=103 // pred_check
          %p699 = pneg %p250
        $region122: #{tpu_custom_call.1} parent=103 // pred_check_branch
          %701 = sbr.rel (%p699) target = $region124
        $region123: #{tpu_custom_call.1} parent=103 // pred_region
          %702 = dma.done [#allocation10], 16
        $region124: #{tpu_custom_call.1} parent=103 // pred_fallthru
          _
        // Predicated region
        $region125: #{tpu_custom_call.1} parent=103 // pred_check
          %p703 = pneg %p271
        $region126: #{tpu_custom_call.1} parent=103 // pred_check_branch
          %705 = sbr.rel (%p703) target = $region128
        $region127: #{tpu_custom_call.1} parent=103 // pred_region
          %706 = dma.done [#allocation13], 1024
        $region128: #{tpu_custom_call.1} parent=103 // pred_fallthru
          _
        // Predicated region
        $region129: #{tpu_custom_call.1} parent=103 // pred_check
          %p707 = pneg %p292
        $region130: #{tpu_custom_call.1} parent=103 // pred_check_branch
          %709 = sbr.rel (%p707) target = $region132
        $region131: #{tpu_custom_call.1} parent=103 // pred_region
          %710 = dma.done [#allocation13], 16
        $region132: #{tpu_custom_call.1} parent=103 // pred_fallthru
          _
        // Predicated region
        $region133: #{tpu_custom_call.1} parent=103 // pred_check
          %p711 = pneg %p376
        $region134: #{tpu_custom_call.1} parent=103 // pred_check_branch
          %713 = sbr.rel (%p711) target = $region136
        $region135: #{tpu_custom_call.1} parent=103 // pred_region
          %714 = dma.done [#allocation16], 1024
        $region136: #{tpu_custom_call.1} parent=103 // pred_fallthru
          _
        // Predicated region
        $region137: #{tpu_custom_call.1} parent=103 // pred_check
          %p715 = pneg %p418
        $region138: #{tpu_custom_call.1} parent=103 // pred_check_branch
          %717 = sbr.rel (%p715) target = $region140
        $region139: #{tpu_custom_call.1} parent=103 // pred_region
          %718 = dma.done [#allocation16], 1024
        $region140: #{tpu_custom_call.1} parent=103 // pred_fallthru
          _
        %p719 = scmp.lt.s32.totalorder %s40, 1
        %s720 = scalar_select %p719, %s40, 1
        %s721 = smul.addr %s720, 2
        %s722 = smul.addr %s721, 8
        %s723 = scalar_lea.vmem %s0, %s722
        %p724 = pneg %p61
        %p725 = pneg %p58
        %p726 = pneg %p82
        %p727 = pneg %p79
        %p728 = pneg %p103
        %p729 = pneg %p100
        %p730 = pneg %p124
        %p731 = pneg %p121
        %p732 = pneg %p145
        %p733 = pneg %p142
        %p734 = pneg %p166
        %p735 = pneg %p163
        %p736 = pneg %p187
        %p737 = pneg %p184
        %p738 = pneg %p208
        %p739 = pneg %p205
        %p740 = pneg %p229
        %p741 = pneg %p226
        %p742 = pneg %p250
        %p743 = pneg %p247
        %p744 = pneg %p271
        %p745 = pneg %p268
        %p746 = pneg %p292
        %p747 = pneg %p289
        %p748 = pneg %p313
        %p749 = pneg %p310
        %p750 = pneg %p334
        %p751 = pneg %p331
        %p752 = pneg %p355
        %p753 = pneg %p352
        %p754 = pneg %p376
        %p755 = pneg %p373
        %p756 = pneg %p397
        %p757 = pneg %p394
        %p758 = pneg %p418
        %p759 = pneg %p415
        %p760 = pneg %p439
        %p761 = pneg %p436
        %p762 = pneg %p460
        %p763 = pneg %p457
        %p764 = pneg %p481
        %p765 = pneg %p478
        %p766 = pneg %p507
        %p767 = pneg %p504
        %s768 = sand.u32 %s494, 1
        %s769 = scalar_lea.sflag [#allocation5], %s768
        %s770 = sand.u32 %s494, 1
        %s771 = scalar_lea.vmem [#allocation18], %s770
        %p772 = scmp.lt.s32.totalorder %s40, 1
        %s773 = scalar_select %p772, %s40, 1
        %s774 = smul.addr %s773, 2
        %s775 = smul.addr %s774, 8
        %s776 = scalar_lea.vmem %s0, %s775
        %v777 = vld [vmem:[%s776] sm:$0xff]
        %v778 = vld [vmem:[%s776 + $0x8] sm:$0xff]
        %v779 = vld [vmem:[#allocation3] sm:$0xff]
        %v780 = vld [vmem:[%s2] sm:$0x1]
        %v782 = vlaneseq
        %v783 = vshrl.u32 %v782, 7
        %v784 = vsub.s32 0, %v783
        %v785 = vrot.slane %v780, %v784
        %vm787 = vcmask 64512
        %v789 = vsel %vm787, %v777, 0
        %v792 = vsel %vm787, %v778, 0
        %794 = vmatprep.subr.mxu0 0.0
        %795 = vmatpush1.msra.mxu0 0.0
        %796 = vmatprep.subr.mxu0 0.0
        %797 = vmatpush1.msra.mxu0 0.0
        %798 = vmatprep.subr.mxu0 0.0
        %799 = vmatpush1.msra.mxu0 0.0
        %800 = vmatprep.subr.mxu0 0.0
        %801 = vmatpush1.msra.mxu0 0.0
        %802 = vmatprep.subr.mxu0 0.0
        %803 = vmatpush1.msra.mxu0 0.0
        %804 = vmatprep.subr.mxu0 0.0
        %805 = vmatpush1.msra.mxu0 0.0
        %806 = vmatprep.subr.mxu0 0.0
        %807 = vmatpush1.msra.mxu0 0.0
        %808 = vmatprep.subr.mxu0 0.0
        %809 = vmatpush1.msra.mxu0 0.0
        %810 = vmatprep.subr.mxu0 0.0
        %811 = vmatpush1.msra.mxu0 0.0
        %812 = vmatprep.subr.mxu0 0.0
        %813 = vmatpush1.msra.mxu0 0.0
        %814 = vmatprep.subr.mxu0 0.0
        %815 = vmatpush1.msra.mxu0 0.0
        %816 = vmatprep.subr.mxu0 0.0
        %817 = vmatpush1.msra.mxu0 0.0
        %818 = vmatprep.subr.mxu0 0.0
        %819 = vmatpush1.msra.mxu0 0.0
        %820 = vmatprep.subr.mxu0 0.0
        %821 = vmatpush1.msra.mxu0 0.0
        %822 = vmatprep.subr.mxu0 0.0
        %823 = vmatpush1.msra.mxu0 0.0
        %824 = vmatprep.subr.mxu0 0.0
        %825 = vmatpush1.msra.mxu0 %v779
        %826 = vmatprep.subr.mxu0 0.0
        %827 = vmatpush2.msra.mxu0 0.0
        %828 = vmatprep.subr.mxu0 0.0
        %829 = vmatpush2.msra.mxu0 0.0
        %830 = vmatprep.subr.mxu0 0.0
        %831 = vmatpush2.msra.mxu0 0.0
        %832 = vmatprep.subr.mxu0 0.0
        %833 = vmatpush2.msra.mxu0 0.0
        %834 = vmatprep.subr.mxu0 0.0
        %835 = vmatpush2.msra.mxu0 0.0
        %836 = vmatprep.subr.mxu0 0.0
        %837 = vmatpush2.msra.mxu0 0.0
        %838 = vmatprep.subr.mxu0 0.0
        %839 = vmatpush2.msra.mxu0 0.0
        %840 = vmatprep.subr.mxu0 0.0
        %841 = vmatpush2.msra.mxu0 0.0
        %842 = vmatprep.subr.mxu0 0.0
        %843 = vmatpush2.msra.mxu0 0.0
        %844 = vmatprep.subr.mxu0 0.0
        %845 = vmatpush2.msra.mxu0 0.0
        %846 = vmatprep.subr.mxu0 0.0
        %847 = vmatpush2.msra.mxu0 0.0
        %848 = vmatprep.subr.mxu0 0.0
        %849 = vmatpush2.msra.mxu0 0.0
        %850 = vmatprep.subr.mxu0 0.0
        %851 = vmatpush2.msra.mxu0 0.0
        %852 = vmatprep.subr.mxu0 0.0
        %853 = vmatpush2.msra.mxu0 0.0
        %854 = vmatprep.subr.mxu0 0.0
        %855 = vmatpush2.msra.mxu0 0.0
        %856 = vmatprep.subr.mxu0 0.0
        %857 = vmatpush2.msra.mxu0 0.0
        %858 = vmatprep.mubr.f32.mxu0 0.0
        %859 = vmatmul.mubr.f32.gmra.mxu0 %v789
        %v860 = vpop.f32.mrf.mxu0
        %v861 = vadd.f32 %v785, %v860
        %v862 = vpop.f32.mrf.mxu0
        %863 = vmatprep.mubr.f32.mxu0 0.0
        %864 = vmatmul.mubr.f32.gmra.mxu0 %v792
        %v865 = vpop.f32.mrf.mxu0
        %v866 = vadd.f32 %v785, %v865
        %v867 = vpop.f32.mrf.mxu0
        %868 = vdwg.mxu0
        %v869 = vmax.f32 %v861, 0.0
        %v870 = vmax.f32 %v866, 0.0
        %vm871 = vcmask 523264
        %872 = vst.msk [vmem:[#allocation2] sm:$0xff] %vm871, %v869
        %873 = vst.msk [vmem:[#allocation2 + $0x8] sm:$0xff] %vm871, %v870
        %v874 = vld [vmem:[#allocation6] sm:$0xff]
        %v875 = vld [vmem:[#allocation6 + $0x8] sm:$0xff]
        %v876 = vld [vmem:[#allocation6 + $0x10] sm:$0xff]
        %v877 = vld [vmem:[#allocation6 + $0x18] sm:$0xff]
        %v878 = vld [vmem:[#allocation6 + $0x20] sm:$0xff]
        %v879 = vld [vmem:[#allocation6 + $0x28] sm:$0xff]
        %v880 = vld [vmem:[#allocation6 + $0x30] sm:$0xff]
        %v881 = vld [vmem:[#allocation6 + $0x38] sm:$0xff]
        %v882 = vld [vmem:[%s4] sm:$0x1]
        %v884 = vlaneseq
        %v885 = vshrl.u32 %v884, 7
        %v886 = vsub.s32 0, %v885
        %v887 = vrot.slane %v882, %v886
        %v890 = vsel %vm871, %v869, 0
        %v893 = vsel %vm871, %v870, 0
        %895 = vmatprep.subr.mxu0 0.0
        %896 = vmatpush1.msra.mxu0 0.0
        %897 = vmatprep.subr.mxu0 0.0
        %898 = vmatpush1.msra.mxu0 0.0
        %899 = vmatprep.subr.mxu0 0.0
        %900 = vmatpush1.msra.mxu0 0.0
        %901 = vmatprep.subr.mxu0 0.0
        %902 = vmatpush1.msra.mxu0 0.0
        %903 = vmatprep.subr.mxu0 0.0
        %904 = vmatpush1.msra.mxu0 0.0
        %905 = vmatprep.subr.mxu0 0.0
        %906 = vmatpush1.msra.mxu0 0.0
        %907 = vmatprep.subr.mxu0 0.0
        %908 = vmatpush1.msra.mxu0 0.0
        %909 = vmatprep.subr.mxu0 0.0
        %910 = vmatpush1.msra.mxu0 0.0
        %911 = vmatprep.subr.mxu0 0.0
        %912 = vmatpush1.msra.mxu0 %v881
        %913 = vmatprep.subr.mxu0 0.0
        %914 = vmatpush1.msra.mxu0 %v880
        %915 = vmatprep.subr.mxu0 0.0
        %916 = vmatpush1.msra.mxu0 %v879
        %917 = vmatprep.subr.mxu0 0.0
        %918 = vmatpush1.msra.mxu0 %v878
        %919 = vmatprep.subr.mxu0 0.0
        %920 = vmatpush1.msra.mxu0 %v877
        %921 = vmatprep.subr.mxu0 0.0
        %922 = vmatpush1.msra.mxu0 %v876
        %923 = vmatprep.subr.mxu0 0.0
        %924 = vmatpush1.msra.mxu0 %v875
        %925 = vmatprep.subr.mxu0 0.0
        %926 = vmatpush1.msra.mxu0 %v874
        %927 = vmatprep.subr.mxu0 0.0
        %928 = vmatpush2.msra.mxu0 0.0
        %929 = vmatprep.subr.mxu0 0.0
        %930 = vmatpush2.msra.mxu0 0.0
        %931 = vmatprep.subr.mxu0 0.0
        %932 = vmatpush2.msra.mxu0 0.0
        %933 = vmatprep.subr.mxu0 0.0
        %934 = vmatpush2.msra.mxu0 0.0
        %935 = vmatprep.subr.mxu0 0.0
        %936 = vmatpush2.msra.mxu0 0.0
        %937 = vmatprep.subr.mxu0 0.0
        %938 = vmatpush2.msra.mxu0 0.0
        %939 = vmatprep.subr.mxu0 0.0
        %940 = vmatpush2.msra.mxu0 0.0
        %941 = vmatprep.subr.mxu0 0.0
        %942 = vmatpush2.msra.mxu0 0.0
        %943 = vmatprep.subr.mxu0 0.0
        %944 = vmatpush2.msra.mxu0 0.0
        %945 = vmatprep.subr.mxu0 0.0
        %946 = vmatpush2.msra.mxu0 0.0
        %947 = vmatprep.subr.mxu0 0.0
        %948 = vmatpush2.msra.mxu0 0.0
        %949 = vmatprep.subr.mxu0 0.0
        %950 = vmatpush2.msra.mxu0 0.0
        %951 = vmatprep.subr.mxu0 0.0
        %952 = vmatpush2.msra.mxu0 0.0
        %953 = vmatprep.subr.mxu0 0.0
        %954 = vmatpush2.msra.mxu0 0.0
        %955 = vmatprep.subr.mxu0 0.0
        %956 = vmatpush2.msra.mxu0 0.0
        %957 = vmatprep.subr.mxu0 0.0
        %958 = vmatpush2.msra.mxu0 0.0
        %959 = vmatprep.mubr.f32.mxu0 0.0
        %960 = vmatmul.mubr.f32.gmra.mxu0 %v890
        %v961 = vpop.f32.mrf.mxu0
        %v962 = vadd.f32 %v887, %v961
        %v963 = vpop.f32.mrf.mxu0
        %964 = vmatprep.mubr.f32.mxu0 0.0
        %965 = vmatmul.mubr.f32.gmra.mxu0 %v893
        %v966 = vpop.f32.mrf.mxu0
        %v967 = vadd.f32 %v887, %v966
        %v968 = vpop.f32.mrf.mxu0
        %969 = vdwg.mxu0
        %v970 = vmax.f32 %v962, 0.0
        %v971 = vmax.f32 %v967, 0.0
        %v972 = vld [vmem:[%s5] sm:$0xff]
        %v973 = vld [vmem:[%s5 + $0x8] sm:$0xff]
        %v974 = vld [vmem:[%s5 + $0x10] sm:$0xff]
        %v975 = vld [vmem:[%s5 + $0x18] sm:$0xff]
        %v976 = vld [vmem:[%s5 + $0x20] sm:$0xff]
        %v977 = vld [vmem:[%s5 + $0x28] sm:$0xff]
        %v978 = vld [vmem:[%s5 + $0x30] sm:$0xff]
        %v979 = vld [vmem:[%s5 + $0x38] sm:$0xff]
        %v980 = vld [vmem:[%s5 + $0x40] sm:$0xff]
        %v981 = vld [vmem:[%s5 + $0x48] sm:$0xff]
        %v982 = vld [vmem:[%s5 + $0x50] sm:$0xff]
        %v983 = vld [vmem:[%s5 + $0x58] sm:$0xff]
        %v984 = vld [vmem:[%s5 + $0x60] sm:$0xff]
        %v985 = vld [vmem:[%s5 + $0x68] sm:$0xff]
        %v986 = vld [vmem:[%s5 + $0x70] sm:$0xff]
        %v987 = vld [vmem:[%s5 + $0x78] sm:$0xff]
        %988 = vmatprep.subr.mxu0 0.0
        %989 = vmatpush1.msra.mxu0 %v987
        %990 = vmatprep.subr.mxu0 0.0
        %991 = vmatpush1.msra.mxu0 %v986
        %992 = vmatprep.subr.mxu0 0.0
        %993 = vmatpush1.msra.mxu0 %v985
        %994 = vmatprep.subr.mxu0 0.0
        %995 = vmatpush1.msra.mxu0 %v984
        %996 = vmatprep.subr.mxu0 0.0
        %997 = vmatpush1.msra.mxu0 %v983
        %998 = vmatprep.subr.mxu0 0.0
        %999 = vmatpush1.msra.mxu0 %v982
        %1000 = vmatprep.subr.mxu0 0.0
        %1001 = vmatpush1.msra.mxu0 %v981
        %1002 = vmatprep.subr.mxu0 0.0
        %1003 = vmatpush1.msra.mxu0 %v980
        %1004 = vmatprep.subr.mxu0 0.0
        %1005 = vmatpush1.msra.mxu0 %v979
        %1006 = vmatprep.subr.mxu0 0.0
        %1007 = vmatpush1.msra.mxu0 %v978
        %1008 = vmatprep.subr.mxu0 0.0
        %1009 = vmatpush1.msra.mxu0 %v977
        %1010 = vmatprep.subr.mxu0 0.0
        %1011 = vmatpush1.msra.mxu0 %v976
        %1012 = vmatprep.subr.mxu0 0.0
        %1013 = vmatpush1.msra.mxu0 %v975
        %1014 = vmatprep.subr.mxu0 0.0
        %1015 = vmatpush1.msra.mxu0 %v974
        %1016 = vmatprep.subr.mxu0 0.0
        %1017 = vmatpush1.msra.mxu0 %v973
        %1018 = vmatprep.subr.mxu0 0.0
        %1019 = vmatpush1.msra.mxu0 %v972
        %1020 = vmatprep.subr.mxu0 0.0
        %1021 = vmatpush2.msra.mxu0 0.0
        %1022 = vmatprep.subr.mxu0 0.0
        %1023 = vmatpush2.msra.mxu0 0.0
        %1024 = vmatprep.subr.mxu0 0.0
        %1025 = vmatpush2.msra.mxu0 0.0
        %1026 = vmatprep.subr.mxu0 0.0
        %1027 = vmatpush2.msra.mxu0 0.0
        %1028 = vmatprep.subr.mxu0 0.0
        %1029 = vmatpush2.msra.mxu0 0.0
        %1030 = vmatprep.subr.mxu0 0.0
        %1031 = vmatpush2.msra.mxu0 0.0
        %1032 = vmatprep.subr.mxu0 0.0
        %1033 = vmatpush2.msra.mxu0 0.0
        %1034 = vmatprep.subr.mxu0 0.0
        %1035 = vmatpush2.msra.mxu0 0.0
        %1036 = vmatprep.subr.mxu0 0.0
        %1037 = vmatpush2.msra.mxu0 0.0
        %1038 = vmatprep.subr.mxu0 0.0
        %1039 = vmatpush2.msra.mxu0 0.0
        %1040 = vmatprep.subr.mxu0 0.0
        %1041 = vmatpush2.msra.mxu0 0.0
        %1042 = vmatprep.subr.mxu0 0.0
        %1043 = vmatpush2.msra.mxu0 0.0
        %1044 = vmatprep.subr.mxu0 0.0
        %1045 = vmatpush2.msra.mxu0 0.0
        %1046 = vmatprep.subr.mxu0 0.0
        %1047 = vmatpush2.msra.mxu0 0.0
        %1048 = vmatprep.subr.mxu0 0.0
        %1049 = vmatpush2.msra.mxu0 0.0
        %1050 = vmatprep.subr.mxu0 0.0
        %1051 = vmatpush2.msra.mxu0 0.0
        %1052 = vmatprep.mubr.f32.mxu0 0.0
        %1053 = vmatmul.mubr.f32.gmra.mxu0 %v970
        %v1054 = vpop.f32.mrf.mxu0
        %v1055 = vadd.f32 0.0, %v1054
        %v1056 = vpop.f32.mrf.mxu0
        %1057 = vmatprep.mubr.f32.mxu0 0.0
        %1058 = vmatmul.mubr.f32.gmra.mxu0 %v971
        %v1059 = vpop.f32.mrf.mxu0
        %v1060 = vadd.f32 0.0, %v1059
        %v1061 = vpop.f32.mrf.mxu0
        %1062 = vdwg.mxu0
        %v1063 = vmax.f32 %v1055, %v1060
        %v1064 = vrot.slane %v1063, 4
        %v1065 = vmax.f32 %v1063, %v1064
        %v1066 = vrot.slane %v1065, 2
        %v1067 = vmax.f32 %v1065, %v1066
        %v1068 = vrot.slane %v1067, 1
        %v1069 = vmax.f32 %v1067, %v1068
        %v1070 = vld [vmem:[#allocation8] sm:$0x1]
        %v1071 = vadd.f32 %v1069, %v1070
        %v1072 = vld [vmem:[%s7] sm:$0xff]
        %v1073 = vld [vmem:[%s7 + $0x8] sm:$0xff]
        %v1074 = vld [vmem:[%s7 + $0x10] sm:$0xff]
        %v1075 = vld [vmem:[%s7 + $0x18] sm:$0xff]
        %v1076 = vld [vmem:[%s7 + $0x20] sm:$0xff]
        %v1077 = vld [vmem:[%s7 + $0x28] sm:$0xff]
        %v1078 = vld [vmem:[%s7 + $0x30] sm:$0xff]
        %v1079 = vld [vmem:[%s7 + $0x38] sm:$0xff]
        %v1080 = vld [vmem:[%s7 + $0x40] sm:$0xff]
        %v1081 = vld [vmem:[%s7 + $0x48] sm:$0xff]
        %v1082 = vld [vmem:[%s7 + $0x50] sm:$0xff]
        %v1083 = vld [vmem:[%s7 + $0x58] sm:$0xff]
        %v1084 = vld [vmem:[%s7 + $0x60] sm:$0xff]
        %v1085 = vld [vmem:[%s7 + $0x68] sm:$0xff]
        %v1086 = vld [vmem:[%s7 + $0x70] sm:$0xff]
        %v1087 = vld [vmem:[%s7 + $0x78] sm:$0xff]
        %v1088 = vld [vmem:[#allocation11] sm:$0x1]
        %1089 = vmatprep.subr.mxu0 0.0
        %1090 = vmatpush1.msra.mxu0 %v1087
        %1091 = vmatprep.subr.mxu0 0.0
        %1092 = vmatpush1.msra.mxu0 %v1086
        %1093 = vmatprep.subr.mxu0 0.0
        %1094 = vmatpush1.msra.mxu0 %v1085
        %1095 = vmatprep.subr.mxu0 0.0
        %1096 = vmatpush1.msra.mxu0 %v1084
        %1097 = vmatprep.subr.mxu0 0.0
        %1098 = vmatpush1.msra.mxu0 %v1083
        %1099 = vmatprep.subr.mxu0 0.0
        %1100 = vmatpush1.msra.mxu0 %v1082
        %1101 = vmatprep.subr.mxu0 0.0
        %1102 = vmatpush1.msra.mxu0 %v1081
        %1103 = vmatprep.subr.mxu0 0.0
        %1104 = vmatpush1.msra.mxu0 %v1080
        %1105 = vmatprep.subr.mxu0 0.0
        %1106 = vmatpush1.msra.mxu0 %v1079
        %1107 = vmatprep.subr.mxu0 0.0
        %1108 = vmatpush1.msra.mxu0 %v1078
        %1109 = vmatprep.subr.mxu0 0.0
        %1110 = vmatpush1.msra.mxu0 %v1077
        %1111 = vmatprep.subr.mxu0 0.0
        %1112 = vmatpush1.msra.mxu0 %v1076
        %1113 = vmatprep.subr.mxu0 0.0
        %1114 = vmatpush1.msra.mxu0 %v1075
        %1115 = vmatprep.subr.mxu0 0.0
        %1116 = vmatpush1.msra.mxu0 %v1074
        %1117 = vmatprep.subr.mxu0 0.0
        %1118 = vmatpush1.msra.mxu0 %v1073
        %1119 = vmatprep.subr.mxu0 0.0
        %1120 = vmatpush1.msra.mxu0 %v1072
        %1121 = vmatprep.subr.mxu0 0.0
        %1122 = vmatpush2.msra.mxu0 0.0
        %1123 = vmatprep.subr.mxu0 0.0
        %1124 = vmatpush2.msra.mxu0 0.0
        %1125 = vmatprep.subr.mxu0 0.0
        %1126 = vmatpush2.msra.mxu0 0.0
        %1127 = vmatprep.subr.mxu0 0.0
        %1128 = vmatpush2.msra.mxu0 0.0
        %1129 = vmatprep.subr.mxu0 0.0
        %1130 = vmatpush2.msra.mxu0 0.0
        %1131 = vmatprep.subr.mxu0 0.0
        %1132 = vmatpush2.msra.mxu0 0.0
        %1133 = vmatprep.subr.mxu0 0.0
        %1134 = vmatpush2.msra.mxu0 0.0
        %1135 = vmatprep.subr.mxu0 0.0
        %1136 = vmatpush2.msra.mxu0 0.0
        %1137 = vmatprep.subr.mxu0 0.0
        %1138 = vmatpush2.msra.mxu0 0.0
        %1139 = vmatprep.subr.mxu0 0.0
        %1140 = vmatpush2.msra.mxu0 0.0
        %1141 = vmatprep.subr.mxu0 0.0
        %1142 = vmatpush2.msra.mxu0 0.0
        %1143 = vmatprep.subr.mxu0 0.0
        %1144 = vmatpush2.msra.mxu0 0.0
        %1145 = vmatprep.subr.mxu0 0.0
        %1146 = vmatpush2.msra.mxu0 0.0
        %1147 = vmatprep.subr.mxu0 0.0
        %1148 = vmatpush2.msra.mxu0 0.0
        %1149 = vmatprep.subr.mxu0 0.0
        %1150 = vmatpush2.msra.mxu0 0.0
        %1151 = vmatprep.subr.mxu0 0.0
        %1152 = vmatpush2.msra.mxu0 0.0
        %1153 = vmatprep.mubr.f32.mxu0 0.0
        %1154 = vmatmul.mubr.f32.gmra.mxu0 %v1071
        %v1155 = vpop.f32.mrf.mxu0
        %v1156 = vadd.f32 %v1088, %v1155
        %v1157 = vpop.f32.mrf.mxu0
        %1158 = vdwg.mxu0
        %v1159 = vld [vmem:[#allocation2] sm:$0xff]
        %v1160 = vld [vmem:[#allocation2 + $0x8] sm:$0xff]
        %v1161 = vld [vmem:[#allocation9] sm:$0xff]
        %v1162 = vld [vmem:[#allocation9 + $0x8] sm:$0xff]
        %v1163 = vld [vmem:[#allocation9 + $0x10] sm:$0xff]
        %v1164 = vld [vmem:[#allocation9 + $0x18] sm:$0xff]
        %v1165 = vld [vmem:[#allocation9 + $0x20] sm:$0xff]
        %v1166 = vld [vmem:[#allocation9 + $0x28] sm:$0xff]
        %v1167 = vld [vmem:[#allocation9 + $0x30] sm:$0xff]
        %v1168 = vld [vmem:[#allocation9 + $0x38] sm:$0xff]
        %v1169 = vlaneseq
        %v1170 = vshrl.u32 %v1169, 7
        %v1171 = vsub.s32 0, %v1170
        %v1172 = vrot.slane %v1156, %v1171
        %v1174 = vsel %vm871, %v1159, 0
        %v1177 = vsel %vm871, %v1160, 0
        %1179 = vmatprep.subr.mxu0 0.0
        %1180 = vmatpush1.msra.mxu0 0.0
        %1181 = vmatprep.subr.mxu0 0.0
        %1182 = vmatpush1.msra.mxu0 0.0
        %1183 = vmatprep.subr.mxu0 0.0
        %1184 = vmatpush1.msra.mxu0 0.0
        %1185 = vmatprep.subr.mxu0 0.0
        %1186 = vmatpush1.msra.mxu0 0.0
        %1187 = vmatprep.subr.mxu0 0.0
        %1188 = vmatpush1.msra.mxu0 0.0
        %1189 = vmatprep.subr.mxu0 0.0
        %1190 = vmatpush1.msra.mxu0 0.0
        %1191 = vmatprep.subr.mxu0 0.0
        %1192 = vmatpush1.msra.mxu0 0.0
        %1193 = vmatprep.subr.mxu0 0.0
        %1194 = vmatpush1.msra.mxu0 0.0
        %1195 = vmatprep.subr.mxu0 0.0
        %1196 = vmatpush1.msra.mxu0 %v1168
        %1197 = vmatprep.subr.mxu0 0.0
        %1198 = vmatpush1.msra.mxu0 %v1167
        %1199 = vmatprep.subr.mxu0 0.0
        %1200 = vmatpush1.msra.mxu0 %v1166
        %1201 = vmatprep.subr.mxu0 0.0
        %1202 = vmatpush1.msra.mxu0 %v1165
        %1203 = vmatprep.subr.mxu0 0.0
        %1204 = vmatpush1.msra.mxu0 %v1164
        %1205 = vmatprep.subr.mxu0 0.0
        %1206 = vmatpush1.msra.mxu0 %v1163
        %1207 = vmatprep.subr.mxu0 0.0
        %1208 = vmatpush1.msra.mxu0 %v1162
        %1209 = vmatprep.subr.mxu0 0.0
        %1210 = vmatpush1.msra.mxu0 %v1161
        %1211 = vmatprep.subr.mxu0 0.0
        %1212 = vmatpush2.msra.mxu0 0.0
        %1213 = vmatprep.subr.mxu0 0.0
        %1214 = vmatpush2.msra.mxu0 0.0
        %1215 = vmatprep.subr.mxu0 0.0
        %1216 = vmatpush2.msra.mxu0 0.0
        %1217 = vmatprep.subr.mxu0 0.0
        %1218 = vmatpush2.msra.mxu0 0.0
        %1219 = vmatprep.subr.mxu0 0.0
        %1220 = vmatpush2.msra.mxu0 0.0
        %1221 = vmatprep.subr.mxu0 0.0
        %1222 = vmatpush2.msra.mxu0 0.0
        %1223 = vmatprep.subr.mxu0 0.0
        %1224 = vmatpush2.msra.mxu0 0.0
        %1225 = vmatprep.subr.mxu0 0.0
        %1226 = vmatpush2.msra.mxu0 0.0
        %1227 = vmatprep.subr.mxu0 0.0
        %1228 = vmatpush2.msra.mxu0 0.0
        %1229 = vmatprep.subr.mxu0 0.0
        %1230 = vmatpush2.msra.mxu0 0.0
        %1231 = vmatprep.subr.mxu0 0.0
        %1232 = vmatpush2.msra.mxu0 0.0
        %1233 = vmatprep.subr.mxu0 0.0
        %1234 = vmatpush2.msra.mxu0 0.0
        %1235 = vmatprep.subr.mxu0 0.0
        %1236 = vmatpush2.msra.mxu0 0.0
        %1237 = vmatprep.subr.mxu0 0.0
        %1238 = vmatpush2.msra.mxu0 0.0
        %1239 = vmatprep.subr.mxu0 0.0
        %1240 = vmatpush2.msra.mxu0 0.0
        %1241 = vmatprep.subr.mxu0 0.0
        %1242 = vmatpush2.msra.mxu0 0.0
        %1243 = vmatprep.mubr.f32.mxu0 0.0
        %1244 = vmatmul.mubr.f32.gmra.mxu0 %v1174
        %v1245 = vpop.f32.mrf.mxu0
        %v1246 = vadd.f32 %v1172, %v1245
        %v1247 = vpop.f32.mrf.mxu0
        %1248 = vmatprep.mubr.f32.mxu0 0.0
        %1249 = vmatmul.mubr.f32.gmra.mxu0 %v1177
        %v1250 = vpop.f32.mrf.mxu0
        %v1251 = vadd.f32 %v1172, %v1250
        %v1252 = vpop.f32.mrf.mxu0
        %1253 = vdwg.mxu0
        %v1254 = vmax.f32 %v1246, 0.0
        %v1255 = vmax.f32 %v1251, 0.0
        %1256 = vst.msk [vmem:[#allocation2] sm:$0xff] %vm871, %v1254
        %1257 = vst.msk [vmem:[#allocation2 + $0x8] sm:$0xff] %vm871, %v1255
        %v1258 = vld [vmem:[#allocation12] sm:$0xff]
        %v1259 = vld [vmem:[#allocation12 + $0x8] sm:$0xff]
        %v1260 = vld [vmem:[#allocation12 + $0x10] sm:$0xff]
        %v1261 = vld [vmem:[#allocation12 + $0x18] sm:$0xff]
        %v1262 = vld [vmem:[#allocation12 + $0x20] sm:$0xff]
        %v1263 = vld [vmem:[#allocation12 + $0x28] sm:$0xff]
        %v1264 = vld [vmem:[#allocation12 + $0x30] sm:$0xff]
        %v1265 = vld [vmem:[#allocation12 + $0x38] sm:$0xff]
        %v1266 = vld [vmem:[#allocation14] sm:$0x1]
        %v1268 = vlaneseq
        %v1269 = vshrl.u32 %v1268, 7
        %v1270 = vsub.s32 0, %v1269
        %v1271 = vrot.slane %v1266, %v1270
        %v1274 = vsel %vm871, %v1254, 0
        %v1277 = vsel %vm871, %v1255, 0
        %1279 = vmatprep.subr.mxu0 0.0
        %1280 = vmatpush1.msra.mxu0 0.0
        %1281 = vmatprep.subr.mxu0 0.0
        %1282 = vmatpush1.msra.mxu0 0.0
        %1283 = vmatprep.subr.mxu0 0.0
        %1284 = vmatpush1.msra.mxu0 0.0
        %1285 = vmatprep.subr.mxu0 0.0
        %1286 = vmatpush1.msra.mxu0 0.0
        %1287 = vmatprep.subr.mxu0 0.0
        %1288 = vmatpush1.msra.mxu0 0.0
        %1289 = vmatprep.subr.mxu0 0.0
        %1290 = vmatpush1.msra.mxu0 0.0
        %1291 = vmatprep.subr.mxu0 0.0
        %1292 = vmatpush1.msra.mxu0 0.0
        %1293 = vmatprep.subr.mxu0 0.0
        %1294 = vmatpush1.msra.mxu0 0.0
        %1295 = vmatprep.subr.mxu0 0.0
        %1296 = vmatpush1.msra.mxu0 %v1265
        %1297 = vmatprep.subr.mxu0 0.0
        %1298 = vmatpush1.msra.mxu0 %v1264
        %1299 = vmatprep.subr.mxu0 0.0
        %1300 = vmatpush1.msra.mxu0 %v1263
        %1301 = vmatprep.subr.mxu0 0.0
        %1302 = vmatpush1.msra.mxu0 %v1262
        %1303 = vmatprep.subr.mxu0 0.0
        %1304 = vmatpush1.msra.mxu0 %v1261
        %1305 = vmatprep.subr.mxu0 0.0
        %1306 = vmatpush1.msra.mxu0 %v1260
        %1307 = vmatprep.subr.mxu0 0.0
        %1308 = vmatpush1.msra.mxu0 %v1259
        %1309 = vmatprep.subr.mxu0 0.0
        %1310 = vmatpush1.msra.mxu0 %v1258
        %1311 = vmatprep.subr.mxu0 0.0
        %1312 = vmatpush2.msra.mxu0 0.0
        %1313 = vmatprep.subr.mxu0 0.0
        %1314 = vmatpush2.msra.mxu0 0.0
        %1315 = vmatprep.subr.mxu0 0.0
        %1316 = vmatpush2.msra.mxu0 0.0
        %1317 = vmatprep.subr.mxu0 0.0
        %1318 = vmatpush2.msra.mxu0 0.0
        %1319 = vmatprep.subr.mxu0 0.0
        %1320 = vmatpush2.msra.mxu0 0.0
        %1321 = vmatprep.subr.mxu0 0.0
        %1322 = vmatpush2.msra.mxu0 0.0
        %1323 = vmatprep.subr.mxu0 0.0
        %1324 = vmatpush2.msra.mxu0 0.0
        %1325 = vmatprep.subr.mxu0 0.0
        %1326 = vmatpush2.msra.mxu0 0.0
        %1327 = vmatprep.subr.mxu0 0.0
        %1328 = vmatpush2.msra.mxu0 0.0
        %1329 = vmatprep.subr.mxu0 0.0
        %1330 = vmatpush2.msra.mxu0 0.0
        %1331 = vmatprep.subr.mxu0 0.0
        %1332 = vmatpush2.msra.mxu0 0.0
        %1333 = vmatprep.subr.mxu0 0.0
        %1334 = vmatpush2.msra.mxu0 0.0
        %1335 = vmatprep.subr.mxu0 0.0
        %1336 = vmatpush2.msra.mxu0 0.0
        %1337 = vmatprep.subr.mxu0 0.0
        %1338 = vmatpush2.msra.mxu0 0.0
        %1339 = vmatprep.subr.mxu0 0.0
        %1340 = vmatpush2.msra.mxu0 0.0
        %1341 = vmatprep.subr.mxu0 0.0
        %1342 = vmatpush2.msra.mxu0 0.0
        %1343 = vmatprep.mubr.f32.mxu0 0.0
        %1344 = vmatmul.mubr.f32.gmra.mxu0 %v1274
        %v1345 = vpop.f32.mrf.mxu0
        %v1346 = vadd.f32 %v1271, %v1345
        %v1347 = vpop.f32.mrf.mxu0
        %1348 = vmatprep.mubr.f32.mxu0 0.0
        %1349 = vmatmul.mubr.f32.gmra.mxu0 %v1277
        %v1350 = vpop.f32.mrf.mxu0
        %v1351 = vadd.f32 %v1271, %v1350
        %v1352 = vpop.f32.mrf.mxu0
        %1353 = vdwg.mxu0
        %v1354 = vmax.f32 %v1346, 0.0
        %v1355 = vmax.f32 %v1351, 0.0
        %v1356 = vld [vmem:[%s12] sm:$0xff]
        %v1357 = vld [vmem:[%s12 + $0x8] sm:$0xff]
        %v1358 = vld [vmem:[%s12 + $0x10] sm:$0xff]
        %v1359 = vld [vmem:[%s12 + $0x18] sm:$0xff]
        %v1360 = vld [vmem:[%s12 + $0x20] sm:$0xff]
        %v1361 = vld [vmem:[%s12 + $0x28] sm:$0xff]
        %v1362 = vld [vmem:[%s12 + $0x30] sm:$0xff]
        %v1363 = vld [vmem:[%s12 + $0x38] sm:$0xff]
        %v1364 = vld [vmem:[%s12 + $0x40] sm:$0xff]
        %v1365 = vld [vmem:[%s12 + $0x48] sm:$0xff]
        %v1366 = vld [vmem:[%s12 + $0x50] sm:$0xff]
        %v1367 = vld [vmem:[%s12 + $0x58] sm:$0xff]
        %v1368 = vld [vmem:[%s12 + $0x60] sm:$0xff]
        %v1369 = vld [vmem:[%s12 + $0x68] sm:$0xff]
        %v1370 = vld [vmem:[%s12 + $0x70] sm:$0xff]
        %v1371 = vld [vmem:[%s12 + $0x78] sm:$0xff]
        %1372 = vmatprep.subr.mxu0 0.0
        %1373 = vmatpush1.msra.mxu0 %v1371
        %1374 = vmatprep.subr.mxu0 0.0
        %1375 = vmatpush1.msra.mxu0 %v1370
        %1376 = vmatprep.subr.mxu0 0.0
        %1377 = vmatpush1.msra.mxu0 %v1369
        %1378 = vmatprep.subr.mxu0 0.0
        %1379 = vmatpush1.msra.mxu0 %v1368
        %1380 = vmatprep.subr.mxu0 0.0
        %1381 = vmatpush1.msra.mxu0 %v1367
        %1382 = vmatprep.subr.mxu0 0.0
        %1383 = vmatpush1.msra.mxu0 %v1366
        %1384 = vmatprep.subr.mxu0 0.0
        %1385 = vmatpush1.msra.mxu0 %v1365
        %1386 = vmatprep.subr.mxu0 0.0
        %1387 = vmatpush1.msra.mxu0 %v1364
        %1388 = vmatprep.subr.mxu0 0.0
        %1389 = vmatpush1.msra.mxu0 %v1363
        %1390 = vmatprep.subr.mxu0 0.0
        %1391 = vmatpush1.msra.mxu0 %v1362
        %1392 = vmatprep.subr.mxu0 0.0
        %1393 = vmatpush1.msra.mxu0 %v1361
        %1394 = vmatprep.subr.mxu0 0.0
        %1395 = vmatpush1.msra.mxu0 %v1360
        %1396 = vmatprep.subr.mxu0 0.0
        %1397 = vmatpush1.msra.mxu0 %v1359
        %1398 = vmatprep.subr.mxu0 0.0
        %1399 = vmatpush1.msra.mxu0 %v1358
        %1400 = vmatprep.subr.mxu0 0.0
        %1401 = vmatpush1.msra.mxu0 %v1357
        %1402 = vmatprep.subr.mxu0 0.0
        %1403 = vmatpush1.msra.mxu0 %v1356
        %1404 = vmatprep.subr.mxu0 0.0
        %1405 = vmatpush2.msra.mxu0 0.0
        %1406 = vmatprep.subr.mxu0 0.0
        %1407 = vmatpush2.msra.mxu0 0.0
        %1408 = vmatprep.subr.mxu0 0.0
        %1409 = vmatpush2.msra.mxu0 0.0
        %1410 = vmatprep.subr.mxu0 0.0
        %1411 = vmatpush2.msra.mxu0 0.0
        %1412 = vmatprep.subr.mxu0 0.0
        %1413 = vmatpush2.msra.mxu0 0.0
        %1414 = vmatprep.subr.mxu0 0.0
        %1415 = vmatpush2.msra.mxu0 0.0
        %1416 = vmatprep.subr.mxu0 0.0
        %1417 = vmatpush2.msra.mxu0 0.0
        %1418 = vmatprep.subr.mxu0 0.0
        %1419 = vmatpush2.msra.mxu0 0.0
        %1420 = vmatprep.subr.mxu0 0.0
        %1421 = vmatpush2.msra.mxu0 0.0
        %1422 = vmatprep.subr.mxu0 0.0
        %1423 = vmatpush2.msra.mxu0 0.0
        %1424 = vmatprep.subr.mxu0 0.0
        %1425 = vmatpush2.msra.mxu0 0.0
        %1426 = vmatprep.subr.mxu0 0.0
        %1427 = vmatpush2.msra.mxu0 0.0
        %1428 = vmatprep.subr.mxu0 0.0
        %1429 = vmatpush2.msra.mxu0 0.0
        %1430 = vmatprep.subr.mxu0 0.0
        %1431 = vmatpush2.msra.mxu0 0.0
        %1432 = vmatprep.subr.mxu0 0.0
        %1433 = vmatpush2.msra.mxu0 0.0
        %1434 = vmatprep.subr.mxu0 0.0
        %1435 = vmatpush2.msra.mxu0 0.0
        %1436 = vmatprep.mubr.f32.mxu0 0.0
        %1437 = vmatmul.mubr.f32.gmra.mxu0 %v1354
        %v1438 = vpop.f32.mrf.mxu0
        %v1439 = vadd.f32 0.0, %v1438
        %v1440 = vpop.f32.mrf.mxu0
        %1441 = vmatprep.mubr.f32.mxu0 0.0
        %1442 = vmatmul.mubr.f32.gmra.mxu0 %v1355
        %v1443 = vpop.f32.mrf.mxu0
        %v1444 = vadd.f32 0.0, %v1443
        %v1445 = vpop.f32.mrf.mxu0
        %1446 = vdwg.mxu0
        %v1447 = vmax.f32 %v1439, %v1444
        %v1448 = vrot.slane %v1447, 4
        %v1449 = vmax.f32 %v1447, %v1448
        %v1450 = vrot.slane %v1449, 2
        %v1451 = vmax.f32 %v1449, %v1450
        %v1452 = vrot.slane %v1451, 1
        %v1453 = vmax.f32 %v1451, %v1452
        %v1454 = vld [vmem:[%s13] sm:$0x1]
        %v1455 = vadd.f32 %v1453, %v1454
        %v1456 = vld [vmem:[%s14] sm:$0xff]
        %v1457 = vld [vmem:[%s14 + $0x8] sm:$0xff]
        %v1458 = vld [vmem:[%s14 + $0x10] sm:$0xff]
        %v1459 = vld [vmem:[%s14 + $0x18] sm:$0xff]
        %v1460 = vld [vmem:[%s14 + $0x20] sm:$0xff]
        %v1461 = vld [vmem:[%s14 + $0x28] sm:$0xff]
        %v1462 = vld [vmem:[%s14 + $0x30] sm:$0xff]
        %v1463 = vld [vmem:[%s14 + $0x38] sm:$0xff]
        %v1464 = vld [vmem:[%s14 + $0x40] sm:$0xff]
        %v1465 = vld [vmem:[%s14 + $0x48] sm:$0xff]
        %v1466 = vld [vmem:[%s14 + $0x50] sm:$0xff]
        %v1467 = vld [vmem:[%s14 + $0x58] sm:$0xff]
        %v1468 = vld [vmem:[%s14 + $0x60] sm:$0xff]
        %v1469 = vld [vmem:[%s14 + $0x68] sm:$0xff]
        %v1470 = vld [vmem:[%s14 + $0x70] sm:$0xff]
        %v1471 = vld [vmem:[%s14 + $0x78] sm:$0xff]
        %v1472 = vld [vmem:[%s16] sm:$0x1]
        %1473 = vmatprep.subr.mxu0 0.0
        %1474 = vmatpush1.msra.mxu0 %v1471
        %1475 = vmatprep.subr.mxu0 0.0
        %1476 = vmatpush1.msra.mxu0 %v1470
        %1477 = vmatprep.subr.mxu0 0.0
        %1478 = vmatpush1.msra.mxu0 %v1469
        %1479 = vmatprep.subr.mxu0 0.0
        %1480 = vmatpush1.msra.mxu0 %v1468
        %1481 = vmatprep.subr.mxu0 0.0
        %1482 = vmatpush1.msra.mxu0 %v1467
        %1483 = vmatprep.subr.mxu0 0.0
        %1484 = vmatpush1.msra.mxu0 %v1466
        %1485 = vmatprep.subr.mxu0 0.0
        %1486 = vmatpush1.msra.mxu0 %v1465
        %1487 = vmatprep.subr.mxu0 0.0
        %1488 = vmatpush1.msra.mxu0 %v1464
        %1489 = vmatprep.subr.mxu0 0.0
        %1490 = vmatpush1.msra.mxu0 %v1463
        %1491 = vmatprep.subr.mxu0 0.0
        %1492 = vmatpush1.msra.mxu0 %v1462
        %1493 = vmatprep.subr.mxu0 0.0
        %1494 = vmatpush1.msra.mxu0 %v1461
        %1495 = vmatprep.subr.mxu0 0.0
        %1496 = vmatpush1.msra.mxu0 %v1460
        %1497 = vmatprep.subr.mxu0 0.0
        %1498 = vmatpush1.msra.mxu0 %v1459
        %1499 = vmatprep.subr.mxu0 0.0
        %1500 = vmatpush1.msra.mxu0 %v1458
        %1501 = vmatprep.subr.mxu0 0.0
        %1502 = vmatpush1.msra.mxu0 %v1457
        %1503 = vmatprep.subr.mxu0 0.0
        %1504 = vmatpush1.msra.mxu0 %v1456
        %1505 = vmatprep.subr.mxu0 0.0
        %1506 = vmatpush2.msra.mxu0 0.0
        %1507 = vmatprep.subr.mxu0 0.0
        %1508 = vmatpush2.msra.mxu0 0.0
        %1509 = vmatprep.subr.mxu0 0.0
        %1510 = vmatpush2.msra.mxu0 0.0
        %1511 = vmatprep.subr.mxu0 0.0
        %1512 = vmatpush2.msra.mxu0 0.0
        %1513 = vmatprep.subr.mxu0 0.0
        %1514 = vmatpush2.msra.mxu0 0.0
        %1515 = vmatprep.subr.mxu0 0.0
        %1516 = vmatpush2.msra.mxu0 0.0
        %1517 = vmatprep.subr.mxu0 0.0
        %1518 = vmatpush2.msra.mxu0 0.0
        %1519 = vmatprep.subr.mxu0 0.0
        %1520 = vmatpush2.msra.mxu0 0.0
        %1521 = vmatprep.subr.mxu0 0.0
        %1522 = vmatpush2.msra.mxu0 0.0
        %1523 = vmatprep.subr.mxu0 0.0
        %1524 = vmatpush2.msra.mxu0 0.0
        %1525 = vmatprep.subr.mxu0 0.0
        %1526 = vmatpush2.msra.mxu0 0.0
        %1527 = vmatprep.subr.mxu0 0.0
        %1528 = vmatpush2.msra.mxu0 0.0
        %1529 = vmatprep.subr.mxu0 0.0
        %1530 = vmatpush2.msra.mxu0 0.0
        %1531 = vmatprep.subr.mxu0 0.0
        %1532 = vmatpush2.msra.mxu0 0.0
        %1533 = vmatprep.subr.mxu0 0.0
        %1534 = vmatpush2.msra.mxu0 0.0
        %1535 = vmatprep.subr.mxu0 0.0
        %1536 = vmatpush2.msra.mxu0 0.0
        %1537 = vmatprep.mubr.f32.mxu0 0.0
        %1538 = vmatmul.mubr.f32.gmra.mxu0 %v1455
        %v1539 = vpop.f32.mrf.mxu0
        %v1540 = vadd.f32 %v1472, %v1539
        %v1541 = vpop.f32.mrf.mxu0
        %1542 = vdwg.mxu0
        %v1543 = vld [vmem:[#allocation2] sm:$0xff]
        %v1544 = vld [vmem:[#allocation2 + $0x8] sm:$0xff]
        %v1545 = vld [vmem:[#allocation15] sm:$0xff]
        %v1546 = vld [vmem:[#allocation15 + $0x8] sm:$0xff]
        %v1547 = vld [vmem:[#allocation15 + $0x10] sm:$0xff]
        %v1548 = vld [vmem:[#allocation15 + $0x18] sm:$0xff]
        %v1549 = vld [vmem:[#allocation15 + $0x20] sm:$0xff]
        %v1550 = vld [vmem:[#allocation15 + $0x28] sm:$0xff]
        %v1551 = vld [vmem:[#allocation15 + $0x30] sm:$0xff]
        %v1552 = vld [vmem:[#allocation15 + $0x38] sm:$0xff]
        %v1553 = vlaneseq
        %v1554 = vshrl.u32 %v1553, 7
        %v1555 = vsub.s32 0, %v1554
        %v1556 = vrot.slane %v1540, %v1555
        %v1558 = vsel %vm871, %v1543, 0
        %v1561 = vsel %vm871, %v1544, 0
        %1563 = vmatprep.subr.mxu0 0.0
        %1564 = vmatpush1.msra.mxu0 0.0
        %1565 = vmatprep.subr.mxu0 0.0
        %1566 = vmatpush1.msra.mxu0 0.0
        %1567 = vmatprep.subr.mxu0 0.0
        %1568 = vmatpush1.msra.mxu0 0.0
        %1569 = vmatprep.subr.mxu0 0.0
        %1570 = vmatpush1.msra.mxu0 0.0
        %1571 = vmatprep.subr.mxu0 0.0
        %1572 = vmatpush1.msra.mxu0 0.0
        %1573 = vmatprep.subr.mxu0 0.0
        %1574 = vmatpush1.msra.mxu0 0.0
        %1575 = vmatprep.subr.mxu0 0.0
        %1576 = vmatpush1.msra.mxu0 0.0
        %1577 = vmatprep.subr.mxu0 0.0
        %1578 = vmatpush1.msra.mxu0 0.0
        %1579 = vmatprep.subr.mxu0 0.0
        %1580 = vmatpush1.msra.mxu0 %v1552
        %1581 = vmatprep.subr.mxu0 0.0
        %1582 = vmatpush1.msra.mxu0 %v1551
        %1583 = vmatprep.subr.mxu0 0.0
        %1584 = vmatpush1.msra.mxu0 %v1550
        %1585 = vmatprep.subr.mxu0 0.0
        %1586 = vmatpush1.msra.mxu0 %v1549
        %1587 = vmatprep.subr.mxu0 0.0
        %1588 = vmatpush1.msra.mxu0 %v1548
        %1589 = vmatprep.subr.mxu0 0.0
        %1590 = vmatpush1.msra.mxu0 %v1547
        %1591 = vmatprep.subr.mxu0 0.0
        %1592 = vmatpush1.msra.mxu0 %v1546
        %1593 = vmatprep.subr.mxu0 0.0
        %1594 = vmatpush1.msra.mxu0 %v1545
        %1595 = vmatprep.subr.mxu0 0.0
        %1596 = vmatpush2.msra.mxu0 0.0
        %1597 = vmatprep.subr.mxu0 0.0
        %1598 = vmatpush2.msra.mxu0 0.0
        %1599 = vmatprep.subr.mxu0 0.0
        %1600 = vmatpush2.msra.mxu0 0.0
        %1601 = vmatprep.subr.mxu0 0.0
        %1602 = vmatpush2.msra.mxu0 0.0
        %1603 = vmatprep.subr.mxu0 0.0
        %1604 = vmatpush2.msra.mxu0 0.0
        %1605 = vmatprep.subr.mxu0 0.0
        %1606 = vmatpush2.msra.mxu0 0.0
        %1607 = vmatprep.subr.mxu0 0.0
        %1608 = vmatpush2.msra.mxu0 0.0
        %1609 = vmatprep.subr.mxu0 0.0
        %1610 = vmatpush2.msra.mxu0 0.0
        %1611 = vmatprep.subr.mxu0 0.0
        %1612 = vmatpush2.msra.mxu0 0.0
        %1613 = vmatprep.subr.mxu0 0.0
        %1614 = vmatpush2.msra.mxu0 0.0
        %1615 = vmatprep.subr.mxu0 0.0
        %1616 = vmatpush2.msra.mxu0 0.0
        %1617 = vmatprep.subr.mxu0 0.0
        %1618 = vmatpush2.msra.mxu0 0.0
        %1619 = vmatprep.subr.mxu0 0.0
        %1620 = vmatpush2.msra.mxu0 0.0
        %1621 = vmatprep.subr.mxu0 0.0
        %1622 = vmatpush2.msra.mxu0 0.0
        %1623 = vmatprep.subr.mxu0 0.0
        %1624 = vmatpush2.msra.mxu0 0.0
        %1625 = vmatprep.subr.mxu0 0.0
        %1626 = vmatpush2.msra.mxu0 0.0
        %1627 = vmatprep.mubr.f32.mxu0 0.0
        %1628 = vmatmul.mubr.f32.gmra.mxu0 %v1558
        %v1629 = vpop.f32.mrf.mxu0
        %v1630 = vadd.f32 %v1556, %v1629
        %v1631 = vpop.f32.mrf.mxu0
        %1632 = vmatprep.mubr.f32.mxu0 0.0
        %1633 = vmatmul.mubr.f32.gmra.mxu0 %v1561
        %v1634 = vpop.f32.mrf.mxu0
        %v1635 = vadd.f32 %v1556, %v1634
        %v1636 = vpop.f32.mrf.mxu0
        %1637 = vdwg.mxu0
        %v1638 = vmax.f32 %v1630, 0.0
        %v1639 = vmax.f32 %v1635, 0.0
        %v1640 = vld [vmem:[#allocation17] sm:$0xff]
        %v1641 = vld [vmem:[#allocation17 + $0x8] sm:$0xff]
        %v1642 = vld [vmem:[#allocation17 + $0x10] sm:$0xff]
        %v1643 = vld [vmem:[#allocation17 + $0x18] sm:$0xff]
        %v1644 = vld [vmem:[#allocation17 + $0x20] sm:$0xff]
        %v1645 = vld [vmem:[#allocation17 + $0x28] sm:$0xff]
        %v1646 = vld [vmem:[#allocation17 + $0x30] sm:$0xff]
        %v1647 = vld [vmem:[#allocation17 + $0x38] sm:$0xff]
        %v1648 = vld [vmem:[%s18] sm:$0x1]
        %v1650 = vlaneseq
        %v1651 = vshrl.u32 %v1650, 7
        %v1652 = vsub.s32 0, %v1651
        %v1653 = vrot.slane %v1648, %v1652
        %v1656 = vsel %vm871, %v1638, 0
        %v1659 = vsel %vm871, %v1639, 0
        %1661 = vmatprep.subr.mxu0 0.0
        %1662 = vmatpush1.msra.mxu0 0.0
        %1663 = vmatprep.subr.mxu0 0.0
        %1664 = vmatpush1.msra.mxu0 0.0
        %1665 = vmatprep.subr.mxu0 0.0
        %1666 = vmatpush1.msra.mxu0 0.0
        %1667 = vmatprep.subr.mxu0 0.0
        %1668 = vmatpush1.msra.mxu0 0.0
        %1669 = vmatprep.subr.mxu0 0.0
        %1670 = vmatpush1.msra.mxu0 0.0
        %1671 = vmatprep.subr.mxu0 0.0
        %1672 = vmatpush1.msra.mxu0 0.0
        %1673 = vmatprep.subr.mxu0 0.0
        %1674 = vmatpush1.msra.mxu0 0.0
        %1675 = vmatprep.subr.mxu0 0.0
        %1676 = vmatpush1.msra.mxu0 0.0
        %1677 = vmatprep.subr.mxu0 0.0
        %1678 = vmatpush1.msra.mxu0 %v1647
        %1679 = vmatprep.subr.mxu0 0.0
        %1680 = vmatpush1.msra.mxu0 %v1646
        %1681 = vmatprep.subr.mxu0 0.0
        %1682 = vmatpush1.msra.mxu0 %v1645
        %1683 = vmatprep.subr.mxu0 0.0
        %1684 = vmatpush1.msra.mxu0 %v1644
        %1685 = vmatprep.subr.mxu0 0.0
        %1686 = vmatpush1.msra.mxu0 %v1643
        %1687 = vmatprep.subr.mxu0 0.0
        %1688 = vmatpush1.msra.mxu0 %v1642
        %1689 = vmatprep.subr.mxu0 0.0
        %1690 = vmatpush1.msra.mxu0 %v1641
        %1691 = vmatprep.subr.mxu0 0.0
        %1692 = vmatpush1.msra.mxu0 %v1640
        %1693 = vmatprep.subr.mxu0 0.0
        %1694 = vmatpush2.msra.mxu0 0.0
        %1695 = vmatprep.subr.mxu0 0.0
        %1696 = vmatpush2.msra.mxu0 0.0
        %1697 = vmatprep.subr.mxu0 0.0
        %1698 = vmatpush2.msra.mxu0 0.0
        %1699 = vmatprep.subr.mxu0 0.0
        %1700 = vmatpush2.msra.mxu0 0.0
        %1701 = vmatprep.subr.mxu0 0.0
        %1702 = vmatpush2.msra.mxu0 0.0
        %1703 = vmatprep.subr.mxu0 0.0
        %1704 = vmatpush2.msra.mxu0 0.0
        %1705 = vmatprep.subr.mxu0 0.0
        %1706 = vmatpush2.msra.mxu0 0.0
        %1707 = vmatprep.subr.mxu0 0.0
        %1708 = vmatpush2.msra.mxu0 0.0
        %1709 = vmatprep.subr.mxu0 0.0
        %1710 = vmatpush2.msra.mxu0 0.0
        %1711 = vmatprep.subr.mxu0 0.0
        %1712 = vmatpush2.msra.mxu0 0.0
        %1713 = vmatprep.subr.mxu0 0.0
        %1714 = vmatpush2.msra.mxu0 0.0
        %1715 = vmatprep.subr.mxu0 0.0
        %1716 = vmatpush2.msra.mxu0 0.0
        %1717 = vmatprep.subr.mxu0 0.0
        %1718 = vmatpush2.msra.mxu0 0.0
        %1719 = vmatprep.subr.mxu0 0.0
        %1720 = vmatpush2.msra.mxu0 0.0
        %1721 = vmatprep.subr.mxu0 0.0
        %1722 = vmatpush2.msra.mxu0 0.0
        %1723 = vmatprep.subr.mxu0 0.0
        %1724 = vmatpush2.msra.mxu0 0.0
        %1725 = vmatprep.mubr.f32.mxu0 0.0
        %1726 = vmatmul.mubr.f32.gmra.mxu0 %v1656
        %v1727 = vpop.f32.mrf.mxu0
        %v1728 = vadd.f32 %v1653, %v1727
        %v1729 = vpop.f32.mrf.mxu0
        %1730 = vmatprep.mubr.f32.mxu0 0.0
        %1731 = vmatmul.mubr.f32.gmra.mxu0 %v1659
        %v1732 = vpop.f32.mrf.mxu0
        %v1733 = vadd.f32 %v1653, %v1732
        %v1734 = vpop.f32.mrf.mxu0
        %1735 = vdwg.mxu0
        %v1736 = vmax.f32 %v1728, 0.0
        %v1737 = vmax.f32 %v1733, 0.0
        %v1738 = vld [vmem:[%s19] sm:$0xff]
        %v1739 = vld [vmem:[%s19 + $0x8] sm:$0xff]
        %v1740 = vld [vmem:[%s19 + $0x10] sm:$0xff]
        %v1741 = vld [vmem:[%s19 + $0x18] sm:$0xff]
        %v1742 = vld [vmem:[%s19 + $0x20] sm:$0xff]
        %v1743 = vld [vmem:[%s19 + $0x28] sm:$0xff]
        %v1744 = vld [vmem:[%s19 + $0x30] sm:$0xff]
        %v1745 = vld [vmem:[%s19 + $0x38] sm:$0xff]
        %v1746 = vld [vmem:[%s19 + $0x40] sm:$0xff]
        %v1747 = vld [vmem:[%s19 + $0x48] sm:$0xff]
        %v1748 = vld [vmem:[%s19 + $0x50] sm:$0xff]
        %v1749 = vld [vmem:[%s19 + $0x58] sm:$0xff]
        %v1750 = vld [vmem:[%s19 + $0x60] sm:$0xff]
        %v1751 = vld [vmem:[%s19 + $0x68] sm:$0xff]
        %v1752 = vld [vmem:[%s19 + $0x70] sm:$0xff]
        %v1753 = vld [vmem:[%s19 + $0x78] sm:$0xff]
        %1754 = vmatprep.subr.mxu0 0.0
        %1755 = vmatpush1.msra.mxu0 %v1753
        %1756 = vmatprep.subr.mxu0 0.0
        %1757 = vmatpush1.msra.mxu0 %v1752
        %1758 = vmatprep.subr.mxu0 0.0
        %1759 = vmatpush1.msra.mxu0 %v1751
        %1760 = vmatprep.subr.mxu0 0.0
        %1761 = vmatpush1.msra.mxu0 %v1750
        %1762 = vmatprep.subr.mxu0 0.0
        %1763 = vmatpush1.msra.mxu0 %v1749
        %1764 = vmatprep.subr.mxu0 0.0
        %1765 = vmatpush1.msra.mxu0 %v1748
        %1766 = vmatprep.subr.mxu0 0.0
        %1767 = vmatpush1.msra.mxu0 %v1747
        %1768 = vmatprep.subr.mxu0 0.0
        %1769 = vmatpush1.msra.mxu0 %v1746
        %1770 = vmatprep.subr.mxu0 0.0
        %1771 = vmatpush1.msra.mxu0 %v1745
        %1772 = vmatprep.subr.mxu0 0.0
        %1773 = vmatpush1.msra.mxu0 %v1744
        %1774 = vmatprep.subr.mxu0 0.0
        %1775 = vmatpush1.msra.mxu0 %v1743
        %1776 = vmatprep.subr.mxu0 0.0
        %1777 = vmatpush1.msra.mxu0 %v1742
        %1778 = vmatprep.subr.mxu0 0.0
        %1779 = vmatpush1.msra.mxu0 %v1741
        %1780 = vmatprep.subr.mxu0 0.0
        %1781 = vmatpush1.msra.mxu0 %v1740
        %1782 = vmatprep.subr.mxu0 0.0
        %1783 = vmatpush1.msra.mxu0 %v1739
        %1784 = vmatprep.subr.mxu0 0.0
        %1785 = vmatpush1.msra.mxu0 %v1738
        %1786 = vmatprep.subr.mxu0 0.0
        %1787 = vmatpush2.msra.mxu0 0.0
        %1788 = vmatprep.subr.mxu0 0.0
        %1789 = vmatpush2.msra.mxu0 0.0
        %1790 = vmatprep.subr.mxu0 0.0
        %1791 = vmatpush2.msra.mxu0 0.0
        %1792 = vmatprep.subr.mxu0 0.0
        %1793 = vmatpush2.msra.mxu0 0.0
        %1794 = vmatprep.subr.mxu0 0.0
        %1795 = vmatpush2.msra.mxu0 0.0
        %1796 = vmatprep.subr.mxu0 0.0
        %1797 = vmatpush2.msra.mxu0 0.0
        %1798 = vmatprep.subr.mxu0 0.0
        %1799 = vmatpush2.msra.mxu0 0.0
        %1800 = vmatprep.subr.mxu0 0.0
        %1801 = vmatpush2.msra.mxu0 0.0
        %1802 = vmatprep.subr.mxu0 0.0
        %1803 = vmatpush2.msra.mxu0 0.0
        %1804 = vmatprep.subr.mxu0 0.0
        %1805 = vmatpush2.msra.mxu0 0.0
        %1806 = vmatprep.subr.mxu0 0.0
        %1807 = vmatpush2.msra.mxu0 0.0
        %1808 = vmatprep.subr.mxu0 0.0
        %1809 = vmatpush2.msra.mxu0 0.0
        %1810 = vmatprep.subr.mxu0 0.0
        %1811 = vmatpush2.msra.mxu0 0.0
        %1812 = vmatprep.subr.mxu0 0.0
        %1813 = vmatpush2.msra.mxu0 0.0
        %1814 = vmatprep.subr.mxu0 0.0
        %1815 = vmatpush2.msra.mxu0 0.0
        %1816 = vmatprep.subr.mxu0 0.0
        %1817 = vmatpush2.msra.mxu0 0.0
        %1818 = vmatprep.mubr.f32.mxu0 0.0
        %1819 = vmatmul.mubr.f32.gmra.mxu0 %v1736
        %v1820 = vpop.f32.mrf.mxu0
        %v1821 = vadd.f32 0.0, %v1820
        %v1822 = vpop.f32.mrf.mxu0
        %1823 = vmatprep.mubr.f32.mxu0 0.0
        %1824 = vmatmul.mubr.f32.gmra.mxu0 %v1737
        %v1825 = vpop.f32.mrf.mxu0
        %v1826 = vadd.f32 0.0, %v1825
        %v1827 = vpop.f32.mrf.mxu0
        %1828 = vdwg.mxu0
        %v1829 = vmax.f32 %v1821, %v1826
        %v1830 = vrot.slane %v1829, 4
        %v1831 = vmax.f32 %v1829, %v1830
        %v1832 = vrot.slane %v1831, 2
        %v1833 = vmax.f32 %v1831, %v1832
        %v1834 = vrot.slane %v1833, 1
        %v1835 = vmax.f32 %v1833, %v1834
        %v1836 = vld [vmem:[%s20] sm:$0x1]
        %v1837 = vadd.f32 %v1835, %v1836
        %1838 = vst [vmem:[%s771] sm:$0x1] %v1837
        %s1839 = sand.u32 %s494, 1
        %s1840 = scalar_lea.sflag [#allocation5], %s1839
        %s1841 = sand.u32 %s494, 1
        %s1842 = scalar_lea.vmem [#allocation18], %s1841
        // Predicated region
        $region141: #{tpu_custom_call.1} parent=103 // pred_check
          %p1843 = pneg %p504
        $region142: #{tpu_custom_call.1} parent=103 // pred_check_branch
          %1845 = sbr.rel (%p1843) target = $region144
        $region143: #{tpu_custom_call.1} parent=103 // pred_region
          %s1847 = ssub.s32 16, 16
          %1848 = vsyncadd %s1840, %s1847
          %s1849 = smul.addr %s40, 16
          %s1850 = scalar_lea.hbm %s21, %s1849
          %s1852 = sshll.u32 %s1842, 4
          %s1853 = int_to_ptr.vmem [resolvable:$true] %s1852
          %1855 = dma.vmem_to_hbm [thread:$0]  %s1853, 16, %s1850, %s1840
        $region144: #{tpu_custom_call.1} parent=103 // pred_fallthru
          _
      $region104: #{tpu_custom_call.1} parent=5 // pred_fallthru
        _
      %p1856 = scmp.le.s32.totalorder 2, %s35
      // Predicated region
      $region145: #{tpu_custom_call.1} parent=5 // pred_check
        %p1857 = pneg %p1856
      $region146: #{tpu_custom_call.1} parent=5 // pred_check_branch
        %1859 = sbr.rel (%p1857) target = $region148
      $region147: #{tpu_custom_call.1} parent=5 // pred_region
        %s1860 = ssub.s32 %s35, 2
        // Predicated region
        $region149: #{tpu_custom_call.1} parent=147 // pred_check
          %p1861 = pneg %p510
        $region150: #{tpu_custom_call.1} parent=147 // pred_check_branch
          %1863 = sbr.rel (%p1861) target = $region152
        $region151: #{tpu_custom_call.1} parent=147 // pred_region
          %s1864 = sand.u32 %s495, 1
          %s1865 = scalar_lea.sflag [#allocation5], %s1864
          %s1866 = sand.u32 %s495, 1
          %s1867 = scalar_lea.vmem [#allocation18], %s1866
          %1868 = dma.done %s1865, 16
        $region152: #{tpu_custom_call.1} parent=147 // pred_fallthru
          _
      $region148: #{tpu_custom_call.1} parent=5 // pred_fallthru
        _
    $region6: #{tpu_custom_call.1} parent=1 // loop_footer
      %s39 = sadd.s32 1, %s35
    $region7: #{tpu_custom_call.1} parent=1 // loop_footer_branch
      %34 = sbr.rel target = $region3
    $region8: #{tpu_custom_call.1} parent=1 // loop_exit
      _
    %1869 = vsyncpa [#allocation4], 1
    %s1870 = scalar_lea.sflag [#allocation4], 1
    %1871 = vsyncpa %s1870, 1
    %1872 = vsyncpa [#allocation7], 1
    %1873 = vsyncpa [#allocation10], 1
    %1874 = vsyncpa [#allocation13], 1
    %1875 = vsyncpa [#allocation16], 1
    %1876 = vsyncpa [#allocation5], 1
    %s1877 = scalar_lea.sflag [#allocation5], 1
    %1878 = vsyncpa %s1877, 1

</llo_original>
